<compile_context>
chip_gen: v5e
topology: v5e:2x2
jax: 0.10.0
libtpu: 0.0.40
codegen_flags: <defaults>
</compile_context>

<pallas_src>
import functools
import math

import jax
import jax.numpy as jnp
from jax.experimental import pallas as pl
from jax.experimental.pallas import tpu as pltpu

_NEG_INF = -1e9
_EPS = 1e-5
_VMEM_LIMIT = 48 * 1024 * 1024   # scoped VMEM; FFN tiles budgeted to ~40 MiB (v7x: 64 MiB phys)


def _layernorm(x, gamma, beta):
    mu = jnp.mean(x, axis=-1, keepdims=True)
    var = jnp.mean((x - mu) ** 2, axis=-1, keepdims=True)
    return (x - mu) * jax.lax.rsqrt(var + _EPS) * gamma + beta


def _pick_tile(n, candidates):
    for c in candidates:
        if c <= n and n % c == 0:
            return c
    return n


def _ffn_tiles(n_tokens, d_ff, hidden):
    """Largest token / d_ff tiles that keep the FFN kernel under ~40 MiB VMEM."""
    tt = _pick_tile(n_tokens, (512, 256, 128, 64, 32, 16, 8))
    tdff = _pick_tile(d_ff, (512, 256, 128))

    def vmem_est(tt_, tdff_):
        weights = 3 * hidden * tdff_ * 2 * 2       # gate/up/down blocks, 2x buffered, bf16
        acts = 2 * tt_ * hidden * 2 * 2            # token in + out blocks, 2x buffered, bf16
        scratch = tt_ * hidden * (2 + 4)           # LN cache (bf16) + f32 accumulator
        return weights + acts + scratch

    budget = 40 * 1024 * 1024
    while vmem_est(tt, tdff) > budget and tdff > 128:
        tdff //= 2
    while vmem_est(tt, tdff) > budget and tt > 128:
        tt //= 2
    return tt, tdff


# ---------------------------------------------------------------------------
# Kernel 1: LayerNorm1 + QKV projection + RoPE (+ fold 1/sqrt(hd) into q).
# Outputs q, k, v as (B, n_heads, S, hd) bf16 (contiguous K/V tiles for flash).
# ---------------------------------------------------------------------------
def qkv_rope_kernel(x_ref, cos_ref, ssin_ref, g_ref, b_ref, wqkv_ref, bqkv_ref,
                    q_ref, k_ref, v_ref, *, n_heads, head_dim, rotary):
    H = n_heads * head_dim
    x = x_ref[0].astype(jnp.float32)                              # (ts, H)
    xn = _layernorm(x, g_ref[...], b_ref[...]).astype(jnp.bfloat16)
    qkv = jnp.dot(xn, wqkv_ref[...], preferred_element_type=jnp.float32)
    qkv = qkv + bqkv_ref[...]                                     # (ts, 3H) f32

    scale = 1.0 / math.sqrt(head_dim)
    q = qkv[:, 0:H] * scale                    # scale folded into q once
    k = qkv[:, H:2 * H]
    v = qkv[:, 2 * H:3 * H]

    if rotary:
        half = head_dim // 2

        def rot_half(t):
            # Rotate-half per head: 128-lane roll by hd/2 on lane-aligned
            # slices (single-vreg XLU rotate); all multiply/add below is a
            # single full-width pass with the tiled cos / signed-sin tables.
            parts = [pltpu.roll(t[:, h * head_dim:(h + 1) * head_dim], half, axis=1)
                     for h in range(n_heads)]
            return parts[0] if n_heads == 1 else jnp.concatenate(parts, axis=1)

        cos = cos_ref[...]                     # (ts, H) f32
        ssin = ssin_ref[...]                   # (ts, H) f32, [-sin, +sin] per head
        q = q * cos + rot_half(q) * ssin
        k = k * cos + rot_half(k) * ssin

    qb = q.astype(jnp.bfloat16)
    kb = k.astype(jnp.bfloat16)
    vb = v.astype(jnp.bfloat16)
    # Per-head stores only (lane-aligned bf16 slices, no math in the loop).
    for h in range(n_heads):
        sl = slice(h * head_dim, (h + 1) * head_dim)
        q_ref[0, h] = qb[:, sl]
        k_ref[0, h] = kb[:, sl]
        v_ref[0, h] = vb[:, sl]


def qkv_rope(x, cos, ssin, params, *, n_heads, head_dim, rotary, ts):
    B, S, H = x.shape
    kernel = functools.partial(qkv_rope_kernel, n_heads=n_heads,
                               head_dim=head_dim, rotary=rotary)
    qkv_shape = jax.ShapeDtypeStruct((B, n_heads, S, head_dim), jnp.bfloat16)
    out_spec = pl.BlockSpec((1, n_heads, ts, head_dim), lambda b, s: (b, 0, s, 0))
    # TODO(synk): for H >~ 2k (v7x) tile the 3H output dim of wqkv on a third
    # grid axis so the (H, 3H) weight block fits the 64 MiB VMEM budget.
    return pl.pallas_call(
        kernel,
        out_shape=(qkv_shape, qkv_shape, qkv_shape),
        grid_spec=pltpu.PrefetchScalarGridSpec(
            num_scalar_prefetch=0,
            grid=(B, S // ts),
            in_specs=[
                pl.BlockSpec((1, ts, H), lambda b, s: (b, s, 0)),      # x (bf16 residual)
                pl.BlockSpec((ts, H), lambda b, s: (s, 0)),            # cos (full width)
                pl.BlockSpec((ts, H), lambda b, s: (s, 0)),            # signed sin
                pl.BlockSpec((1, H), lambda b, s: (0, 0)),             # ln1 gamma
                pl.BlockSpec((1, H), lambda b, s: (0, 0)),             # ln1 beta
                pl.BlockSpec((H, 3 * H), lambda b, s: (0, 0)),         # wqkv (bf16)
                pl.BlockSpec((1, 3 * H), lambda b, s: (0, 0)),         # bqkv
            ],
            out_specs=[out_spec, out_spec, out_spec],
        ),
        compiler_params=pltpu.CompilerParams(
            dimension_semantics=("parallel", "parallel"),
            vmem_limit_bytes=_VMEM_LIMIT),
    )(x, cos, ssin, params["ln1_g"], params["ln1_b"],
      params["wqkv"], params["bqkv"])


# ---------------------------------------------------------------------------
# Kernel 2: flash attention + per-head out-projection accumulation + residual.
# grid = (B, n_q_tiles, n_heads, n_kv_tiles)   (heads & kv are reduction axes)
# ---------------------------------------------------------------------------
def flash_attn_kernel(maskb_ref, q_ref, k_ref, v_ref, xres_ref, wo_ref, bo_ref,
                      o_ref, m_sc, l_sc, acc_sc, oacc_sc, *, causal, tq, tk):
    qi = pl.program_id(1)
    h = pl.program_id(2)
    kv = pl.program_id(3)
    nh = pl.num_programs(2)
    nkv = pl.num_programs(3)

    # f32 accumulator: residual + bias + sum of per-head out-projections;
    # written back to HBM (bf16) exactly once per (b, q-tile).
    @pl.when(jnp.logical_and(h == 0, kv == 0))
    def _():
        oacc_sc[...] = xres_ref[0].astype(jnp.float32) + bo_ref[...]

    @pl.when(kv == 0)
    def _():
        m_sc[...] = jnp.full_like(m_sc, -jnp.inf)
        l_sc[...] = jnp.zeros_like(l_sc)
        acc_sc[...] = jnp.zeros_like(acc_sc)

    def compute(apply_causal):
        q = q_ref[0, 0]                                   # (tq, hd) bf16, pre-scaled
        k = k_ref[0, 0]                                   # (tk, hd) bf16
        v = v_ref[0, 0]                                   # (tk, hd) bf16
        s = jax.lax.dot_general(q, k, (((1,), (1,)), ((), ())),
                                preferred_element_type=jnp.float32)   # (tq, tk)
        s = s + maskb_ref[0]                              # additive pad bias (1, tk)
        if apply_causal:                                  # only on diagonal tiles
            row = qi * tq + jax.lax.broadcasted_iota(jnp.int32, (tq, tk), 0)
            col = kv * tk + jax.lax.broadcasted_iota(jnp.int32, (tq, tk), 1)
            s = jnp.where(col > row, _NEG_INF, s)

        m_prev = m_sc[...]
        m_new = jnp.maximum(m_prev, jnp.max(s, axis=-1, keepdims=True))
        alpha = jnp.exp(m_prev - m_new)
        p = jnp.exp(s - m_new)
        l_sc[...] = alpha * l_sc[...] + jnp.sum(p, axis=-1, keepdims=True)
        acc_sc[...] = alpha * acc_sc[...] + jnp.dot(
            p.astype(jnp.bfloat16), v, preferred_element_type=jnp.float32)
        m_sc[...] = m_new

    if causal:
        q_start = qi * tq
        kv_start = kv * tk
        fully_visible = kv_start + (tk - 1) <= q_start       # below diagonal: no iota
        needed = kv_start <= q_start + (tq - 1)

        @pl.when(fully_visible)
        def _():
            compute(False)

        @pl.when(jnp.logical_and(needed, jnp.logical_not(fully_visible)))
        def _():
            compute(True)
    else:
        compute(False)

    # Fold this head's output projection into the residual accumulator.
    @pl.when(kv == nkv - 1)
    def _():
        out_h = acc_sc[...] * pl.reciprocal(l_sc[...], approx=True)   # (tq, hd)
        oacc_sc[...] += jnp.dot(out_h.astype(jnp.bfloat16), wo_ref[...],
                                preferred_element_type=jnp.float32)

    @pl.when(jnp.logical_and(h == nh - 1, kv == nkv - 1))
    def _():
        o_ref[0] = oacc_sc[...].astype(o_ref.dtype)


def flash_attention(mask_bias, q, k, v, x, wo, bo, *, causal, tq, tk):
    B, n_heads, S, hd = q.shape
    H = x.shape[2]
    kernel = functools.partial(flash_attn_kernel, causal=causal, tq=tq, tk=tk)

    if causal:
        # Clamp the K/V (and mask) block index to the last tile this q-tile can
        # attend to: the repeated block index makes Pallas elide the DMA for
        # every above-diagonal grid step (compute is predicated off anyway).
        def kv_block(qi, kv):
            return jnp.minimum(kv, (qi * tq + (tq - 1)) // tk)
    else:
        def kv_block(qi, kv):
            return kv

    return pl.pallas_call(
        kernel,
        out_shape=jax.ShapeDtypeStruct((B, S, H), jnp.bfloat16),
        grid_spec=pltpu.PrefetchScalarGridSpec(
            num_scalar_prefetch=0,
            grid=(B, S // tq, n_heads, S // tk),
            in_specs=[
                pl.BlockSpec((1, 1, tk),
                             lambda b, qi, h, kv: (b, 0, kv_block(qi, kv))),       # pad bias
                pl.BlockSpec((1, 1, tq, hd),
                             lambda b, qi, h, kv: (b, h, qi, 0)),                  # q
                pl.BlockSpec((1, 1, tk, hd),
                             lambda b, qi, h, kv: (b, h, kv_block(qi, kv), 0)),    # k
                pl.BlockSpec((1, 1, tk, hd),
                             lambda b, qi, h, kv: (b, h, kv_block(qi, kv), 0)),    # v
                pl.BlockSpec((1, tq, H), lambda b, qi, h, kv: (b, qi, 0)),         # residual x
                pl.BlockSpec((hd, H), lambda b, qi, h, kv: (h, 0)),                # wo rows of head h
                pl.BlockSpec((1, H), lambda b, qi, h, kv: (0, 0)),                 # bo
            ],
            out_specs=pl.BlockSpec((1, tq, H), lambda b, qi, h, kv: (b, qi, 0)),
            scratch_shapes=[
                pltpu.VMEM((tq, 1), jnp.float32),    # running max
                pltpu.VMEM((tq, 1), jnp.float32),    # running denom
                pltpu.VMEM((tq, hd), jnp.float32),   # per-head attention acc
                pltpu.VMEM((tq, H), jnp.float32),    # residual + out-proj acc
            ],
        ),
        compiler_params=pltpu.CompilerParams(
            dimension_semantics=("parallel", "parallel", "arbitrary", "arbitrary"),
            vmem_limit_bytes=_VMEM_LIMIT),
    )(mask_bias, q, k, v, x, wo, bo)


# ---------------------------------------------------------------------------
# Kernel 3: LayerNorm2 + SwiGLU FFN (tokens flattened over B*S, tiled d_ff)
#           + residual.   grid = (n_token_tiles, n_dff_tiles)
# ---------------------------------------------------------------------------
def ffn_kernel(y_ref, g2_ref, b2ln_ref, wg_ref, bg_ref, wu_ref, bu_ref,
               w2_ref, b2_ref, o_ref, xn_sc, acc_sc):
    j = pl.program_id(1)

    @pl.when(j == 0)
    def _():
        y = y_ref[...].astype(jnp.float32)
        xn_sc[...] = _layernorm(y, g2_ref[...], b2ln_ref[...]).astype(jnp.bfloat16)
        acc_sc[...] = y + b2_ref[...]                      # residual + down-proj bias

    xn = xn_sc[...]
    g = jnp.dot(xn, wg_ref[...], preferred_element_type=jnp.float32) + bg_ref[...]
    u = jnp.dot(xn, wu_ref[...], preferred_element_type=jnp.float32) + bu_ref[...]
    hidden = jax.nn.silu(g) * u                            # f32 elementwise
    acc_sc[...] += jnp.dot(hidden.astype(jnp.bfloat16), w2_ref[...],
                           preferred_element_type=jnp.float32)

    @pl.when(j == pl.num_programs(1) - 1)
    def _():
        o_ref[...] = acc_sc[...].astype(o_ref.dtype)


def swiglu_ffn_apply(y, params, *, tt, tdff):
    B, S, H = y.shape
    dff = params["w2"].shape[0]
    T = B * S
    y2d = y.reshape(T, H)        # flatten tokens -> fewer weight re-streams
    out = pl.pallas_call(
        ffn_kernel,
        out_shape=jax.ShapeDtypeStruct((T, H), jnp.bfloat16),
        grid_spec=pltpu.PrefetchScalarGridSpec(
            num_scalar_prefetch=0,
            grid=(T // tt, dff // tdff),
            in_specs=[
                pl.BlockSpec((tt, H), lambda t, j: (t, 0)),        # tokens (bf16)
                pl.BlockSpec((1, H), lambda t, j: (0, 0)),         # ln2 gamma
                pl.BlockSpec((1, H), lambda t, j: (0, 0)),         # ln2 beta
                pl.BlockSpec((H, tdff), lambda t, j: (0, j)),      # w_gate block
                pl.BlockSpec((1, tdff), lambda t, j: (0, j)),      # b_gate block
                pl.BlockSpec((H, tdff), lambda t, j: (0, j)),      # w_up block
                pl.BlockSpec((1, tdff), lambda t, j: (0, j)),      # b_up block
                pl.BlockSpec((tdff, H), lambda t, j: (j, 0)),      # w2 block
                pl.BlockSpec((1, H), lambda t, j: (0, 0)),         # b2
            ],
            out_specs=pl.BlockSpec((tt, H), lambda t, j: (t, 0)),
            scratch_shapes=[
                pltpu.VMEM((tt, H), jnp.bfloat16),   # cached LN output
                pltpu.VMEM((tt, H), jnp.float32),    # residual + FFN accumulator
            ],
        ),
        compiler_params=pltpu.CompilerParams(
            dimension_semantics=("parallel", "arbitrary"),
            vmem_limit_bytes=_VMEM_LIMIT),
    )(y2d, params["ln2_g"], params["ln2_b"],
      params["w_gate"], params["b_gate"],
      params["w_up"], params["b_up"],
      params["w2"], params["b2"])
    return out.reshape(B, S, H)


# ---------------------------------------------------------------------------
# Parameter init, RoPE tables, block / model wrappers
# ---------------------------------------------------------------------------
def init_block_params(key, hidden_size, expansion_ratio):
    d_ff = int(expansion_ratio * hidden_size)
    H = hidden_size
    ks = jax.random.split(key, 5)
    std = 0.02

    def w(k, shape):  # weights stored in bf16 (matmul path)
        return (std * jax.random.normal(k, shape, jnp.float32)).astype(jnp.bfloat16)

    return {
        "ln1_g": jnp.ones((1, H), jnp.float32),
        "ln1_b": jnp.zeros((1, H), jnp.float32),
        "wqkv": w(ks[0], (H, 3 * H)),
        "bqkv": jnp.zeros((1, 3 * H), jnp.float32),
        "wo": w(ks[1], (H, H)),
        "bo": jnp.zeros((1, H), jnp.float32),
        "ln2_g": jnp.ones((1, H), jnp.float32),
        "ln2_b": jnp.zeros((1, H), jnp.float32),
        "w_gate": w(ks[2], (H, d_ff)),
        "b_gate": jnp.zeros((1, d_ff), jnp.float32),
        "w_up": w(ks[3], (H, d_ff)),
        "b_up": jnp.zeros((1, d_ff), jnp.float32),
        "w2": w(ks[4], (d_ff, H)),
        "b2": jnp.zeros((1, H), jnp.float32),
    }


def rope_tables(seq_len, head_dim, n_heads):
    """Full-width (S, H) cos and signed-sin tables (shared across layers).

    rope(t)[..., h*hd + r] = t*cos + rot_half(t)*ssin, where rot_half is a
    per-head roll by hd/2 and ssin = [-sin(ang), +sin(ang)] per head.
    """
    half = head_dim // 2
    inv_freq = 1.0 / (10000.0 ** (jnp.arange(half, dtype=jnp.float32) / half))
    pos = jnp.arange(seq_len, dtype=jnp.float32)
    ang = pos[:, None] * inv_freq[None, :]                        # (S, hd/2)
    cos_h = jnp.concatenate([jnp.cos(ang), jnp.cos(ang)], axis=-1)        # (S, hd)
    ssin_h = jnp.concatenate([-jnp.sin(ang), jnp.sin(ang)], axis=-1)      # (S, hd)
    cos_f = jnp.tile(cos_h, (1, n_heads))                          # (S, H)
    ssin_f = jnp.tile(ssin_h, (1, n_heads))
    return cos_f, ssin_f


def transformer_block_apply(x, mask_bias, cos, ssin, params, *,
                            n_heads, rotary, causal, ts, tq, tk, tt, tdff):
    B, S, H = x.shape
    head_dim = H // n_heads
    q, k, v = qkv_rope(x, cos, ssin, params, n_heads=n_heads,
                       head_dim=head_dim, rotary=rotary, ts=ts)
    y1 = flash_attention(mask_bias, q, k, v, x, params["wo"], params["bo"],
                         causal=causal, tq=tq, tk=tk)
    y2 = swiglu_ffn_apply(y1, params, tt=tt, tdff=tdff)
    return y2


def transformer_forward(x, attention_mask, block_params, *, n_heads, rotary, causal):
    B, S, H = x.shape
    head_dim = H // n_heads
    cos, ssin = rope_tables(S, head_dim, n_heads)                 # shared across layers

    # Additive pad-mask bias precomputed once (no per-tile where in the kernel).
    if attention_mask is None:
        mask_bias = jnp.zeros((B, 1, S), jnp.float32)
    else:
        keep = attention_mask.reshape(B, 1, S).astype(jnp.float32)
        mask_bias = (1.0 - keep) * _NEG_INF

    # 256-wide tiles fill the 256x256 MXU on v6e/v7x; on v5e (128x128 MXU) the
    # smaller fallbacks are just as good and HBM-byte reductions dominate.
    ts = _pick_tile(S, (256, 128, 64, 32, 16, 8))
    tq = _pick_tile(S, (256, 128, 64, 32, 16, 8))
    tk = _pick_tile(S, (256, 128, 64, 32, 16, 8))
    dff = block_params[0]["w2"].shape[0]
    tt, tdff = _ffn_tiles(B * S, dff, H)

    # bf16 residual stream in HBM; f32 LayerNorm / softmax / accumulation in-kernel.
    x = x.astype(jnp.bfloat16)
    # TODO(synk): dropout omitted (inference / eval mode — no effect on forward).
    for p in block_params:
        x = transformer_block_apply(x, mask_bias, cos, ssin, p,
                                    n_heads=n_heads, rotary=rotary, causal=causal,
                                    ts=ts, tq=tq, tk=tk, tt=tt, tdff=tdff)
    return x.astype(jnp.float32)


if __name__ == "__main__":
    # Small deterministic config; head_dim = 128 keeps every block (8,128)-aligned
    # and S=512 exercises 2 q-tiles x 2 kv-tiles (causal DMA-skip path), 2 FFN
    # token tiles and 2 d_ff tiles at the 256/512-wide tile defaults.
    hidden_size = 256
    n_heads = 2
    expansion_ratio = 4.0
    dropout = 0.0
    rotary = True
    causal = True
    n_layers = 2

    B, S = 2, 512

    key = jax.random.PRNGKey(0)
    kx, kp = jax.random.split(key)
    x = jax.random.normal(kx, (B, S, hidden_size), jnp.float32)

    block_keys = jax.random.split(kp, n_layers)
    block_params = [init_block_params(k, hidden_size, expansion_ratio)
                    for k in block_keys]

    out = transformer_forward(x, None, block_params,
                              n_heads=n_heads, rotary=rotary, causal=causal)
    out = jax.block_until_ready(out)
    assert out.shape == (B, S, hidden_size)
    assert out.dtype == jnp.float32
    assert bool(jnp.all(jnp.isfinite(out)))
    print("KERNEL_OK")
</pallas_src>

<mosaic_0001>
module attributes {stable_mosaic.version = 11 : i64} {
  func.func @qkv_rope_kernel(%arg0: i32, %arg1: i32, %arg2: memref<1x256x256xbf16, #tpu.memory_space<vmem>>, %arg3: memref<256x256xf32, #tpu.memory_space<vmem>>, %arg4: memref<256x256xf32, #tpu.memory_space<vmem>>, %arg5: memref<1x256xf32, #tpu.memory_space<vmem>>, %arg6: memref<1x256xf32, #tpu.memory_space<vmem>>, %arg7: memref<256x768xbf16, #tpu.memory_space<vmem>>, %arg8: memref<1x768xf32, #tpu.memory_space<vmem>>, %arg9: memref<1x2x256x128xbf16, #tpu.memory_space<vmem>>, %arg10: memref<1x2x256x128xbf16, #tpu.memory_space<vmem>>, %arg11: memref<1x2x256x128xbf16, #tpu.memory_space<vmem>>) attributes {dimension_semantics = [#tpu.dimension_semantics<parallel>, #tpu.dimension_semantics<parallel>], iteration_bounds = array<i64: 2, 2>, scalar_prefetch = 0 : i64, scratch_operands = 0 : i64, tpu.core_type = #tpu.core_type<tc>, window_params = [{transform_indices = @transform_0, window_bounds = array<i64: 1, 256, 256>}, {transform_indices = @transform_1, window_bounds = array<i64: 256, 256>}, {transform_indices = @transform_2, window_bounds = array<i64: 256, 256>}, {pipeline_mode = #tpu.pipeline_mode<synchronous>, transform_indices = @transform_3, window_bounds = array<i64: 1, 256>}, {pipeline_mode = #tpu.pipeline_mode<synchronous>, transform_indices = @transform_4, window_bounds = array<i64: 1, 256>}, {pipeline_mode = #tpu.pipeline_mode<synchronous>, transform_indices = @transform_5, window_bounds = array<i64: 256, 768>}, {pipeline_mode = #tpu.pipeline_mode<synchronous>, transform_indices = @transform_6, window_bounds = array<i64: 1, 768>}, {transform_indices = @transform_7, window_bounds = array<i64: 1, 2, 256, 128>}, {transform_indices = @transform_8, window_bounds = array<i64: 1, 2, 256, 128>}, {transform_indices = @transform_9, window_bounds = array<i64: 1, 2, 256, 128>}]} {
    %c0 = arith.constant 0 : index
    %c0_0 = arith.constant 0 : index
    %c0_1 = arith.constant 0 : index
    %0 = vector.load %arg2[%c0, %c0_0, %c0_1] : memref<1x256x256xbf16, #tpu.memory_space<vmem>>, vector<1x256x256xbf16>
    %1 = vector.shape_cast %0 : vector<1x256x256xbf16> to vector<256x256xbf16>
    %2 = arith.extf %1 : vector<256x256xbf16> to vector<256x256xf32>
    %c0_2 = arith.constant 0 : index
    %c0_3 = arith.constant 0 : index
    %3 = vector.load %arg5[%c0_2, %c0_3] : memref<1x256xf32, #tpu.memory_space<vmem>>, vector<1x256xf32>
    %c0_4 = arith.constant 0 : index
    %c0_5 = arith.constant 0 : index
    %4 = vector.load %arg6[%c0_4, %c0_5] : memref<1x256xf32, #tpu.memory_space<vmem>>, vector<1x256xf32>
    %cst = arith.constant dense<0.000000e+00> : vector<256xf32>
    %5 = vector.multi_reduction <add>, %2, %cst [1] : vector<256x256xf32> to vector<256xf32>
    %6 = vector.shape_cast %5 : vector<256xf32> to vector<256x1xf32>
    %cst_6 = arith.constant 2.560000e+02 : f32
    %7 = vector.broadcast %cst_6 : f32 to vector<256x1xf32>
    %8 = arith.divf %6, %7 : vector<256x1xf32>
    %9 = vector.broadcast %8 : vector<256x1xf32> to vector<256x256xf32>
    %10 = arith.subf %2, %9 : vector<256x256xf32>
    %11 = arith.mulf %10, %10 : vector<256x256xf32>
    %cst_7 = arith.constant dense<0.000000e+00> : vector<256xf32>
    %12 = vector.multi_reduction <add>, %11, %cst_7 [1] : vector<256x256xf32> to vector<256xf32>
    %13 = vector.shape_cast %12 : vector<256xf32> to vector<256x1xf32>
    %cst_8 = arith.constant 2.560000e+02 : f32
    %14 = vector.broadcast %cst_8 : f32 to vector<256x1xf32>
    %15 = arith.divf %13, %14 : vector<256x1xf32>
    %16 = vector.broadcast %8 : vector<256x1xf32> to vector<256x256xf32>
    %17 = arith.subf %2, %16 : vector<256x256xf32>
    %cst_9 = arith.constant 9.99999974E-6 : f32
    %18 = vector.broadcast %cst_9 : f32 to vector<256x1xf32>
    %19 = arith.addf %15, %18 : vector<256x1xf32>
    %20 = math.rsqrt %19 : vector<256x1xf32>
    %21 = vector.broadcast %20 : vector<256x1xf32> to vector<256x256xf32>
    %22 = arith.mulf %17, %21 : vector<256x256xf32>
    %23 = vector.broadcast %3 : vector<1x256xf32> to vector<256x256xf32>
    %24 = arith.mulf %22, %23 : vector<256x256xf32>
    %25 = vector.broadcast %4 : vector<1x256xf32> to vector<256x256xf32>
    %26 = arith.addf %24, %25 : vector<256x256xf32>
    %27 = arith.truncf %26 : vector<256x256xf32> to vector<256x256xbf16>
    %c0_10 = arith.constant 0 : index
    %c0_11 = arith.constant 0 : index
    %28 = vector.load %arg7[%c0_10, %c0_11] : memref<256x768xbf16, #tpu.memory_space<vmem>>, vector<256x768xbf16>
    %cst_12 = arith.constant dense<0.000000e+00> : vector<256x768xf32>
    %29 = tpu.matmul %27, %28, %cst_12 {dimension_numbers = #tpu.dot_dimension_numbers<[1], [0], [0], [1], [0, 0, 1, 1], [], []>} : vector<256x256xbf16>, vector<256x768xbf16>, vector<256x768xf32> -> vector<256x768xf32>
    %c0_13 = arith.constant 0 : index
    %c0_14 = arith.constant 0 : index
    %30 = vector.load %arg8[%c0_13, %c0_14] : memref<1x768xf32, #tpu.memory_space<vmem>>, vector<1x768xf32>
    %31 = vector.broadcast %30 : vector<1x768xf32> to vector<256x768xf32>
    %32 = arith.addf %29, %31 : vector<256x768xf32>
    %33 = vector.extract_strided_slice %32 {offsets = [0, 0], sizes = [256, 256], strides = [1, 1]} : vector<256x768xf32> to vector<256x256xf32>
    %cst_15 = arith.constant 0.0883883461 : f32
    %34 = vector.broadcast %cst_15 : f32 to vector<256x256xf32>
    %35 = arith.mulf %33, %34 : vector<256x256xf32>
    %36 = vector.extract_strided_slice %32 {offsets = [0, 256], sizes = [256, 256], strides = [1, 1]} : vector<256x768xf32> to vector<256x256xf32>
    %37 = vector.extract_strided_slice %32 {offsets = [0, 512], sizes = [256, 256], strides = [1, 1]} : vector<256x768xf32> to vector<256x256xf32>
    %c0_16 = arith.constant 0 : index
    %c0_17 = arith.constant 0 : index
    %38 = vector.load %arg3[%c0_16, %c0_17] : memref<256x256xf32, #tpu.memory_space<vmem>>, vector<256x256xf32>
    %c0_18 = arith.constant 0 : index
    %c0_19 = arith.constant 0 : index
    %39 = vector.load %arg4[%c0_18, %c0_19] : memref<256x256xf32, #tpu.memory_space<vmem>>, vector<256x256xf32>
    %40 = arith.mulf %35, %38 : vector<256x256xf32>
    %41 = vector.extract_strided_slice %35 {offsets = [0, 0], sizes = [256, 128], strides = [1, 1]} : vector<256x256xf32> to vector<256x128xf32>
    %c64_i32 = arith.constant 64 : i32
    %42 = tpu.dynamic_rotate %41 by %c64_i32 dim 1 : vector<256x128xf32>, i32 -> vector<256x128xf32>
    %43 = vector.extract_strided_slice %35 {offsets = [0, 128], sizes = [256, 128], strides = [1, 1]} : vector<256x256xf32> to vector<256x128xf32>
    %c64_i32_20 = arith.constant 64 : i32
    %44 = tpu.dynamic_rotate %43 by %c64_i32_20 dim 1 : vector<256x128xf32>, i32 -> vector<256x128xf32>
    %45 = tpu.concatenate %42, %44 in 1 : vector<256x128xf32>, vector<256x128xf32> -> vector<256x256xf32>
    %46 = arith.mulf %45, %39 : vector<256x256xf32>
    %47 = arith.addf %40, %46 : vector<256x256xf32>
    %48 = arith.mulf %36, %38 : vector<256x256xf32>
    %49 = vector.extract_strided_slice %36 {offsets = [0, 0], sizes = [256, 128], strides = [1, 1]} : vector<256x256xf32> to vector<256x128xf32>
    %c64_i32_21 = arith.constant 64 : i32
    %50 = tpu.dynamic_rotate %49 by %c64_i32_21 dim 1 : vector<256x128xf32>, i32 -> vector<256x128xf32>
    %51 = vector.extract_strided_slice %36 {offsets = [0, 128], sizes = [256, 128], strides = [1, 1]} : vector<256x256xf32> to vector<256x128xf32>
    %c64_i32_22 = arith.constant 64 : i32
    %52 = tpu.dynamic_rotate %51 by %c64_i32_22 dim 1 : vector<256x128xf32>, i32 -> vector<256x128xf32>
    %53 = tpu.concatenate %50, %52 in 1 : vector<256x128xf32>, vector<256x128xf32> -> vector<256x256xf32>
    %54 = arith.mulf %53, %39 : vector<256x256xf32>
    %55 = arith.addf %48, %54 : vector<256x256xf32>
    %56 = arith.truncf %47 : vector<256x256xf32> to vector<256x256xbf16>
    %57 = arith.truncf %55 : vector<256x256xf32> to vector<256x256xbf16>
    %58 = arith.truncf %37 : vector<256x256xf32> to vector<256x256xbf16>
    %59 = vector.extract_strided_slice %56 {offsets = [0, 0], sizes = [256, 128], strides = [1, 1]} : vector<256x256xbf16> to vector<256x128xbf16>
    %c0_23 = arith.constant 0 : index
    %c0_24 = arith.constant 0 : index
    %c0_25 = arith.constant 0 : index
    %c0_26 = arith.constant 0 : index
    %60 = vector.load %arg9[%c0_23, %c0_24, %c0_25, %c0_26] : memref<1x2x256x128xbf16, #tpu.memory_space<vmem>>, vector<1x1x256x128xbf16>
    %61 = vector.shape_cast %60 : vector<1x1x256x128xbf16> to vector<256x128xbf16>
    %62 = vector.shape_cast %59 : vector<256x128xbf16> to vector<1x1x256x128xbf16>
    tpu.vector_store %arg9[%c0_23, %c0_24, %c0_25, %c0_26], %62 {strides = array<i32>} : memref<1x2x256x128xbf16, #tpu.memory_space<vmem>>, vector<1x1x256x128xbf16>,
    %63 = vector.extract_strided_slice %57 {offsets = [0, 0], sizes = [256, 128], strides = [1, 1]} : vector<256x256xbf16> to vector<256x128xbf16>
    %c0_27 = arith.constant 0 : index
    %c0_28 = arith.constant 0 : index
    %c0_29 = arith.constant 0 : index
    %c0_30 = arith.constant 0 : index
    %64 = vector.load %arg10[%c0_27, %c0_28, %c0_29, %c0_30] : memref<1x2x256x128xbf16, #tpu.memory_space<vmem>>, vector<1x1x256x128xbf16>
    %65 = vector.shape_cast %64 : vector<1x1x256x128xbf16> to vector<256x128xbf16>
    %66 = vector.shape_cast %63 : vector<256x128xbf16> to vector<1x1x256x128xbf16>
    tpu.vector_store %arg10[%c0_27, %c0_28, %c0_29, %c0_30], %66 {strides = array<i32>} : memref<1x2x256x128xbf16, #tpu.memory_space<vmem>>, vector<1x1x256x128xbf16>,
    %67 = vector.extract_strided_slice %58 {offsets = [0, 0], sizes = [256, 128], strides = [1, 1]} : vector<256x256xbf16> to vector<256x128xbf16>
    %c0_31 = arith.constant 0 : index
    %c0_32 = arith.constant 0 : index
    %c0_33 = arith.constant 0 : index
    %c0_34 = arith.constant 0 : index
    %68 = vector.load %arg11[%c0_31, %c0_32, %c0_33, %c0_34] : memref<1x2x256x128xbf16, #tpu.memory_space<vmem>>, vector<1x1x256x128xbf16>
    %69 = vector.shape_cast %68 : vector<1x1x256x128xbf16> to vector<256x128xbf16>
    %70 = vector.shape_cast %67 : vector<256x128xbf16> to vector<1x1x256x128xbf16>
    tpu.vector_store %arg11[%c0_31, %c0_32, %c0_33, %c0_34], %70 {strides = array<i32>} : memref<1x2x256x128xbf16, #tpu.memory_space<vmem>>, vector<1x1x256x128xbf16>,
    %71 = vector.extract_strided_slice %56 {offsets = [0, 128], sizes = [256, 128], strides = [1, 1]} : vector<256x256xbf16> to vector<256x128xbf16>
    %c0_35 = arith.constant 0 : index
    %c1 = arith.constant 1 : index
    %c0_36 = arith.constant 0 : index
    %c0_37 = arith.constant 0 : index
    %72 = vector.load %arg9[%c0_35, %c1, %c0_36, %c0_37] : memref<1x2x256x128xbf16, #tpu.memory_space<vmem>>, vector<1x1x256x128xbf16>
    %73 = vector.shape_cast %72 : vector<1x1x256x128xbf16> to vector<256x128xbf16>
    %74 = vector.shape_cast %71 : vector<256x128xbf16> to vector<1x1x256x128xbf16>
    tpu.vector_store %arg9[%c0_35, %c1, %c0_36, %c0_37], %74 {strides = array<i32>} : memref<1x2x256x128xbf16, #tpu.memory_space<vmem>>, vector<1x1x256x128xbf16>,
    %75 = vector.extract_strided_slice %57 {offsets = [0, 128], sizes = [256, 128], strides = [1, 1]} : vector<256x256xbf16> to vector<256x128xbf16>
    %c0_38 = arith.constant 0 : index
    %c1_39 = arith.constant 1 : index
    %c0_40 = arith.constant 0 : index
    %c0_41 = arith.constant 0 : index
    %76 = vector.load %arg10[%c0_38, %c1_39, %c0_40, %c0_41] : memref<1x2x256x128xbf16, #tpu.memory_space<vmem>>, vector<1x1x256x128xbf16>
    %77 = vector.shape_cast %76 : vector<1x1x256x128xbf16> to vector<256x128xbf16>
    %78 = vector.shape_cast %75 : vector<256x128xbf16> to vector<1x1x256x128xbf16>
    tpu.vector_store %arg10[%c0_38, %c1_39, %c0_40, %c0_41], %78 {strides = array<i32>} : memref<1x2x256x128xbf16, #tpu.memory_space<vmem>>, vector<1x1x256x128xbf16>,
    %79 = vector.extract_strided_slice %58 {offsets = [0, 128], sizes = [256, 128], strides = [1, 1]} : vector<256x256xbf16> to vector<256x128xbf16>
    %c0_42 = arith.constant 0 : index
    %c1_43 = arith.constant 1 : index
    %c0_44 = arith.constant 0 : index
    %c0_45 = arith.constant 0 : index
    %80 = vector.load %arg11[%c0_42, %c1_43, %c0_44, %c0_45] : memref<1x2x256x128xbf16, #tpu.memory_space<vmem>>, vector<1x1x256x128xbf16>
    %81 = vector.shape_cast %80 : vector<1x1x256x128xbf16> to vector<256x128xbf16>
    %82 = vector.shape_cast %79 : vector<256x128xbf16> to vector<1x1x256x128xbf16>
    tpu.vector_store %arg11[%c0_42, %c1_43, %c0_44, %c0_45], %82 {strides = array<i32>} : memref<1x2x256x128xbf16, #tpu.memory_space<vmem>>, vector<1x1x256x128xbf16>,
    return
  }
  func.func @transform_0(%arg0: i32, %arg1: i32) -> (i32, i32, i32) {
    %c0_i32 = arith.constant 0 : i32
    %c0_i32_0 = arith.constant 0 : i32
    return %arg0, %arg1, %c0_i32 : i32, i32, i32
  }
  func.func @transform_1(%arg0: i32, %arg1: i32) -> (i32, i32) {
    %c0_i32 = arith.constant 0 : i32
    %c0_i32_0 = arith.constant 0 : i32
    return %arg1, %c0_i32 : i32, i32
  }
  func.func @transform_2(%arg0: i32, %arg1: i32) -> (i32, i32) {
    %c0_i32 = arith.constant 0 : i32
    %c0_i32_0 = arith.constant 0 : i32
    return %arg1, %c0_i32 : i32, i32
  }
  func.func @transform_3(%arg0: i32, %arg1: i32) -> (i32, i32) {
    %c0_i32 = arith.constant 0 : i32
    %c0_i32_0 = arith.constant 0 : i32
    %c0_i32_1 = arith.constant 0 : i32
    return %c0_i32, %c0_i32_0 : i32, i32
  }
  func.func @transform_4(%arg0: i32, %arg1: i32) -> (i32, i32) {
    %c0_i32 = arith.constant 0 : i32
    %c0_i32_0 = arith.constant 0 : i32
    %c0_i32_1 = arith.constant 0 : i32
    return %c0_i32, %c0_i32_0 : i32, i32
  }
  func.func @transform_5(%arg0: i32, %arg1: i32) -> (i32, i32) {
    %c0_i32 = arith.constant 0 : i32
    %c0_i32_0 = arith.constant 0 : i32
    %c0_i32_1 = arith.constant 0 : i32
    return %c0_i32, %c0_i32_0 : i32, i32
  }
  func.func @transform_6(%arg0: i32, %arg1: i32) -> (i32, i32) {
    %c0_i32 = arith.constant 0 : i32
    %c0_i32_0 = arith.constant 0 : i32
    %c0_i32_1 = arith.constant 0 : i32
    return %c0_i32, %c0_i32_0 : i32, i32
  }
  func.func @transform_7(%arg0: i32, %arg1: i32) -> (i32, i32, i32, i32) {
    %c0_i32 = arith.constant 0 : i32
    %c0_i32_0 = arith.constant 0 : i32
    %c0_i32_1 = arith.constant 0 : i32
    return %arg0, %c0_i32, %arg1, %c0_i32_0 : i32, i32, i32, i32
  }
  func.func @transform_8(%arg0: i32, %arg1: i32) -> (i32, i32, i32, i32) {
    %c0_i32 = arith.constant 0 : i32
    %c0_i32_0 = arith.constant 0 : i32
    %c0_i32_1 = arith.constant 0 : i32
    return %arg0, %c0_i32, %arg1, %c0_i32_0 : i32, i32, i32, i32
  }
  func.func @transform_9(%arg0: i32, %arg1: i32) -> (i32, i32, i32, i32) {
    %c0_i32 = arith.constant 0 : i32
    %c0_i32_0 = arith.constant 0 : i32
    %c0_i32_1 = arith.constant 0 : i32
    return %arg0, %c0_i32, %arg1, %c0_i32_0 : i32, i32, i32, i32
  }
}

</mosaic_0001>

<llo_original>
// kernel: tpu_custom_call.1
$region0: #{tpu_custom_call.1}
  #allocation0 [shape = 'u32[]', space=smem, size = 0x4, offset = 0x4, fixed_abs, tag = 'smem constant byte address 0x4 - core index']
  #allocation1 [shape = 'u32[72,128]{1,0:T(1,128)}', space=vmem, size = 0x9000, scoped, tag = 'internal scratch']
  #allocation17 [shape = 's32[]', space=sflag, size = 0x4, offset = 0, fixed_abs, tag = 'sflag constant byte address 0x0 - dummy sync flag']
  #allocation19 [shape = 's32[]', space=sflag, size = 0x4, offset = 0, fixed_abs, tag = 'sflag constant byte address 0x0 - dummy sync flag']
  #allocation21 [shape = 's32[]', space=sflag, size = 0x4, offset = 0, fixed_abs, tag = 'sflag constant byte address 0x0 - dummy sync flag']
  %s0 = inlined_call_operand.hbm [shape: bf16[2,512,256], index: 0, kind: input, shape index: {}]
  %s1 = inlined_call_operand.hbm [shape: f32[512,256], index: 1, kind: input, shape index: {}]
  %s2 = inlined_call_operand.hbm [shape: f32[512,256], index: 2, kind: input, shape index: {}]
  %s3 = inlined_call_operand.vmem [shape: f32[1,256], index: 3, kind: input, shape index: {}]
  %s4 = inlined_call_operand.hbm [shape: f32[1,256], index: 4, kind: input, shape index: {}]
  %s5 = inlined_call_operand.hbm [shape: bf16[256,768], index: 5, kind: input, shape index: {}]
  %s6 = inlined_call_operand.hbm [shape: f32[1,768], index: 6, kind: input, shape index: {}]
  %s7 = inlined_call_operand.hbm [shape: bf16[2,2,512,128], index: 7, kind: output, shape index: {0}]
  %s8 = inlined_call_operand.hbm [shape: bf16[2,2,512,128], index: 8, kind: output, shape index: {1}]
  %s9 = inlined_call_operand.hbm [shape: bf16[2,2,512,128], index: 9, kind: output, shape index: {2}]
  %10 = xla_tuple %s7, %s8, %s9
  %s11 = sld [smem:[#allocation0]]
  $region101: #{tpu_custom_call.1} parent=0
    _
  %s13 = ssub.s32 1, %s11
  %s14 = scalar_select 0, %s13, %s11
  $region1: #{tpu_custom_call.1} parent=0
    #allocation2 [shape = 'u8[262144]{0}', space=vmem, size = 0x40000, scoped, tag = 'input window, operand 0']
    #allocation3 [shape = 's32[2]{0}', space=sflag, size = 0x8, scoped, tag = 'scoped memory for tpu_custom_call.1']
    #allocation4 [shape = 's32[2]{0}', space=sflag, size = 0x8, scoped, tag = 'scoped memory for tpu_custom_call.1']
    #allocation5 [shape = 'u8[524288]{0}', space=vmem, size = 0x80000, scoped, tag = 'input window, operand 1']
    #allocation6 [shape = 's32[2]{0}', space=sflag, size = 0x8, scoped, tag = 'scoped memory for tpu_custom_call.1']
    #allocation7 [shape = 'u8[524288]{0}', space=vmem, size = 0x80000, scoped, tag = 'input window, operand 2']
    #allocation8 [shape = 'u8[1024]{0}', space=vmem, size = 0x400, scoped, tag = 'input window, operand 4, single buffered']
    #allocation9 [shape = 's32[1]{0}', space=sflag, size = 0x4, scoped, tag = 'scoped memory for tpu_custom_call.1']
    #allocation10 [shape = 'u8[393216]{0}', space=vmem, size = 0x60000, scoped, tag = 'input window, operand 5, single buffered']
    #allocation11 [shape = 'u8[3072]{0}', space=vmem, size = 0xc00, scoped, tag = 'input window, operand 6, single buffered']
    #allocation12 [shape = 's32[1]{0}', space=sflag, size = 0x4, scoped, tag = 'scoped memory for tpu_custom_call.1']
    #allocation13 [shape = 'u8[262144]{0}', space=vmem, size = 0x40000, scoped, tag = 'output window, operand 0']
    #allocation14 [shape = 'u8[262144]{0}', space=vmem, size = 0x40000, scoped, tag = 'output window, operand 1']
    #allocation15 [shape = 's32[2]{0}', space=sflag, size = 0x8, scoped, tag = 'scoped memory for tpu_custom_call.1']
    #allocation16 [shape = 'u8[262144]{0}', space=vmem, size = 0x40000, scoped, tag = 'output window, operand 2']
    %15 = vsyncpa [#allocation3], 0
    %s16 = scalar_lea.sflag [#allocation3], 1
    %17 = vsyncpa %s16, 0
    %18 = vsyncpa [#allocation6], 0
    %s19 = scalar_lea.sflag [#allocation6], 1
    %20 = vsyncpa %s19, 0
    %21 = vsyncpa [#allocation9], 0
    %22 = vsyncpa [#allocation12], 0
    %23 = vsyncpa [#allocation4], 0
    %s24 = scalar_lea.sflag [#allocation4], 1
    %25 = vsyncpa %s24, 0
    %26 = vsyncpa [#allocation15], 0
    %s27 = scalar_lea.sflag [#allocation15], 1
    %28 = vsyncpa %s27, 0
    loop: start=0, step=1, limit=6
    $region2: #{tpu_custom_call.1} parent=1 // loop_pre_header
      _
    $region3: #{tpu_custom_call.1} parent=1 // loop_header
      %s30 = sphi 0, %s34
      %p31 = scmp.ge.s32.totalorder %s30, 6
      %s37 = sphi 0, %s49
      %s38 = sphi 0, %s45
      %s39 = sphi 0, %s37
      %s40 = sphi 0, %s38
      %s41 = sphi 0, %s39
      %s42 = sphi 0, %s40
      %s54 = sphi 0, %s56
      %s57 = sphi 0, %s54
      %s58 = sphi 0, %s57
      %s74 = sphi 0, %s58
      %s80 = sphi 0, %s82
      %s83 = sphi 0, %s80
      %s84 = sphi 0, %s83
      %s100 = sphi 0, %s84
      %s106 = sphi 0, %s108
      %s109 = sphi 0, %s106
      %s110 = sphi 0, %s109
      %s126 = sphi 0, %s110
      %s130 = sphi 0, %s130
      %s132 = sphi 0, %s130
      %s133 = sphi 0, %s132
      %s147 = sphi 0, %s133
      %s151 = sphi 0, %s151
      %s153 = sphi 0, %s151
      %s154 = sphi 0, %s153
      %s168 = sphi 0, %s154
      %s172 = sphi 0, %s172
      %s174 = sphi 0, %s172
      %s175 = sphi 0, %s174
      %s189 = sphi 0, %s175
      %s193 = sphi 0, %s193
      %s195 = sphi 0, %s193
      %s196 = sphi 0, %s195
      %s210 = sphi 0, %s196
      %s218 = sphi 0, %s220
      %s221 = sphi 0, %s218
      %s222 = sphi 0, %s221
      %s238 = sphi 0, %s222
      %s246 = sphi 0, %s248
      %s249 = sphi 0, %s246
      %s250 = sphi 0, %s249
      %s266 = sphi 0, %s250
      %s274 = sphi 0, %s276
      %s277 = sphi 0, %s274
      %s278 = sphi 0, %s277
      %s294 = sphi 0, %s278
    $region4: #{tpu_custom_call.1} parent=1 // loop_header_branch
      %33 = sbr.rel (%p31) target = $region8
    $region5: #{tpu_custom_call.1} parent=1 // loop_body
      %s35 = ssub.s32 %s30, 1
      %s36 = ssub.s32 %s30, 2
      %s43 = sadd.s32 1, %s38
      %p44 = scmp.ge.s32.totalorder %s43, 2
      %s45 = scalar_select %p44, 0, %s43
      %s46 = sadd.s32 1, %s37
      %s47 = scalar_select %p44, %s46, %s37
      %p48 = scmp.ge.s32.totalorder %s47, 2
      %s49 = scalar_select %p48, 0, %s47
      %s50 = ssub.s32 %s37, %s49
      %s51 = ssub.s32 %s38, %s45
      %s52 = sor.u32 %s50, %s51
      %p53 = scmp.eq.s32.totalorder %s52, 0
      %s55 = sadd.s32 %s54, 1
      %s56 = scalar_select %p53, %s54, %s55
      %p59 = pneg %p53
      %p60 = scmp.eq.s32.totalorder %s30, 3
      %p61 = por %p59, %p60
      %p62 = scmp.ne.s32.totalorder %s54, %s57
      %p63 = scmp.eq.s32.totalorder %s30, 0
      %p64 = por %p62, %p63
      %p65 = scmp.ne.s32.totalorder %s54, %s57
      %p66 = scmp.eq.s32.totalorder %s35, 3
      %p67 = por %p65, %p66
      %p68 = scmp.ne.s32.totalorder %s57, %s58
      %p69 = scmp.eq.s32.totalorder %s35, 0
      %p70 = por %p68, %p69
      %p71 = scmp.ne.s32.totalorder %s57, %s58
      %p72 = scmp.eq.s32.totalorder %s36, 3
      %p73 = por %p71, %p72
      %p75 = scmp.ne.s32.totalorder %s58, %s74
      %p76 = scmp.eq.s32.totalorder %s36, 0
      %p77 = por %p75, %p76
      %s78 = ssub.s32 %s38, %s45
      %p79 = scmp.eq.s32.totalorder %s78, 0
      %s81 = sadd.s32 %s80, 1
      %s82 = scalar_select %p79, %s80, %s81
      %p85 = pneg %p79
      %p86 = scmp.eq.s32.totalorder %s30, 3
      %p87 = por %p85, %p86
      %p88 = scmp.ne.s32.totalorder %s80, %s83
      %p89 = scmp.eq.s32.totalorder %s30, 0
      %p90 = por %p88, %p89
      %p91 = scmp.ne.s32.totalorder %s80, %s83
      %p92 = scmp.eq.s32.totalorder %s35, 3
      %p93 = por %p91, %p92
      %p94 = scmp.ne.s32.totalorder %s83, %s84
      %p95 = scmp.eq.s32.totalorder %s35, 0
      %p96 = por %p94, %p95
      %p97 = scmp.ne.s32.totalorder %s83, %s84
      %p98 = scmp.eq.s32.totalorder %s36, 3
      %p99 = por %p97, %p98
      %p101 = scmp.ne.s32.totalorder %s84, %s100
      %p102 = scmp.eq.s32.totalorder %s36, 0
      %p103 = por %p101, %p102
      %s104 = ssub.s32 %s38, %s45
      %p105 = scmp.eq.s32.totalorder %s104, 0
      %s107 = sadd.s32 %s106, 1
      %s108 = scalar_select %p105, %s106, %s107
      %p111 = pneg %p105
      %p112 = scmp.eq.s32.totalorder %s30, 3
      %p113 = por %p111, %p112
      %p114 = scmp.ne.s32.totalorder %s106, %s109
      %p115 = scmp.eq.s32.totalorder %s30, 0
      %p116 = por %p114, %p115
      %p117 = scmp.ne.s32.totalorder %s106, %s109
      %p118 = scmp.eq.s32.totalorder %s35, 3
      %p119 = por %p117, %p118
      %p120 = scmp.ne.s32.totalorder %s109, %s110
      %p121 = scmp.eq.s32.totalorder %s35, 0
      %p122 = por %p120, %p121
      %p123 = scmp.ne.s32.totalorder %s109, %s110
      %p124 = scmp.eq.s32.totalorder %s36, 3
      %p125 = por %p123, %p124
      %p127 = scmp.ne.s32.totalorder %s110, %s126
      %p128 = scmp.eq.s32.totalorder %s36, 0
      %p129 = por %p127, %p128
      %s131 = sadd.s32 %s130, 1
      %p134 = scmp.eq.s32.totalorder %s30, 3
      %p135 = scmp.ne.s32.totalorder %s130, %s132
      %p136 = scmp.eq.s32.totalorder %s30, 0
      %p137 = por %p135, %p136
      %p138 = scmp.ne.s32.totalorder %s130, %s132
      %p139 = scmp.eq.s32.totalorder %s35, 3
      %p140 = por %p138, %p139
      %p141 = scmp.ne.s32.totalorder %s132, %s133
      %p142 = scmp.eq.s32.totalorder %s35, 0
      %p143 = por %p141, %p142
      %p144 = scmp.ne.s32.totalorder %s132, %s133
      %p145 = scmp.eq.s32.totalorder %s36, 3
      %p146 = por %p144, %p145
      %p148 = scmp.ne.s32.totalorder %s133, %s147
      %p149 = scmp.eq.s32.totalorder %s36, 0
      %p150 = por %p148, %p149
      %s152 = sadd.s32 %s151, 1
      %p155 = scmp.eq.s32.totalorder %s30, 3
      %p156 = scmp.ne.s32.totalorder %s151, %s153
      %p157 = scmp.eq.s32.totalorder %s30, 0
      %p158 = por %p156, %p157
      %p159 = scmp.ne.s32.totalorder %s151, %s153
      %p160 = scmp.eq.s32.totalorder %s35, 3
      %p161 = por %p159, %p160
      %p162 = scmp.ne.s32.totalorder %s153, %s154
      %p163 = scmp.eq.s32.totalorder %s35, 0
      %p164 = por %p162, %p163
      %p165 = scmp.ne.s32.totalorder %s153, %s154
      %p166 = scmp.eq.s32.totalorder %s36, 3
      %p167 = por %p165, %p166
      %p169 = scmp.ne.s32.totalorder %s154, %s168
      %p170 = scmp.eq.s32.totalorder %s36, 0
      %p171 = por %p169, %p170
      %s173 = sadd.s32 %s172, 1
      %p176 = scmp.eq.s32.totalorder %s30, 3
      %p177 = scmp.ne.s32.totalorder %s172, %s174
      %p178 = scmp.eq.s32.totalorder %s30, 0
      %p179 = por %p177, %p178
      %p180 = scmp.ne.s32.totalorder %s172, %s174
      %p181 = scmp.eq.s32.totalorder %s35, 3
      %p182 = por %p180, %p181
      %p183 = scmp.ne.s32.totalorder %s174, %s175
      %p184 = scmp.eq.s32.totalorder %s35, 0
      %p185 = por %p183, %p184
      %p186 = scmp.ne.s32.totalorder %s174, %s175
      %p187 = scmp.eq.s32.totalorder %s36, 3
      %p188 = por %p186, %p187
      %p190 = scmp.ne.s32.totalorder %s175, %s189
      %p191 = scmp.eq.s32.totalorder %s36, 0
      %p192 = por %p190, %p191
      %s194 = sadd.s32 %s193, 1
      %p197 = scmp.eq.s32.totalorder %s30, 3
      %p198 = scmp.ne.s32.totalorder %s193, %s195
      %p199 = scmp.eq.s32.totalorder %s30, 0
      %p200 = por %p198, %p199
      %p201 = scmp.ne.s32.totalorder %s193, %s195
      %p202 = scmp.eq.s32.totalorder %s35, 3
      %p203 = por %p201, %p202
      %p204 = scmp.ne.s32.totalorder %s195, %s196
      %p205 = scmp.eq.s32.totalorder %s35, 0
      %p206 = por %p204, %p205
      %p207 = scmp.ne.s32.totalorder %s195, %s196
      %p208 = scmp.eq.s32.totalorder %s36, 3
      %p209 = por %p207, %p208
      %p211 = scmp.ne.s32.totalorder %s196, %s210
      %p212 = scmp.eq.s32.totalorder %s36, 0
      %p213 = por %p211, %p212
      %s214 = ssub.s32 %s37, %s49
      %s215 = ssub.s32 %s38, %s45
      %s216 = sor.u32 %s214, %s215
      %p217 = scmp.eq.s32.totalorder %s216, 0
      %s219 = sadd.s32 %s218, 1
      %s220 = scalar_select %p217, %s218, %s219
      %p223 = pneg %p217
      %p224 = scmp.eq.s32.totalorder %s30, 3
      %p225 = por %p223, %p224
      %p226 = scmp.ne.s32.totalorder %s218, %s221
      %p227 = scmp.eq.s32.totalorder %s30, 0
      %p228 = por %p226, %p227
      %p229 = scmp.ne.s32.totalorder %s218, %s221
      %p230 = scmp.eq.s32.totalorder %s35, 3
      %p231 = por %p229, %p230
      %p232 = scmp.ne.s32.totalorder %s221, %s222
      %p233 = scmp.eq.s32.totalorder %s35, 0
      %p234 = por %p232, %p233
      %p235 = scmp.ne.s32.totalorder %s221, %s222
      %p236 = scmp.eq.s32.totalorder %s36, 3
      %p237 = por %p235, %p236
      %p239 = scmp.ne.s32.totalorder %s222, %s238
      %p240 = scmp.eq.s32.totalorder %s36, 0
      %p241 = por %p239, %p240
      %s242 = ssub.s32 %s37, %s49
      %s243 = ssub.s32 %s38, %s45
      %s244 = sor.u32 %s242, %s243
      %p245 = scmp.eq.s32.totalorder %s244, 0
      %s247 = sadd.s32 %s246, 1
      %s248 = scalar_select %p245, %s246, %s247
      %p251 = pneg %p245
      %p252 = scmp.eq.s32.totalorder %s30, 3
      %p253 = por %p251, %p252
      %p254 = scmp.ne.s32.totalorder %s246, %s249
      %p255 = scmp.eq.s32.totalorder %s30, 0
      %p256 = por %p254, %p255
      %p257 = scmp.ne.s32.totalorder %s246, %s249
      %p258 = scmp.eq.s32.totalorder %s35, 3
      %p259 = por %p257, %p258
      %p260 = scmp.ne.s32.totalorder %s249, %s250
      %p261 = scmp.eq.s32.totalorder %s35, 0
      %p262 = por %p260, %p261
      %p263 = scmp.ne.s32.totalorder %s249, %s250
      %p264 = scmp.eq.s32.totalorder %s36, 3
      %p265 = por %p263, %p264
      %p267 = scmp.ne.s32.totalorder %s250, %s266
      %p268 = scmp.eq.s32.totalorder %s36, 0
      %p269 = por %p267, %p268
      %s270 = ssub.s32 %s37, %s49
      %s271 = ssub.s32 %s38, %s45
      %s272 = sor.u32 %s270, %s271
      %p273 = scmp.eq.s32.totalorder %s272, 0
      %s275 = sadd.s32 %s274, 1
      %s276 = scalar_select %p273, %s274, %s275
      %p279 = pneg %p273
      %p280 = scmp.eq.s32.totalorder %s30, 3
      %p281 = por %p279, %p280
      %p282 = scmp.ne.s32.totalorder %s274, %s277
      %p283 = scmp.eq.s32.totalorder %s30, 0
      %p284 = por %p282, %p283
      %p285 = scmp.ne.s32.totalorder %s274, %s277
      %p286 = scmp.eq.s32.totalorder %s35, 3
      %p287 = por %p285, %p286
      %p288 = scmp.ne.s32.totalorder %s277, %s278
      %p289 = scmp.eq.s32.totalorder %s35, 0
      %p290 = por %p288, %p289
      %p291 = scmp.ne.s32.totalorder %s277, %s278
      %p292 = scmp.eq.s32.totalorder %s36, 3
      %p293 = por %p291, %p292
      %p295 = scmp.ne.s32.totalorder %s278, %s294
      %p296 = scmp.eq.s32.totalorder %s36, 0
      %p297 = por %p295, %p296
      %p298 = scmp.le.s32.totalorder 1, %s30
      %p299 = scmp.lt.s32.totalorder %s30, 5
      %p300 = pnand %p298, %p299
      %p301 = pneg %p300
      // Predicated region
      $region9: #{tpu_custom_call.1} parent=5 // pred_check
        _
      $region10: #{tpu_custom_call.1} parent=5 // pred_check_branch
        %303 = sbr.rel (%p300) target = $region12
      $region11: #{tpu_custom_call.1} parent=5 // pred_region
        %s304 = ssub.s32 %s30, 1
        // Predicated region
        $region13: #{tpu_custom_call.1} parent=11 // pred_check
          %p305 = pneg %p143
        $region14: #{tpu_custom_call.1} parent=11 // pred_check_branch
          %307 = sbr.rel (%p305) target = $region16
        $region15: #{tpu_custom_call.1} parent=11 // pred_region
          _
        $region16: #{tpu_custom_call.1} parent=11 // pred_fallthru
          _
        // Predicated region
        $region17: #{tpu_custom_call.1} parent=11 // pred_check
          %p308 = pneg %p164
        $region18: #{tpu_custom_call.1} parent=11 // pred_check_branch
          %310 = sbr.rel (%p308) target = $region20
        $region19: #{tpu_custom_call.1} parent=11 // pred_region
          %312 = vsyncadd [#allocation9], 0
          %s314 = sshll.u32 %s4, 4
          %s315 = int_to_ptr.hbm [resolvable:$true] %s314
          %s316 = sshll.u32 [#allocation8], 4
          %s317 = int_to_ptr.vmem [resolvable:$true] %s316
          %319 = dma.hbm_to_vmem [thread:$0]  %s315, 32, %s317, [#allocation9]
        $region20: #{tpu_custom_call.1} parent=11 // pred_fallthru
          _
        // Predicated region
        $region21: #{tpu_custom_call.1} parent=11 // pred_check
          %p320 = pneg %p185
        $region22: #{tpu_custom_call.1} parent=11 // pred_check_branch
          %322 = sbr.rel (%p320) target = $region24
        $region23: #{tpu_custom_call.1} parent=11 // pred_region
          %324 = vsyncadd [#allocation9], 0
          %s325 = sshll.u32 %s5, 4
          %s326 = int_to_ptr.hbm [resolvable:$true] %s325
          %s327 = sshll.u32 [#allocation10], 4
          %s328 = int_to_ptr.vmem [resolvable:$true] %s327
          %333 = dma.hbm_to_vmem [thread:$0]  %s326, 12288, %s328, [#allocation9], 384, 384, 24
        $region24: #{tpu_custom_call.1} parent=11 // pred_fallthru
          _
        // Predicated region
        $region25: #{tpu_custom_call.1} parent=11 // pred_check
          %p334 = pneg %p206
        $region26: #{tpu_custom_call.1} parent=11 // pred_check_branch
          %336 = sbr.rel (%p334) target = $region28
        $region27: #{tpu_custom_call.1} parent=11 // pred_region
          %338 = vsyncadd [#allocation12], 0
          %s340 = sshll.u32 %s6, 4
          %s341 = int_to_ptr.hbm [resolvable:$true] %s340
          %s342 = sshll.u32 [#allocation11], 4
          %s343 = int_to_ptr.vmem [resolvable:$true] %s342
          %345 = dma.hbm_to_vmem [thread:$0]  %s341, 96, %s343, [#allocation12]
        $region28: #{tpu_custom_call.1} parent=11 // pred_fallthru
          _
      $region12: #{tpu_custom_call.1} parent=5 // pred_fallthru
        _
      %p346 = scmp.lt.s32.totalorder %s30, 4
      // Predicated region
      $region29: #{tpu_custom_call.1} parent=5 // pred_check
        %p347 = pneg %p346
      $region30: #{tpu_custom_call.1} parent=5 // pred_check_branch
        %349 = sbr.rel (%p347) target = $region32
      $region31: #{tpu_custom_call.1} parent=5 // pred_region
        // Predicated region
        $region33: #{tpu_custom_call.1} parent=31 // pred_check
          %p350 = pneg %p64
        $region34: #{tpu_custom_call.1} parent=31 // pred_check_branch
          %352 = sbr.rel (%p350) target = $region36
        $region35: #{tpu_custom_call.1} parent=31 // pred_region
          %s353 = sand.u32 %s54, 1
          %s354 = scalar_lea.sflag [#allocation3], %s353
          %s355 = sand.u32 %s54, 1
          %s356 = smul.addr %s355, 256
          %s357 = scalar_lea.vmem [#allocation2], %s356
          %s358 = smul.u32 32, %s38
          %360 = vsyncadd %s354, 0
          %s361 = smul.addr %s358, 2
          %s362 = smul.addr %s37, 128
          %s363 = sadd.s32 %s361, %s362
          %s364 = smul.addr %s363, 4
          %s365 = scalar_lea.hbm %s0, %s364
          %s366 = sshll.u32 %s365, 4
          %s367 = int_to_ptr.hbm [resolvable:$true] %s366
          %s368 = sshll.u32 %s357, 4
          %s369 = int_to_ptr.vmem [resolvable:$true] %s368
          %374 = dma.hbm_to_vmem [thread:$0]  %s367, 4096, %s369, %s354, 128, 128, 8
        $region36: #{tpu_custom_call.1} parent=31 // pred_fallthru
          _
        // Predicated region
        $region37: #{tpu_custom_call.1} parent=31 // pred_check
          %p375 = pneg %p90
        $region38: #{tpu_custom_call.1} parent=31 // pred_check_branch
          %377 = sbr.rel (%p375) target = $region40
        $region39: #{tpu_custom_call.1} parent=31 // pred_region
          %s378 = sand.u32 %s30, 1
          %s379 = scalar_lea.sflag [#allocation6], %s378
          %s380 = sand.u32 %s80, 1
          %s381 = smul.addr %s380, 512
          %s382 = scalar_lea.vmem [#allocation5], %s381
          %s383 = smul.u32 32, %s38
          %385 = vsyncadd %s379, 0
          %s386 = smul.addr %s383, 2
          %s387 = smul.addr %s386, 8
          %s388 = scalar_lea.hbm %s1, %s387
          %s389 = sshll.u32 %s388, 4
          %s390 = int_to_ptr.hbm [resolvable:$true] %s389
          %s391 = sshll.u32 %s382, 4
          %s392 = int_to_ptr.vmem [resolvable:$true] %s391
          %397 = dma.hbm_to_vmem [thread:$0]  %s390, 8192, %s392, %s379, 256, 256, 16
        $region40: #{tpu_custom_call.1} parent=31 // pred_fallthru
          _
        // Predicated region
        $region41: #{tpu_custom_call.1} parent=31 // pred_check
          %p398 = pneg %p116
        $region42: #{tpu_custom_call.1} parent=31 // pred_check_branch
          %400 = sbr.rel (%p398) target = $region44
        $region43: #{tpu_custom_call.1} parent=31 // pred_region
          %s401 = sand.u32 %s30, 1
          %s402 = scalar_lea.sflag [#allocation6], %s401
          %s403 = sand.u32 %s106, 1
          %s404 = smul.addr %s403, 512
          %s405 = scalar_lea.vmem [#allocation7], %s404
          %s406 = smul.u32 32, %s38
          %408 = vsyncadd %s402, 0
          %s409 = smul.addr %s406, 2
          %s410 = smul.addr %s409, 8
          %s411 = scalar_lea.hbm %s2, %s410
          %s412 = sshll.u32 %s411, 4
          %s413 = int_to_ptr.hbm [resolvable:$true] %s412
          %s414 = sshll.u32 %s405, 4
          %s415 = int_to_ptr.vmem [resolvable:$true] %s414
          %420 = dma.hbm_to_vmem [thread:$0]  %s413, 8192, %s415, %s402, 256, 256, 16
        $region44: #{tpu_custom_call.1} parent=31 // pred_fallthru
          _
      $region32: #{tpu_custom_call.1} parent=5 // pred_fallthru
        _
      %p421 = scmp.le.s32.totalorder 1, %s30
      %p422 = scmp.lt.s32.totalorder %s30, 5
      %p423 = pnand %p421, %p422
      %p424 = pneg %p423
      // Predicated region
      $region45: #{tpu_custom_call.1} parent=5 // pred_check
        _
      $region46: #{tpu_custom_call.1} parent=5 // pred_check_branch
        %426 = sbr.rel (%p423) target = $region48
      $region47: #{tpu_custom_call.1} parent=5 // pred_region
        %s427 = ssub.s32 %s30, 1
        %s428 = sand.u32 %s57, 1
        %s429 = scalar_lea.sflag [#allocation3], %s428
        %s430 = sand.u32 %s57, 1
        %s431 = smul.addr %s430, 256
        %s432 = scalar_lea.vmem [#allocation2], %s431
        // Predicated region
        $region49: #{tpu_custom_call.1} parent=47 // pred_check
          %p433 = pneg %p70
        $region50: #{tpu_custom_call.1} parent=47 // pred_check_branch
          %435 = sbr.rel (%p433) target = $region52
        $region51: #{tpu_custom_call.1} parent=47 // pred_region
          %437 = dma.done %s429, 4096
        $region52: #{tpu_custom_call.1} parent=47 // pred_fallthru
          _
        %s438 = sand.u32 %s35, 1
        %s439 = scalar_lea.sflag [#allocation6], %s438
        %s440 = sand.u32 %s83, 1
        %s441 = smul.addr %s440, 512
        %s442 = scalar_lea.vmem [#allocation5], %s441
        // Predicated region
        $region53: #{tpu_custom_call.1} parent=47 // pred_check
          %p443 = pneg %p96
        $region54: #{tpu_custom_call.1} parent=47 // pred_check_branch
          %445 = sbr.rel (%p443) target = $region56
        $region55: #{tpu_custom_call.1} parent=47 // pred_region
          %447 = dma.done %s439, 8192
        $region56: #{tpu_custom_call.1} parent=47 // pred_fallthru
          _
        %s448 = sand.u32 %s35, 1
        %s449 = scalar_lea.sflag [#allocation6], %s448
        %s450 = sand.u32 %s109, 1
        %s451 = smul.addr %s450, 512
        %s452 = scalar_lea.vmem [#allocation7], %s451
        // Predicated region
        $region57: #{tpu_custom_call.1} parent=47 // pred_check
          %p453 = pneg %p122
        $region58: #{tpu_custom_call.1} parent=47 // pred_check_branch
          %455 = sbr.rel (%p453) target = $region60
        $region59: #{tpu_custom_call.1} parent=47 // pred_region
          %457 = dma.done %s449, 8192
        $region60: #{tpu_custom_call.1} parent=47 // pred_fallthru
          _
        // Predicated region
        $region61: #{tpu_custom_call.1} parent=47 // pred_check
          %p458 = pneg %p164
        $region62: #{tpu_custom_call.1} parent=47 // pred_check_branch
          %460 = sbr.rel (%p458) target = $region64
        $region63: #{tpu_custom_call.1} parent=47 // pred_region
          %462 = dma.done [#allocation9], 32
        $region64: #{tpu_custom_call.1} parent=47 // pred_fallthru
          _
        // Predicated region
        $region65: #{tpu_custom_call.1} parent=47 // pred_check
          %p463 = pneg %p185
        $region66: #{tpu_custom_call.1} parent=47 // pred_check_branch
          %465 = sbr.rel (%p463) target = $region68
        $region67: #{tpu_custom_call.1} parent=47 // pred_region
          %467 = dma.done [#allocation9], 12288
        $region68: #{tpu_custom_call.1} parent=47 // pred_fallthru
          _
        // Predicated region
        $region69: #{tpu_custom_call.1} parent=47 // pred_check
          %p468 = pneg %p206
        $region70: #{tpu_custom_call.1} parent=47 // pred_check_branch
          %470 = sbr.rel (%p468) target = $region72
        $region71: #{tpu_custom_call.1} parent=47 // pred_region
          %472 = dma.done [#allocation12], 96
        $region72: #{tpu_custom_call.1} parent=47 // pred_fallthru
          _
        %s473 = sand.u32 %s57, 1
        %s474 = scalar_lea.sflag [#allocation3], %s473
        %s475 = sand.u32 %s57, 1
        %s476 = smul.addr %s475, 256
        %s477 = scalar_lea.vmem [#allocation2], %s476
        %p478 = pneg %p70
        %p479 = pneg %p67
        %s480 = sand.u32 %s35, 1
        %s481 = scalar_lea.sflag [#allocation6], %s480
        %s482 = sand.u32 %s83, 1
        %s483 = smul.addr %s482, 512
        %s484 = scalar_lea.vmem [#allocation5], %s483
        %p485 = pneg %p96
        %p486 = pneg %p93
        %s487 = sand.u32 %s35, 1
        %s488 = scalar_lea.sflag [#allocation6], %s487
        %s489 = sand.u32 %s109, 1
        %s490 = smul.addr %s489, 512
        %s491 = scalar_lea.vmem [#allocation7], %s490
        %p492 = pneg %p122
        %p493 = pneg %p119
        %p494 = pneg %p143
        %p495 = pneg %p140
        %p496 = pneg %p164
        %p497 = pneg %p161
        %p498 = pneg %p185
        %p499 = pneg %p182
        %p500 = pneg %p206
        %p501 = pneg %p203
        %p502 = pneg %p234
        %p503 = pneg %p231
        %s504 = sand.u32 %s221, 1
        %s505 = scalar_lea.sflag [#allocation4], %s504
        %s506 = sand.u32 %s221, 1
        %s507 = smul.addr %s506, 256
        %s508 = scalar_lea.vmem [#allocation13], %s507
        %p509 = pneg %p262
        %p510 = pneg %p259
        %s511 = sand.u32 %s35, 1
        %s512 = scalar_lea.sflag [#allocation15], %s511
        %s513 = sand.u32 %s249, 1
        %s514 = smul.addr %s513, 256
        %s515 = scalar_lea.vmem [#allocation14], %s514
        %p516 = pneg %p290
        %p517 = pneg %p287
        %s518 = sand.u32 %s35, 1
        %s519 = scalar_lea.sflag [#allocation15], %s518
        %s520 = sand.u32 %s277, 1
        %s521 = smul.addr %s520, 256
        %s522 = scalar_lea.vmem [#allocation16], %s521
        %s523 = smul.u32 32, %s40
        %s524 = smul.u32 32, %s40
        %s525 = smul.u32 32, %s40
        %s526 = smul.u32 32, %s40
        %s527 = smul.u32 32, %s40
        %s528 = smul.u32 32, %s40
        %v529 = vld [vmem:[%s432] sm:$0xff]
        %v530 = vld [vmem:[%s432 + $0x8] sm:$0xff]
        %v531 = vld [vmem:[%s432 + $0x10] sm:$0xff]
        %v532 = vld [vmem:[%s432 + $0x18] sm:$0xff]
        %v533 = vld [vmem:[%s432 + $0x20] sm:$0xff]
        %v534 = vld [vmem:[%s432 + $0x28] sm:$0xff]
        %v535 = vld [vmem:[%s432 + $0x30] sm:$0xff]
        %v536 = vld [vmem:[%s432 + $0x38] sm:$0xff]
        %v537 = vld [vmem:[%s432 + $0x40] sm:$0xff]
        %v538 = vld [vmem:[%s432 + $0x48] sm:$0xff]
        %v539 = vld [vmem:[%s432 + $0x50] sm:$0xff]
        %v540 = vld [vmem:[%s432 + $0x58] sm:$0xff]
        %v541 = vld [vmem:[%s432 + $0x60] sm:$0xff]
        %v542 = vld [vmem:[%s432 + $0x68] sm:$0xff]
        %v543 = vld [vmem:[%s432 + $0x70] sm:$0xff]
        %v544 = vld [vmem:[%s432 + $0x78] sm:$0xff]
        %v545 = vld [vmem:[%s432 + $0x80] sm:$0xff]
        %v546 = vld [vmem:[%s432 + $0x88] sm:$0xff]
        %v547 = vld [vmem:[%s432 + $0x90] sm:$0xff]
        %v548 = vld [vmem:[%s432 + $0x98] sm:$0xff]
        %v549 = vld [vmem:[%s432 + $0xa0] sm:$0xff]
        %v550 = vld [vmem:[%s432 + $0xa8] sm:$0xff]
        %v551 = vld [vmem:[%s432 + $0xb0] sm:$0xff]
        %v552 = vld [vmem:[%s432 + $0xb8] sm:$0xff]
        %v553 = vld [vmem:[%s432 + $0xc0] sm:$0xff]
        %v554 = vld [vmem:[%s432 + $0xc8] sm:$0xff]
        %v555 = vld [vmem:[%s432 + $0xd0] sm:$0xff]
        %v556 = vld [vmem:[%s432 + $0xd8] sm:$0xff]
        %v557 = vld [vmem:[%s432 + $0xe0] sm:$0xff]
        %v558 = vld [vmem:[%s432 + $0xe8] sm:$0xff]
        %v559 = vld [vmem:[%s432 + $0xf0] sm:$0xff]
        %v560 = vld [vmem:[%s432 + $0xf8] sm:$0xff]
        %v561 = vunpack.c.l.bf16 %v529
        %v562 = vunpack.c.h.bf16 %v529
        %v563 = vunpack.c.l.bf16 %v530
        %v564 = vunpack.c.h.bf16 %v530
        %v565 = vunpack.c.l.bf16 %v531
        %v566 = vunpack.c.h.bf16 %v531
        %v567 = vunpack.c.l.bf16 %v532
        %v568 = vunpack.c.h.bf16 %v532
        %v569 = vunpack.c.l.bf16 %v533
        %v570 = vunpack.c.h.bf16 %v533
        %v571 = vunpack.c.l.bf16 %v534
        %v572 = vunpack.c.h.bf16 %v534
        %v573 = vunpack.c.l.bf16 %v535
        %v574 = vunpack.c.h.bf16 %v535
        %v575 = vunpack.c.l.bf16 %v536
        %v576 = vunpack.c.h.bf16 %v536
        %v577 = vunpack.c.l.bf16 %v537
        %v578 = vunpack.c.h.bf16 %v537
        %v579 = vunpack.c.l.bf16 %v538
        %v580 = vunpack.c.h.bf16 %v538
        %v581 = vunpack.c.l.bf16 %v539
        %v582 = vunpack.c.h.bf16 %v539
        %v583 = vunpack.c.l.bf16 %v540
        %v584 = vunpack.c.h.bf16 %v540
        %v585 = vunpack.c.l.bf16 %v541
        %v586 = vunpack.c.h.bf16 %v541
        %v587 = vunpack.c.l.bf16 %v542
        %v588 = vunpack.c.h.bf16 %v542
        %v589 = vunpack.c.l.bf16 %v543
        %v590 = vunpack.c.h.bf16 %v543
        %v591 = vunpack.c.l.bf16 %v544
        %v592 = vunpack.c.h.bf16 %v544
        %v593 = vunpack.c.l.bf16 %v545
        %v594 = vunpack.c.h.bf16 %v545
        %v595 = vunpack.c.l.bf16 %v546
        %v596 = vunpack.c.h.bf16 %v546
        %v597 = vunpack.c.l.bf16 %v547
        %v598 = vunpack.c.h.bf16 %v547
        %v599 = vunpack.c.l.bf16 %v548
        %v600 = vunpack.c.h.bf16 %v548
        %v601 = vunpack.c.l.bf16 %v549
        %v602 = vunpack.c.h.bf16 %v549
        %v603 = vunpack.c.l.bf16 %v550
        %v604 = vunpack.c.h.bf16 %v550
        %v605 = vunpack.c.l.bf16 %v551
        %v606 = vunpack.c.h.bf16 %v551
        %v607 = vunpack.c.l.bf16 %v552
        %v608 = vunpack.c.h.bf16 %v552
        %v609 = vunpack.c.l.bf16 %v553
        %v610 = vunpack.c.h.bf16 %v553
        %v611 = vunpack.c.l.bf16 %v554
        %v612 = vunpack.c.h.bf16 %v554
        %v613 = vunpack.c.l.bf16 %v555
        %v614 = vunpack.c.h.bf16 %v555
        %v615 = vunpack.c.l.bf16 %v556
        %v616 = vunpack.c.h.bf16 %v556
        %v617 = vunpack.c.l.bf16 %v557
        %v618 = vunpack.c.h.bf16 %v557
        %v619 = vunpack.c.l.bf16 %v558
        %v620 = vunpack.c.h.bf16 %v558
        %v621 = vunpack.c.l.bf16 %v559
        %v622 = vunpack.c.h.bf16 %v559
        %v623 = vunpack.c.l.bf16 %v560
        %v624 = vunpack.c.h.bf16 %v560
        %v625 = vld [vmem:[%s3] sm:$0x3]
        %v626 = vld [vmem:[#allocation8] sm:$0x3]
        %v627 = vadd.f32 %v561, %v562
        %628 = vadd.xlane.f32.xlu0 %v627
        %v629 = vpop.xlane.xlu0 %628
        %v630 = vadd.f32 %v563, %v564
        %631 = vadd.xlane.f32.xlu0 %v630
        %v632 = vpop.xlane.xlu0 %631
        %v633 = vadd.f32 %v565, %v566
        %634 = vadd.xlane.f32.xlu0 %v633
        %v635 = vpop.xlane.xlu0 %634
        %v636 = vadd.f32 %v567, %v568
        %637 = vadd.xlane.f32.xlu0 %v636
        %v638 = vpop.xlane.xlu0 %637
        %v639 = vadd.f32 %v569, %v570
        %640 = vadd.xlane.f32.xlu0 %v639
        %v641 = vpop.xlane.xlu0 %640
        %v642 = vadd.f32 %v571, %v572
        %643 = vadd.xlane.f32.xlu0 %v642
        %v644 = vpop.xlane.xlu0 %643
        %v645 = vadd.f32 %v573, %v574
        %646 = vadd.xlane.f32.xlu0 %v645
        %v647 = vpop.xlane.xlu0 %646
        %v648 = vadd.f32 %v575, %v576
        %649 = vadd.xlane.f32.xlu0 %v648
        %v650 = vpop.xlane.xlu0 %649
        %v651 = vadd.f32 %v577, %v578
        %652 = vadd.xlane.f32.xlu0 %v651
        %v653 = vpop.xlane.xlu0 %652
        %v654 = vadd.f32 %v579, %v580
        %655 = vadd.xlane.f32.xlu0 %v654
        %v656 = vpop.xlane.xlu0 %655
        %v657 = vadd.f32 %v581, %v582
        %658 = vadd.xlane.f32.xlu0 %v657
        %v659 = vpop.xlane.xlu0 %658
        %v660 = vadd.f32 %v583, %v584
        %661 = vadd.xlane.f32.xlu0 %v660
        %v662 = vpop.xlane.xlu0 %661
        %v663 = vadd.f32 %v585, %v586
        %664 = vadd.xlane.f32.xlu0 %v663
        %v665 = vpop.xlane.xlu0 %664
        %v666 = vadd.f32 %v587, %v588
        %667 = vadd.xlane.f32.xlu0 %v666
        %v668 = vpop.xlane.xlu0 %667
        %v669 = vadd.f32 %v589, %v590
        %670 = vadd.xlane.f32.xlu0 %v669
        %v671 = vpop.xlane.xlu0 %670
        %v672 = vadd.f32 %v591, %v592
        %673 = vadd.xlane.f32.xlu0 %v672
        %v674 = vpop.xlane.xlu0 %673
        %v675 = vadd.f32 %v593, %v594
        %676 = vadd.xlane.f32.xlu0 %v675
        %v677 = vpop.xlane.xlu0 %676
        %v678 = vadd.f32 %v595, %v596
        %679 = vadd.xlane.f32.xlu0 %v678
        %v680 = vpop.xlane.xlu0 %679
        %v681 = vadd.f32 %v597, %v598
        %682 = vadd.xlane.f32.xlu0 %v681
        %v683 = vpop.xlane.xlu0 %682
        %v684 = vadd.f32 %v599, %v600
        %685 = vadd.xlane.f32.xlu0 %v684
        %v686 = vpop.xlane.xlu0 %685
        %v687 = vadd.f32 %v601, %v602
        %688 = vadd.xlane.f32.xlu0 %v687
        %v689 = vpop.xlane.xlu0 %688
        %v690 = vadd.f32 %v603, %v604
        %691 = vadd.xlane.f32.xlu0 %v690
        %v692 = vpop.xlane.xlu0 %691
        %v693 = vadd.f32 %v605, %v606
        %694 = vadd.xlane.f32.xlu0 %v693
        %v695 = vpop.xlane.xlu0 %694
        %v696 = vadd.f32 %v607, %v608
        %697 = vadd.xlane.f32.xlu0 %v696
        %v698 = vpop.xlane.xlu0 %697
        %v699 = vadd.f32 %v609, %v610
        %700 = vadd.xlane.f32.xlu0 %v699
        %v701 = vpop.xlane.xlu0 %700
        %v702 = vadd.f32 %v611, %v612
        %703 = vadd.xlane.f32.xlu0 %v702
        %v704 = vpop.xlane.xlu0 %703
        %v705 = vadd.f32 %v613, %v614
        %706 = vadd.xlane.f32.xlu0 %v705
        %v707 = vpop.xlane.xlu0 %706
        %v708 = vadd.f32 %v615, %v616
        %709 = vadd.xlane.f32.xlu0 %v708
        %v710 = vpop.xlane.xlu0 %709
        %v711 = vadd.f32 %v617, %v618
        %712 = vadd.xlane.f32.xlu0 %v711
        %v713 = vpop.xlane.xlu0 %712
        %v714 = vadd.f32 %v619, %v620
        %715 = vadd.xlane.f32.xlu0 %v714
        %v716 = vpop.xlane.xlu0 %715
        %v717 = vadd.f32 %v621, %v622
        %718 = vadd.xlane.f32.xlu0 %v717
        %v719 = vpop.xlane.xlu0 %718
        %v720 = vadd.f32 %v623, %v624
        %721 = vadd.xlane.f32.xlu0 %v720
        %v722 = vpop.xlane.xlu0 %721
        %v723 = vrcp.pop 256.0
        %v724 = vmul.f32 256.0, %v723
        %v725 = vsub.f32 1.0, %v724
        %v726 = vmul.f32 %v723, %v725
        %v727 = vadd.f32 %v723, %v726
        %vm728 = vweird.f32 %v723
        %v729 = vsel %vm728, %v723, %v727
        %v730 = vmul.f32 %v629, %v729
        %v731 = vmul.f32 %v632, %v729
        %v732 = vmul.f32 %v635, %v729
        %v733 = vmul.f32 %v638, %v729
        %v734 = vmul.f32 %v641, %v729
        %v735 = vmul.f32 %v644, %v729
        %v736 = vmul.f32 %v647, %v729
        %v737 = vmul.f32 %v650, %v729
        %v738 = vmul.f32 %v653, %v729
        %v739 = vmul.f32 %v656, %v729
        %v740 = vmul.f32 %v659, %v729
        %v741 = vmul.f32 %v662, %v729
        %v742 = vmul.f32 %v665, %v729
        %v743 = vmul.f32 %v668, %v729
        %v744 = vmul.f32 %v671, %v729
        %v745 = vmul.f32 %v674, %v729
        %v746 = vmul.f32 %v677, %v729
        %v747 = vmul.f32 %v680, %v729
        %v748 = vmul.f32 %v683, %v729
        %v749 = vmul.f32 %v686, %v729
        %v750 = vmul.f32 %v689, %v729
        %v751 = vmul.f32 %v692, %v729
        %v752 = vmul.f32 %v695, %v729
        %v753 = vmul.f32 %v698, %v729
        %v754 = vmul.f32 %v701, %v729
        %v755 = vmul.f32 %v704, %v729
        %v756 = vmul.f32 %v707, %v729
        %v757 = vmul.f32 %v710, %v729
        %v758 = vmul.f32 %v713, %v729
        %v759 = vmul.f32 %v716, %v729
        %v760 = vmul.f32 %v719, %v729
        %v761 = vmul.f32 %v722, %v729
        %v762 = vsub.f32 %v561, %v730
        %v763 = vsub.f32 %v562, %v730
        %v764 = vsub.f32 %v563, %v731
        %v765 = vsub.f32 %v564, %v731
        %v766 = vsub.f32 %v565, %v732
        %v767 = vsub.f32 %v566, %v732
        %v768 = vsub.f32 %v567, %v733
        %v769 = vsub.f32 %v568, %v733
        %v770 = vsub.f32 %v569, %v734
        %v771 = vsub.f32 %v570, %v734
        %v772 = vsub.f32 %v571, %v735
        %v773 = vsub.f32 %v572, %v735
        %v774 = vsub.f32 %v573, %v736
        %v775 = vsub.f32 %v574, %v736
        %v776 = vsub.f32 %v575, %v737
        %v777 = vsub.f32 %v576, %v737
        %v778 = vsub.f32 %v577, %v738
        %v779 = vsub.f32 %v578, %v738
        %v780 = vsub.f32 %v579, %v739
        %v781 = vsub.f32 %v580, %v739
        %v782 = vsub.f32 %v581, %v740
        %v783 = vsub.f32 %v582, %v740
        %v784 = vsub.f32 %v583, %v741
        %v785 = vsub.f32 %v584, %v741
        %v786 = vsub.f32 %v585, %v742
        %v787 = vsub.f32 %v586, %v742
        %v788 = vsub.f32 %v587, %v743
        %v789 = vsub.f32 %v588, %v743
        %v790 = vsub.f32 %v589, %v744
        %v791 = vsub.f32 %v590, %v744
        %v792 = vsub.f32 %v591, %v745
        %v793 = vsub.f32 %v592, %v745
        %v794 = vsub.f32 %v593, %v746
        %v795 = vsub.f32 %v594, %v746
        %v796 = vsub.f32 %v595, %v747
        %v797 = vsub.f32 %v596, %v747
        %v798 = vsub.f32 %v597, %v748
        %v799 = vsub.f32 %v598, %v748
        %v800 = vsub.f32 %v599, %v749
        %v801 = vsub.f32 %v600, %v749
        %v802 = vsub.f32 %v601, %v750
        %v803 = vsub.f32 %v602, %v750
        %v804 = vsub.f32 %v603, %v751
        %v805 = vsub.f32 %v604, %v751
        %v806 = vsub.f32 %v605, %v752
        %v807 = vsub.f32 %v606, %v752
        %v808 = vsub.f32 %v607, %v753
        %v809 = vsub.f32 %v608, %v753
        %v810 = vsub.f32 %v609, %v754
        %v811 = vsub.f32 %v610, %v754
        %v812 = vsub.f32 %v611, %v755
        %v813 = vsub.f32 %v612, %v755
        %v814 = vsub.f32 %v613, %v756
        %v815 = vsub.f32 %v614, %v756
        %v816 = vsub.f32 %v615, %v757
        %v817 = vsub.f32 %v616, %v757
        %v818 = vsub.f32 %v617, %v758
        %v819 = vsub.f32 %v618, %v758
        %v820 = vsub.f32 %v619, %v759
        %v821 = vsub.f32 %v620, %v759
        %v822 = vsub.f32 %v621, %v760
        %v823 = vsub.f32 %v622, %v760
        %v824 = vsub.f32 %v623, %v761
        %v825 = vsub.f32 %v624, %v761
        %v826 = vmul.f32 %v762, %v762
        %v827 = vmul.f32 %v763, %v763
        %v828 = vmul.f32 %v764, %v764
        %v829 = vmul.f32 %v765, %v765
        %v830 = vmul.f32 %v766, %v766
        %v831 = vmul.f32 %v767, %v767
        %v832 = vmul.f32 %v768, %v768
        %v833 = vmul.f32 %v769, %v769
        %v834 = vmul.f32 %v770, %v770
        %v835 = vmul.f32 %v771, %v771
        %v836 = vmul.f32 %v772, %v772
        %v837 = vmul.f32 %v773, %v773
        %v838 = vmul.f32 %v774, %v774
        %v839 = vmul.f32 %v775, %v775
        %v840 = vmul.f32 %v776, %v776
        %v841 = vmul.f32 %v777, %v777
        %v842 = vmul.f32 %v778, %v778
        %v843 = vmul.f32 %v779, %v779
        %v844 = vmul.f32 %v780, %v780
        %v845 = vmul.f32 %v781, %v781
        %v846 = vmul.f32 %v782, %v782
        %v847 = vmul.f32 %v783, %v783
        %v848 = vmul.f32 %v784, %v784
        %v849 = vmul.f32 %v785, %v785
        %v850 = vmul.f32 %v786, %v786
        %v851 = vmul.f32 %v787, %v787
        %v852 = vmul.f32 %v788, %v788
        %v853 = vmul.f32 %v789, %v789
        %v854 = vmul.f32 %v790, %v790
        %v855 = vmul.f32 %v791, %v791
        %v856 = vmul.f32 %v792, %v792
        %v857 = vmul.f32 %v793, %v793
        %v858 = vmul.f32 %v794, %v794
        %v859 = vmul.f32 %v795, %v795
        %v860 = vmul.f32 %v796, %v796
        %v861 = vmul.f32 %v797, %v797
        %v862 = vmul.f32 %v798, %v798
        %v863 = vmul.f32 %v799, %v799
        %v864 = vmul.f32 %v800, %v800
        %v865 = vmul.f32 %v801, %v801
        %v866 = vmul.f32 %v802, %v802
        %v867 = vmul.f32 %v803, %v803
        %v868 = vmul.f32 %v804, %v804
        %v869 = vmul.f32 %v805, %v805
        %v870 = vmul.f32 %v806, %v806
        %v871 = vmul.f32 %v807, %v807
        %v872 = vmul.f32 %v808, %v808
        %v873 = vmul.f32 %v809, %v809
        %v874 = vmul.f32 %v810, %v810
        %v875 = vmul.f32 %v811, %v811
        %v876 = vmul.f32 %v812, %v812
        %v877 = vmul.f32 %v813, %v813
        %v878 = vmul.f32 %v814, %v814
        %v879 = vmul.f32 %v815, %v815
        %v880 = vmul.f32 %v816, %v816
        %v881 = vmul.f32 %v817, %v817
        %v882 = vmul.f32 %v818, %v818
        %v883 = vmul.f32 %v819, %v819
        %v884 = vmul.f32 %v820, %v820
        %v885 = vmul.f32 %v821, %v821
        %v886 = vmul.f32 %v822, %v822
        %v887 = vmul.f32 %v823, %v823
        %v888 = vmul.f32 %v824, %v824
        %v889 = vmul.f32 %v825, %v825
        %v890 = vadd.f32 %v826, %v827
        %891 = vadd.xlane.f32.xlu0 %v890
        %v892 = vpop.xlane.xlu0 %891
        %v893 = vadd.f32 %v828, %v829
        %894 = vadd.xlane.f32.xlu0 %v893
        %v895 = vpop.xlane.xlu0 %894
        %v896 = vadd.f32 %v830, %v831
        %897 = vadd.xlane.f32.xlu0 %v896
        %v898 = vpop.xlane.xlu0 %897
        %v899 = vadd.f32 %v832, %v833
        %900 = vadd.xlane.f32.xlu0 %v899
        %v901 = vpop.xlane.xlu0 %900
        %v902 = vadd.f32 %v834, %v835
        %903 = vadd.xlane.f32.xlu0 %v902
        %v904 = vpop.xlane.xlu0 %903
        %v905 = vadd.f32 %v836, %v837
        %906 = vadd.xlane.f32.xlu0 %v905
        %v907 = vpop.xlane.xlu0 %906
        %v908 = vadd.f32 %v838, %v839
        %909 = vadd.xlane.f32.xlu0 %v908
        %v910 = vpop.xlane.xlu0 %909
        %v911 = vadd.f32 %v840, %v841
        %912 = vadd.xlane.f32.xlu0 %v911
        %v913 = vpop.xlane.xlu0 %912
        %v914 = vadd.f32 %v842, %v843
        %915 = vadd.xlane.f32.xlu0 %v914
        %v916 = vpop.xlane.xlu0 %915
        %v917 = vadd.f32 %v844, %v845
        %918 = vadd.xlane.f32.xlu0 %v917
        %v919 = vpop.xlane.xlu0 %918
        %v920 = vadd.f32 %v846, %v847
        %921 = vadd.xlane.f32.xlu0 %v920
        %v922 = vpop.xlane.xlu0 %921
        %v923 = vadd.f32 %v848, %v849
        %924 = vadd.xlane.f32.xlu0 %v923
        %v925 = vpop.xlane.xlu0 %924
        %v926 = vadd.f32 %v850, %v851
        %927 = vadd.xlane.f32.xlu0 %v926
        %v928 = vpop.xlane.xlu0 %927
        %v929 = vadd.f32 %v852, %v853
        %930 = vadd.xlane.f32.xlu0 %v929
        %v931 = vpop.xlane.xlu0 %930
        %v932 = vadd.f32 %v854, %v855
        %933 = vadd.xlane.f32.xlu0 %v932
        %v934 = vpop.xlane.xlu0 %933
        %v935 = vadd.f32 %v856, %v857
        %936 = vadd.xlane.f32.xlu0 %v935
        %v937 = vpop.xlane.xlu0 %936
        %v938 = vadd.f32 %v858, %v859
        %939 = vadd.xlane.f32.xlu0 %v938
        %v940 = vpop.xlane.xlu0 %939
        %v941 = vadd.f32 %v860, %v861
        %942 = vadd.xlane.f32.xlu0 %v941
        %v943 = vpop.xlane.xlu0 %942
        %v944 = vadd.f32 %v862, %v863
        %945 = vadd.xlane.f32.xlu0 %v944
        %v946 = vpop.xlane.xlu0 %945
        %v947 = vadd.f32 %v864, %v865
        %948 = vadd.xlane.f32.xlu0 %v947
        %v949 = vpop.xlane.xlu0 %948
        %v950 = vadd.f32 %v866, %v867
        %951 = vadd.xlane.f32.xlu0 %v950
        %v952 = vpop.xlane.xlu0 %951
        %v953 = vadd.f32 %v868, %v869
        %954 = vadd.xlane.f32.xlu0 %v953
        %v955 = vpop.xlane.xlu0 %954
        %v956 = vadd.f32 %v870, %v871
        %957 = vadd.xlane.f32.xlu0 %v956
        %v958 = vpop.xlane.xlu0 %957
        %v959 = vadd.f32 %v872, %v873
        %960 = vadd.xlane.f32.xlu0 %v959
        %v961 = vpop.xlane.xlu0 %960
        %v962 = vadd.f32 %v874, %v875
        %963 = vadd.xlane.f32.xlu0 %v962
        %v964 = vpop.xlane.xlu0 %963
        %v965 = vadd.f32 %v876, %v877
        %966 = vadd.xlane.f32.xlu0 %v965
        %v967 = vpop.xlane.xlu0 %966
        %v968 = vadd.f32 %v878, %v879
        %969 = vadd.xlane.f32.xlu0 %v968
        %v970 = vpop.xlane.xlu0 %969
        %v971 = vadd.f32 %v880, %v881
        %972 = vadd.xlane.f32.xlu0 %v971
        %v973 = vpop.xlane.xlu0 %972
        %v974 = vadd.f32 %v882, %v883
        %975 = vadd.xlane.f32.xlu0 %v974
        %v976 = vpop.xlane.xlu0 %975
        %v977 = vadd.f32 %v884, %v885
        %978 = vadd.xlane.f32.xlu0 %v977
        %v979 = vpop.xlane.xlu0 %978
        %v980 = vadd.f32 %v886, %v887
        %981 = vadd.xlane.f32.xlu0 %v980
        %v982 = vpop.xlane.xlu0 %981
        %v983 = vadd.f32 %v888, %v889
        %984 = vadd.xlane.f32.xlu0 %v983
        %v985 = vpop.xlane.xlu0 %984
        %v986 = vmul.f32 %v892, %v729
        %v987 = vmul.f32 %v895, %v729
        %v988 = vmul.f32 %v898, %v729
        %v989 = vmul.f32 %v901, %v729
        %v990 = vmul.f32 %v904, %v729
        %v991 = vmul.f32 %v907, %v729
        %v992 = vmul.f32 %v910, %v729
        %v993 = vmul.f32 %v913, %v729
        %v994 = vmul.f32 %v916, %v729
        %v995 = vmul.f32 %v919, %v729
        %v996 = vmul.f32 %v922, %v729
        %v997 = vmul.f32 %v925, %v729
        %v998 = vmul.f32 %v928, %v729
        %v999 = vmul.f32 %v931, %v729
        %v1000 = vmul.f32 %v934, %v729
        %v1001 = vmul.f32 %v937, %v729
        %v1002 = vmul.f32 %v940, %v729
        %v1003 = vmul.f32 %v943, %v729
        %v1004 = vmul.f32 %v946, %v729
        %v1005 = vmul.f32 %v949, %v729
        %v1006 = vmul.f32 %v952, %v729
        %v1007 = vmul.f32 %v955, %v729
        %v1008 = vmul.f32 %v958, %v729
        %v1009 = vmul.f32 %v961, %v729
        %v1010 = vmul.f32 %v964, %v729
        %v1011 = vmul.f32 %v967, %v729
        %v1012 = vmul.f32 %v970, %v729
        %v1013 = vmul.f32 %v973, %v729
        %v1014 = vmul.f32 %v976, %v729
        %v1015 = vmul.f32 %v979, %v729
        %v1016 = vmul.f32 %v982, %v729
        %v1017 = vmul.f32 %v985, %v729
        %v1018 = vadd.f32 %v986, 1e-05
        %v1019 = vadd.f32 %v987, 1e-05
        %v1020 = vadd.f32 %v988, 1e-05
        %v1021 = vadd.f32 %v989, 1e-05
        %v1022 = vadd.f32 %v990, 1e-05
        %v1023 = vadd.f32 %v991, 1e-05
        %v1024 = vadd.f32 %v992, 1e-05
        %v1025 = vadd.f32 %v993, 1e-05
        %v1026 = vadd.f32 %v994, 1e-05
        %v1027 = vadd.f32 %v995, 1e-05
        %v1028 = vadd.f32 %v996, 1e-05
        %v1029 = vadd.f32 %v997, 1e-05
        %v1030 = vadd.f32 %v998, 1e-05
        %v1031 = vadd.f32 %v999, 1e-05
        %v1032 = vadd.f32 %v1000, 1e-05
        %v1033 = vadd.f32 %v1001, 1e-05
        %v1034 = vadd.f32 %v1002, 1e-05
        %v1035 = vadd.f32 %v1003, 1e-05
        %v1036 = vadd.f32 %v1004, 1e-05
        %v1037 = vadd.f32 %v1005, 1e-05
        %v1038 = vadd.f32 %v1006, 1e-05
        %v1039 = vadd.f32 %v1007, 1e-05
        %v1040 = vadd.f32 %v1008, 1e-05
        %v1041 = vadd.f32 %v1009, 1e-05
        %v1042 = vadd.f32 %v1010, 1e-05
        %v1043 = vadd.f32 %v1011, 1e-05
        %v1044 = vadd.f32 %v1012, 1e-05
        %v1045 = vadd.f32 %v1013, 1e-05
        %v1046 = vadd.f32 %v1014, 1e-05
        %v1047 = vadd.f32 %v1015, 1e-05
        %v1048 = vadd.f32 %v1016, 1e-05
        %v1049 = vadd.f32 %v1017, 1e-05
        %v1050 = vrsqrt.pop %v1018
        %v1051 = vmul.f32 %v1050, %v1018
        %v1052 = vmul.f32 %v1051, %v1050
        %v1053 = vmul.f32 0.5, %v1052
        %v1054 = vsub.f32 1.5, %v1053
        %v1055 = vmul.f32 %v1050, %v1054
        %vm1056 = vweird.f32 %v1018
        %vm1057 = vweird.f32 %v1050
        %vm1058 = vmor %vm1056, %vm1057
        %v1059 = vsel %vm1058, %v1050, %v1055
        %v1060 = vrsqrt.pop %v1019
        %v1061 = vmul.f32 %v1060, %v1019
        %v1062 = vmul.f32 %v1061, %v1060
        %v1063 = vmul.f32 0.5, %v1062
        %v1064 = vsub.f32 1.5, %v1063
        %v1065 = vmul.f32 %v1060, %v1064
        %vm1066 = vweird.f32 %v1019
        %vm1067 = vweird.f32 %v1060
        %vm1068 = vmor %vm1066, %vm1067
        %v1069 = vsel %vm1068, %v1060, %v1065
        %v1070 = vrsqrt.pop %v1020
        %v1071 = vmul.f32 %v1070, %v1020
        %v1072 = vmul.f32 %v1071, %v1070
        %v1073 = vmul.f32 0.5, %v1072
        %v1074 = vsub.f32 1.5, %v1073
        %v1075 = vmul.f32 %v1070, %v1074
        %vm1076 = vweird.f32 %v1020
        %vm1077 = vweird.f32 %v1070
        %vm1078 = vmor %vm1076, %vm1077
        %v1079 = vsel %vm1078, %v1070, %v1075
        %v1080 = vrsqrt.pop %v1021
        %v1081 = vmul.f32 %v1080, %v1021
        %v1082 = vmul.f32 %v1081, %v1080
        %v1083 = vmul.f32 0.5, %v1082
        %v1084 = vsub.f32 1.5, %v1083
        %v1085 = vmul.f32 %v1080, %v1084
        %vm1086 = vweird.f32 %v1021
        %vm1087 = vweird.f32 %v1080
        %vm1088 = vmor %vm1086, %vm1087
        %v1089 = vsel %vm1088, %v1080, %v1085
        %v1090 = vrsqrt.pop %v1022
        %v1091 = vmul.f32 %v1090, %v1022
        %v1092 = vmul.f32 %v1091, %v1090
        %v1093 = vmul.f32 0.5, %v1092
        %v1094 = vsub.f32 1.5, %v1093
        %v1095 = vmul.f32 %v1090, %v1094
        %vm1096 = vweird.f32 %v1022
        %vm1097 = vweird.f32 %v1090
        %vm1098 = vmor %vm1096, %vm1097
        %v1099 = vsel %vm1098, %v1090, %v1095
        %v1100 = vrsqrt.pop %v1023
        %v1101 = vmul.f32 %v1100, %v1023
        %v1102 = vmul.f32 %v1101, %v1100
        %v1103 = vmul.f32 0.5, %v1102
        %v1104 = vsub.f32 1.5, %v1103
        %v1105 = vmul.f32 %v1100, %v1104
        %vm1106 = vweird.f32 %v1023
        %vm1107 = vweird.f32 %v1100
        %vm1108 = vmor %vm1106, %vm1107
        %v1109 = vsel %vm1108, %v1100, %v1105
        %v1110 = vrsqrt.pop %v1024
        %v1111 = vmul.f32 %v1110, %v1024
        %v1112 = vmul.f32 %v1111, %v1110
        %v1113 = vmul.f32 0.5, %v1112
        %v1114 = vsub.f32 1.5, %v1113
        %v1115 = vmul.f32 %v1110, %v1114
        %vm1116 = vweird.f32 %v1024
        %vm1117 = vweird.f32 %v1110
        %vm1118 = vmor %vm1116, %vm1117
        %v1119 = vsel %vm1118, %v1110, %v1115
        %v1120 = vrsqrt.pop %v1025
        %v1121 = vmul.f32 %v1120, %v1025
        %v1122 = vmul.f32 %v1121, %v1120
        %v1123 = vmul.f32 0.5, %v1122
        %v1124 = vsub.f32 1.5, %v1123
        %v1125 = vmul.f32 %v1120, %v1124
        %vm1126 = vweird.f32 %v1025
        %vm1127 = vweird.f32 %v1120
        %vm1128 = vmor %vm1126, %vm1127
        %v1129 = vsel %vm1128, %v1120, %v1125
        %v1130 = vrsqrt.pop %v1026
        %v1131 = vmul.f32 %v1130, %v1026
        %v1132 = vmul.f32 %v1131, %v1130
        %v1133 = vmul.f32 0.5, %v1132
        %v1134 = vsub.f32 1.5, %v1133
        %v1135 = vmul.f32 %v1130, %v1134
        %vm1136 = vweird.f32 %v1026
        %vm1137 = vweird.f32 %v1130
        %vm1138 = vmor %vm1136, %vm1137
        %v1139 = vsel %vm1138, %v1130, %v1135
        %v1140 = vrsqrt.pop %v1027
        %v1141 = vmul.f32 %v1140, %v1027
        %v1142 = vmul.f32 %v1141, %v1140
        %v1143 = vmul.f32 0.5, %v1142
        %v1144 = vsub.f32 1.5, %v1143
        %v1145 = vmul.f32 %v1140, %v1144
        %vm1146 = vweird.f32 %v1027
        %vm1147 = vweird.f32 %v1140
        %vm1148 = vmor %vm1146, %vm1147
        %v1149 = vsel %vm1148, %v1140, %v1145
        %v1150 = vrsqrt.pop %v1028
        %v1151 = vmul.f32 %v1150, %v1028
        %v1152 = vmul.f32 %v1151, %v1150
        %v1153 = vmul.f32 0.5, %v1152
        %v1154 = vsub.f32 1.5, %v1153
        %v1155 = vmul.f32 %v1150, %v1154
        %vm1156 = vweird.f32 %v1028
        %vm1157 = vweird.f32 %v1150
        %vm1158 = vmor %vm1156, %vm1157
        %v1159 = vsel %vm1158, %v1150, %v1155
        %v1160 = vrsqrt.pop %v1029
        %v1161 = vmul.f32 %v1160, %v1029
        %v1162 = vmul.f32 %v1161, %v1160
        %v1163 = vmul.f32 0.5, %v1162
        %v1164 = vsub.f32 1.5, %v1163
        %v1165 = vmul.f32 %v1160, %v1164
        %vm1166 = vweird.f32 %v1029
        %vm1167 = vweird.f32 %v1160
        %vm1168 = vmor %vm1166, %vm1167
        %v1169 = vsel %vm1168, %v1160, %v1165
        %v1170 = vrsqrt.pop %v1030
        %v1171 = vmul.f32 %v1170, %v1030
        %v1172 = vmul.f32 %v1171, %v1170
        %v1173 = vmul.f32 0.5, %v1172
        %v1174 = vsub.f32 1.5, %v1173
        %v1175 = vmul.f32 %v1170, %v1174
        %vm1176 = vweird.f32 %v1030
        %vm1177 = vweird.f32 %v1170
        %vm1178 = vmor %vm1176, %vm1177
        %v1179 = vsel %vm1178, %v1170, %v1175
        %v1180 = vrsqrt.pop %v1031
        %v1181 = vmul.f32 %v1180, %v1031
        %v1182 = vmul.f32 %v1181, %v1180
        %v1183 = vmul.f32 0.5, %v1182
        %v1184 = vsub.f32 1.5, %v1183
        %v1185 = vmul.f32 %v1180, %v1184
        %vm1186 = vweird.f32 %v1031
        %vm1187 = vweird.f32 %v1180
        %vm1188 = vmor %vm1186, %vm1187
        %v1189 = vsel %vm1188, %v1180, %v1185
        %v1190 = vrsqrt.pop %v1032
        %v1191 = vmul.f32 %v1190, %v1032
        %v1192 = vmul.f32 %v1191, %v1190
        %v1193 = vmul.f32 0.5, %v1192
        %v1194 = vsub.f32 1.5, %v1193
        %v1195 = vmul.f32 %v1190, %v1194
        %vm1196 = vweird.f32 %v1032
        %vm1197 = vweird.f32 %v1190
        %vm1198 = vmor %vm1196, %vm1197
        %v1199 = vsel %vm1198, %v1190, %v1195
        %v1200 = vrsqrt.pop %v1033
        %v1201 = vmul.f32 %v1200, %v1033
        %v1202 = vmul.f32 %v1201, %v1200
        %v1203 = vmul.f32 0.5, %v1202
        %v1204 = vsub.f32 1.5, %v1203
        %v1205 = vmul.f32 %v1200, %v1204
        %vm1206 = vweird.f32 %v1033
        %vm1207 = vweird.f32 %v1200
        %vm1208 = vmor %vm1206, %vm1207
        %v1209 = vsel %vm1208, %v1200, %v1205
        %v1210 = vrsqrt.pop %v1034
        %v1211 = vmul.f32 %v1210, %v1034
        %v1212 = vmul.f32 %v1211, %v1210
        %v1213 = vmul.f32 0.5, %v1212
        %v1214 = vsub.f32 1.5, %v1213
        %v1215 = vmul.f32 %v1210, %v1214
        %vm1216 = vweird.f32 %v1034
        %vm1217 = vweird.f32 %v1210
        %vm1218 = vmor %vm1216, %vm1217
        %v1219 = vsel %vm1218, %v1210, %v1215
        %v1220 = vrsqrt.pop %v1035
        %v1221 = vmul.f32 %v1220, %v1035
        %v1222 = vmul.f32 %v1221, %v1220
        %v1223 = vmul.f32 0.5, %v1222
        %v1224 = vsub.f32 1.5, %v1223
        %v1225 = vmul.f32 %v1220, %v1224
        %vm1226 = vweird.f32 %v1035
        %vm1227 = vweird.f32 %v1220
        %vm1228 = vmor %vm1226, %vm1227
        %v1229 = vsel %vm1228, %v1220, %v1225
        %v1230 = vrsqrt.pop %v1036
        %v1231 = vmul.f32 %v1230, %v1036
        %v1232 = vmul.f32 %v1231, %v1230
        %v1233 = vmul.f32 0.5, %v1232
        %v1234 = vsub.f32 1.5, %v1233
        %v1235 = vmul.f32 %v1230, %v1234
        %vm1236 = vweird.f32 %v1036
        %vm1237 = vweird.f32 %v1230
        %vm1238 = vmor %vm1236, %vm1237
        %v1239 = vsel %vm1238, %v1230, %v1235
        %v1240 = vrsqrt.pop %v1037
        %v1241 = vmul.f32 %v1240, %v1037
        %v1242 = vmul.f32 %v1241, %v1240
        %v1243 = vmul.f32 0.5, %v1242
        %v1244 = vsub.f32 1.5, %v1243
        %v1245 = vmul.f32 %v1240, %v1244
        %vm1246 = vweird.f32 %v1037
        %vm1247 = vweird.f32 %v1240
        %vm1248 = vmor %vm1246, %vm1247
        %v1249 = vsel %vm1248, %v1240, %v1245
        %v1250 = vrsqrt.pop %v1038
        %v1251 = vmul.f32 %v1250, %v1038
        %v1252 = vmul.f32 %v1251, %v1250
        %v1253 = vmul.f32 0.5, %v1252
        %v1254 = vsub.f32 1.5, %v1253
        %v1255 = vmul.f32 %v1250, %v1254
        %vm1256 = vweird.f32 %v1038
        %vm1257 = vweird.f32 %v1250
        %vm1258 = vmor %vm1256, %vm1257
        %v1259 = vsel %vm1258, %v1250, %v1255
        %v1260 = vrsqrt.pop %v1039
        %v1261 = vmul.f32 %v1260, %v1039
        %v1262 = vmul.f32 %v1261, %v1260
        %v1263 = vmul.f32 0.5, %v1262
        %v1264 = vsub.f32 1.5, %v1263
        %v1265 = vmul.f32 %v1260, %v1264
        %vm1266 = vweird.f32 %v1039
        %vm1267 = vweird.f32 %v1260
        %vm1268 = vmor %vm1266, %vm1267
        %v1269 = vsel %vm1268, %v1260, %v1265
        %v1270 = vrsqrt.pop %v1040
        %v1271 = vmul.f32 %v1270, %v1040
        %v1272 = vmul.f32 %v1271, %v1270
        %v1273 = vmul.f32 0.5, %v1272
        %v1274 = vsub.f32 1.5, %v1273
        %v1275 = vmul.f32 %v1270, %v1274
        %vm1276 = vweird.f32 %v1040
        %vm1277 = vweird.f32 %v1270
        %vm1278 = vmor %vm1276, %vm1277
        %v1279 = vsel %vm1278, %v1270, %v1275
        %v1280 = vrsqrt.pop %v1041
        %v1281 = vmul.f32 %v1280, %v1041
        %v1282 = vmul.f32 %v1281, %v1280
        %v1283 = vmul.f32 0.5, %v1282
        %v1284 = vsub.f32 1.5, %v1283
        %v1285 = vmul.f32 %v1280, %v1284
        %vm1286 = vweird.f32 %v1041
        %vm1287 = vweird.f32 %v1280
        %vm1288 = vmor %vm1286, %vm1287
        %v1289 = vsel %vm1288, %v1280, %v1285
        %v1290 = vrsqrt.pop %v1042
        %v1291 = vmul.f32 %v1290, %v1042
        %v1292 = vmul.f32 %v1291, %v1290
        %v1293 = vmul.f32 0.5, %v1292
        %v1294 = vsub.f32 1.5, %v1293
        %v1295 = vmul.f32 %v1290, %v1294
        %vm1296 = vweird.f32 %v1042
        %vm1297 = vweird.f32 %v1290
        %vm1298 = vmor %vm1296, %vm1297
        %v1299 = vsel %vm1298, %v1290, %v1295
        %v1300 = vrsqrt.pop %v1043
        %v1301 = vmul.f32 %v1300, %v1043
        %v1302 = vmul.f32 %v1301, %v1300
        %v1303 = vmul.f32 0.5, %v1302
        %v1304 = vsub.f32 1.5, %v1303
        %v1305 = vmul.f32 %v1300, %v1304
        %vm1306 = vweird.f32 %v1043
        %vm1307 = vweird.f32 %v1300
        %vm1308 = vmor %vm1306, %vm1307
        %v1309 = vsel %vm1308, %v1300, %v1305
        %v1310 = vrsqrt.pop %v1044
        %v1311 = vmul.f32 %v1310, %v1044
        %v1312 = vmul.f32 %v1311, %v1310
        %v1313 = vmul.f32 0.5, %v1312
        %v1314 = vsub.f32 1.5, %v1313
        %v1315 = vmul.f32 %v1310, %v1314
        %vm1316 = vweird.f32 %v1044
        %vm1317 = vweird.f32 %v1310
        %vm1318 = vmor %vm1316, %vm1317
        %v1319 = vsel %vm1318, %v1310, %v1315
        %v1320 = vrsqrt.pop %v1045
        %v1321 = vmul.f32 %v1320, %v1045
        %v1322 = vmul.f32 %v1321, %v1320
        %v1323 = vmul.f32 0.5, %v1322
        %v1324 = vsub.f32 1.5, %v1323
        %v1325 = vmul.f32 %v1320, %v1324
        %vm1326 = vweird.f32 %v1045
        %vm1327 = vweird.f32 %v1320
        %vm1328 = vmor %vm1326, %vm1327
        %v1329 = vsel %vm1328, %v1320, %v1325
        %v1330 = vrsqrt.pop %v1046
        %v1331 = vmul.f32 %v1330, %v1046
        %v1332 = vmul.f32 %v1331, %v1330
        %v1333 = vmul.f32 0.5, %v1332
        %v1334 = vsub.f32 1.5, %v1333
        %v1335 = vmul.f32 %v1330, %v1334
        %vm1336 = vweird.f32 %v1046
        %vm1337 = vweird.f32 %v1330
        %vm1338 = vmor %vm1336, %vm1337
        %v1339 = vsel %vm1338, %v1330, %v1335
        %v1340 = vrsqrt.pop %v1047
        %v1341 = vmul.f32 %v1340, %v1047
        %v1342 = vmul.f32 %v1341, %v1340
        %v1343 = vmul.f32 0.5, %v1342
        %v1344 = vsub.f32 1.5, %v1343
        %v1345 = vmul.f32 %v1340, %v1344
        %vm1346 = vweird.f32 %v1047
        %vm1347 = vweird.f32 %v1340
        %vm1348 = vmor %vm1346, %vm1347
        %v1349 = vsel %vm1348, %v1340, %v1345
        %v1350 = vrsqrt.pop %v1048
        %v1351 = vmul.f32 %v1350, %v1048
        %v1352 = vmul.f32 %v1351, %v1350
        %v1353 = vmul.f32 0.5, %v1352
        %v1354 = vsub.f32 1.5, %v1353
        %v1355 = vmul.f32 %v1350, %v1354
        %vm1356 = vweird.f32 %v1048
        %vm1357 = vweird.f32 %v1350
        %vm1358 = vmor %vm1356, %vm1357
        %v1359 = vsel %vm1358, %v1350, %v1355
        %v1360 = vrsqrt.pop %v1049
        %v1361 = vmul.f32 %v1360, %v1049
        %v1362 = vmul.f32 %v1361, %v1360
        %v1363 = vmul.f32 0.5, %v1362
        %v1364 = vsub.f32 1.5, %v1363
        %v1365 = vmul.f32 %v1360, %v1364
        %vm1366 = vweird.f32 %v1049
        %vm1367 = vweird.f32 %v1360
        %vm1368 = vmor %vm1366, %vm1367
        %v1369 = vsel %vm1368, %v1360, %v1365
        %v1370 = vmul.f32 %v762, %v1059
        %v1371 = vmul.f32 %v763, %v1059
        %v1372 = vmul.f32 %v764, %v1069
        %v1373 = vmul.f32 %v765, %v1069
        %v1374 = vmul.f32 %v766, %v1079
        %v1375 = vmul.f32 %v767, %v1079
        %v1376 = vmul.f32 %v768, %v1089
        %v1377 = vmul.f32 %v769, %v1089
        %v1378 = vmul.f32 %v770, %v1099
        %v1379 = vmul.f32 %v771, %v1099
        %v1380 = vmul.f32 %v772, %v1109
        %v1381 = vmul.f32 %v773, %v1109
        %v1382 = vmul.f32 %v774, %v1119
        %v1383 = vmul.f32 %v775, %v1119
        %v1384 = vmul.f32 %v776, %v1129
        %v1385 = vmul.f32 %v777, %v1129
        %v1386 = vmul.f32 %v778, %v1139
        %v1387 = vmul.f32 %v779, %v1139
        %v1388 = vmul.f32 %v780, %v1149
        %v1389 = vmul.f32 %v781, %v1149
        %v1390 = vmul.f32 %v782, %v1159
        %v1391 = vmul.f32 %v783, %v1159
        %v1392 = vmul.f32 %v784, %v1169
        %v1393 = vmul.f32 %v785, %v1169
        %v1394 = vmul.f32 %v786, %v1179
        %v1395 = vmul.f32 %v787, %v1179
        %v1396 = vmul.f32 %v788, %v1189
        %v1397 = vmul.f32 %v789, %v1189
        %v1398 = vmul.f32 %v790, %v1199
        %v1399 = vmul.f32 %v791, %v1199
        %v1400 = vmul.f32 %v792, %v1209
        %v1401 = vmul.f32 %v793, %v1209
        %v1402 = vmul.f32 %v794, %v1219
        %v1403 = vmul.f32 %v795, %v1219
        %v1404 = vmul.f32 %v796, %v1229
        %v1405 = vmul.f32 %v797, %v1229
        %v1406 = vmul.f32 %v798, %v1239
        %v1407 = vmul.f32 %v799, %v1239
        %v1408 = vmul.f32 %v800, %v1249
        %v1409 = vmul.f32 %v801, %v1249
        %v1410 = vmul.f32 %v802, %v1259
        %v1411 = vmul.f32 %v803, %v1259
        %v1412 = vmul.f32 %v804, %v1269
        %v1413 = vmul.f32 %v805, %v1269
        %v1414 = vmul.f32 %v806, %v1279
        %v1415 = vmul.f32 %v807, %v1279
        %v1416 = vmul.f32 %v808, %v1289
        %v1417 = vmul.f32 %v809, %v1289
        %v1418 = vmul.f32 %v810, %v1299
        %v1419 = vmul.f32 %v811, %v1299
        %v1420 = vmul.f32 %v812, %v1309
        %v1421 = vmul.f32 %v813, %v1309
        %v1422 = vmul.f32 %v814, %v1319
        %v1423 = vmul.f32 %v815, %v1319
        %v1424 = vmul.f32 %v816, %v1329
        %v1425 = vmul.f32 %v817, %v1329
        %v1426 = vmul.f32 %v818, %v1339
        %v1427 = vmul.f32 %v819, %v1339
        %v1428 = vmul.f32 %v820, %v1349
        %v1429 = vmul.f32 %v821, %v1349
        %v1430 = vmul.f32 %v822, %v1359
        %v1431 = vmul.f32 %v823, %v1359
        %v1432 = vmul.f32 %v824, %v1369
        %v1433 = vmul.f32 %v825, %v1369
        %v1435 = vperm.slane %v625, 0
        %v1436 = vperm.slane %v625, 1
        %v1439 = vmul.f32 %v1370, %v1435
        %v1440 = vmul.f32 %v1371, %v1436
        %v1441 = vmul.f32 %v1372, %v1435
        %v1442 = vmul.f32 %v1373, %v1436
        %v1443 = vmul.f32 %v1374, %v1435
        %v1444 = vmul.f32 %v1375, %v1436
        %v1445 = vmul.f32 %v1376, %v1435
        %v1446 = vmul.f32 %v1377, %v1436
        %v1447 = vmul.f32 %v1378, %v1435
        %v1448 = vmul.f32 %v1379, %v1436
        %v1449 = vmul.f32 %v1380, %v1435
        %v1450 = vmul.f32 %v1381, %v1436
        %v1451 = vmul.f32 %v1382, %v1435
        %v1452 = vmul.f32 %v1383, %v1436
        %v1453 = vmul.f32 %v1384, %v1435
        %v1454 = vmul.f32 %v1385, %v1436
        %v1455 = vmul.f32 %v1386, %v1435
        %v1456 = vmul.f32 %v1387, %v1436
        %v1457 = vmul.f32 %v1388, %v1435
        %v1458 = vmul.f32 %v1389, %v1436
        %v1459 = vmul.f32 %v1390, %v1435
        %v1460 = vmul.f32 %v1391, %v1436
        %v1461 = vmul.f32 %v1392, %v1435
        %v1462 = vmul.f32 %v1393, %v1436
        %v1463 = vmul.f32 %v1394, %v1435
        %v1464 = vmul.f32 %v1395, %v1436
        %v1465 = vmul.f32 %v1396, %v1435
        %v1466 = vmul.f32 %v1397, %v1436
        %v1467 = vmul.f32 %v1398, %v1435
        %v1468 = vmul.f32 %v1399, %v1436
        %v1469 = vmul.f32 %v1400, %v1435
        %v1470 = vmul.f32 %v1401, %v1436
        %v1471 = vmul.f32 %v1402, %v1435
        %v1472 = vmul.f32 %v1403, %v1436
        %v1473 = vmul.f32 %v1404, %v1435
        %v1474 = vmul.f32 %v1405, %v1436
        %v1475 = vmul.f32 %v1406, %v1435
        %v1476 = vmul.f32 %v1407, %v1436
        %v1477 = vmul.f32 %v1408, %v1435
        %v1478 = vmul.f32 %v1409, %v1436
        %v1479 = vmul.f32 %v1410, %v1435
        %v1480 = vmul.f32 %v1411, %v1436
        %v1481 = vmul.f32 %v1412, %v1435
        %v1482 = vmul.f32 %v1413, %v1436
        %v1483 = vmul.f32 %v1414, %v1435
        %v1484 = vmul.f32 %v1415, %v1436
        %v1485 = vmul.f32 %v1416, %v1435
        %v1486 = vmul.f32 %v1417, %v1436
        %v1487 = vmul.f32 %v1418, %v1435
        %v1488 = vmul.f32 %v1419, %v1436
        %v1489 = vmul.f32 %v1420, %v1435
        %v1490 = vmul.f32 %v1421, %v1436
        %v1491 = vmul.f32 %v1422, %v1435
        %v1492 = vmul.f32 %v1423, %v1436
        %v1493 = vmul.f32 %v1424, %v1435
        %v1494 = vmul.f32 %v1425, %v1436
        %v1495 = vmul.f32 %v1426, %v1435
        %v1496 = vmul.f32 %v1427, %v1436
        %v1497 = vmul.f32 %v1428, %v1435
        %v1498 = vmul.f32 %v1429, %v1436
        %v1499 = vmul.f32 %v1430, %v1435
        %v1500 = vmul.f32 %v1431, %v1436
        %v1501 = vmul.f32 %v1432, %v1435
        %v1502 = vmul.f32 %v1433, %v1436
        %v1504 = vperm.slane %v626, 0
        %v1505 = vperm.slane %v626, 1
        %v1508 = vadd.f32 %v1439, %v1504
        %v1509 = vadd.f32 %v1440, %v1505
        %v1510 = vadd.f32 %v1441, %v1504
        %v1511 = vadd.f32 %v1442, %v1505
        %v1512 = vadd.f32 %v1443, %v1504
        %v1513 = vadd.f32 %v1444, %v1505
        %v1514 = vadd.f32 %v1445, %v1504
        %v1515 = vadd.f32 %v1446, %v1505
        %v1516 = vadd.f32 %v1447, %v1504
        %v1517 = vadd.f32 %v1448, %v1505
        %v1518 = vadd.f32 %v1449, %v1504
        %v1519 = vadd.f32 %v1450, %v1505
        %v1520 = vadd.f32 %v1451, %v1504
        %v1521 = vadd.f32 %v1452, %v1505
        %v1522 = vadd.f32 %v1453, %v1504
        %v1523 = vadd.f32 %v1454, %v1505
        %v1524 = vadd.f32 %v1455, %v1504
        %v1525 = vadd.f32 %v1456, %v1505
        %v1526 = vadd.f32 %v1457, %v1504
        %v1527 = vadd.f32 %v1458, %v1505
        %v1528 = vadd.f32 %v1459, %v1504
        %v1529 = vadd.f32 %v1460, %v1505
        %v1530 = vadd.f32 %v1461, %v1504
        %v1531 = vadd.f32 %v1462, %v1505
        %v1532 = vadd.f32 %v1463, %v1504
        %v1533 = vadd.f32 %v1464, %v1505
        %v1534 = vadd.f32 %v1465, %v1504
        %v1535 = vadd.f32 %v1466, %v1505
        %v1536 = vadd.f32 %v1467, %v1504
        %v1537 = vadd.f32 %v1468, %v1505
        %v1538 = vadd.f32 %v1469, %v1504
        %v1539 = vadd.f32 %v1470, %v1505
        %v1540 = vadd.f32 %v1471, %v1504
        %v1541 = vadd.f32 %v1472, %v1505
        %v1542 = vadd.f32 %v1473, %v1504
        %v1543 = vadd.f32 %v1474, %v1505
        %v1544 = vadd.f32 %v1475, %v1504
        %v1545 = vadd.f32 %v1476, %v1505
        %v1546 = vadd.f32 %v1477, %v1504
        %v1547 = vadd.f32 %v1478, %v1505
        %v1548 = vadd.f32 %v1479, %v1504
        %v1549 = vadd.f32 %v1480, %v1505
        %v1550 = vadd.f32 %v1481, %v1504
        %v1551 = vadd.f32 %v1482, %v1505
        %v1552 = vadd.f32 %v1483, %v1504
        %v1553 = vadd.f32 %v1484, %v1505
        %v1554 = vadd.f32 %v1485, %v1504
        %v1555 = vadd.f32 %v1486, %v1505
        %v1556 = vadd.f32 %v1487, %v1504
        %v1557 = vadd.f32 %v1488, %v1505
        %v1558 = vadd.f32 %v1489, %v1504
        %v1559 = vadd.f32 %v1490, %v1505
        %v1560 = vadd.f32 %v1491, %v1504
        %v1561 = vadd.f32 %v1492, %v1505
        %v1562 = vadd.f32 %v1493, %v1504
        %v1563 = vadd.f32 %v1494, %v1505
        %v1564 = vadd.f32 %v1495, %v1504
        %v1565 = vadd.f32 %v1496, %v1505
        %v1566 = vadd.f32 %v1497, %v1504
        %v1567 = vadd.f32 %v1498, %v1505
        %v1568 = vadd.f32 %v1499, %v1504
        %v1569 = vadd.f32 %v1500, %v1505
        %v1570 = vadd.f32 %v1501, %v1504
        %v1571 = vadd.f32 %v1502, %v1505
        %v1572 = vpack.c.bf16 %v1510, %v1508
        %v1573 = vpack.c.bf16 %v1511, %v1509
        %v1574 = vpack.c.bf16 %v1514, %v1512
        %v1575 = vpack.c.bf16 %v1515, %v1513
        %v1576 = vpack.c.bf16 %v1518, %v1516
        %v1577 = vpack.c.bf16 %v1519, %v1517
        %v1578 = vpack.c.bf16 %v1522, %v1520
        %v1579 = vpack.c.bf16 %v1523, %v1521
        %v1580 = vpack.c.bf16 %v1526, %v1524
        %v1581 = vpack.c.bf16 %v1527, %v1525
        %v1582 = vpack.c.bf16 %v1530, %v1528
        %v1583 = vpack.c.bf16 %v1531, %v1529
        %v1584 = vpack.c.bf16 %v1534, %v1532
        %v1585 = vpack.c.bf16 %v1535, %v1533
        %v1586 = vpack.c.bf16 %v1538, %v1536
        %v1587 = vpack.c.bf16 %v1539, %v1537
        %v1588 = vpack.c.bf16 %v1542, %v1540
        %v1589 = vpack.c.bf16 %v1543, %v1541
        %v1590 = vpack.c.bf16 %v1546, %v1544
        %v1591 = vpack.c.bf16 %v1547, %v1545
        %v1592 = vpack.c.bf16 %v1550, %v1548
        %v1593 = vpack.c.bf16 %v1551, %v1549
        %v1594 = vpack.c.bf16 %v1554, %v1552
        %v1595 = vpack.c.bf16 %v1555, %v1553
        %v1596 = vpack.c.bf16 %v1558, %v1556
        %v1597 = vpack.c.bf16 %v1559, %v1557
        %v1598 = vpack.c.bf16 %v1562, %v1560
        %v1599 = vpack.c.bf16 %v1563, %v1561
        %v1600 = vpack.c.bf16 %v1566, %v1564
        %v1601 = vpack.c.bf16 %v1567, %v1565
        %v1602 = vpack.c.bf16 %v1570, %v1568
        %v1603 = vpack.c.bf16 %v1571, %v1569
        %v1604 = vld [vmem:[#allocation10] sm:$0xff]
        %v1605 = vld [vmem:[#allocation10 + $0x8] sm:$0xff]
        %v1606 = vld [vmem:[#allocation10 + $0x10] sm:$0xff]
        %v1607 = vld [vmem:[#allocation10 + $0x18] sm:$0xff]
        %v1608 = vld [vmem:[#allocation10 + $0x20] sm:$0xff]
        %v1609 = vld [vmem:[#allocation10 + $0x28] sm:$0xff]
        %v1610 = vld [vmem:[#allocation10 + $0x30] sm:$0xff]
        %v1611 = vld [vmem:[#allocation10 + $0x38] sm:$0xff]
        %v1612 = vld [vmem:[#allocation10 + $0x40] sm:$0xff]
        %v1613 = vld [vmem:[#allocation10 + $0x48] sm:$0xff]
        %v1614 = vld [vmem:[#allocation10 + $0x50] sm:$0xff]
        %v1615 = vld [vmem:[#allocation10 + $0x58] sm:$0xff]
        %v1616 = vld [vmem:[#allocation10 + $0x60] sm:$0xff]
        %v1617 = vld [vmem:[#allocation10 + $0x68] sm:$0xff]
        %v1618 = vld [vmem:[#allocation10 + $0x70] sm:$0xff]
        %v1619 = vld [vmem:[#allocation10 + $0x78] sm:$0xff]
        %v1620 = vld [vmem:[#allocation10 + $0x80] sm:$0xff]
        %v1621 = vld [vmem:[#allocation10 + $0x88] sm:$0xff]
        %v1622 = vld [vmem:[#allocation10 + $0x90] sm:$0xff]
        %v1623 = vld [vmem:[#allocation10 + $0x98] sm:$0xff]
        %v1624 = vld [vmem:[#allocation10 + $0xa0] sm:$0xff]
        %v1625 = vld [vmem:[#allocation10 + $0xa8] sm:$0xff]
        %v1626 = vld [vmem:[#allocation10 + $0xb0] sm:$0xff]
        %v1627 = vld [vmem:[#allocation10 + $0xb8] sm:$0xff]
        %v1628 = vld [vmem:[#allocation10 + $0xc0] sm:$0xff]
        %v1629 = vld [vmem:[#allocation10 + $0xc8] sm:$0xff]
        %v1630 = vld [vmem:[#allocation10 + $0xd0] sm:$0xff]
        %v1631 = vld [vmem:[#allocation10 + $0xd8] sm:$0xff]
        %v1632 = vld [vmem:[#allocation10 + $0xe0] sm:$0xff]
        %v1633 = vld [vmem:[#allocation10 + $0xe8] sm:$0xff]
        %v1634 = vld [vmem:[#allocation10 + $0xf0] sm:$0xff]
        %v1635 = vld [vmem:[#allocation10 + $0xf8] sm:$0xff]
        %v1636 = vld [vmem:[#allocation10 + $0x100] sm:$0xff]
        %v1637 = vld [vmem:[#allocation10 + $0x108] sm:$0xff]
        %v1638 = vld [vmem:[#allocation10 + $0x110] sm:$0xff]
        %v1639 = vld [vmem:[#allocation10 + $0x118] sm:$0xff]
        %v1640 = vld [vmem:[#allocation10 + $0x120] sm:$0xff]
        %v1641 = vld [vmem:[#allocation10 + $0x128] sm:$0xff]
        %v1642 = vld [vmem:[#allocation10 + $0x130] sm:$0xff]
        %v1643 = vld [vmem:[#allocation10 + $0x138] sm:$0xff]
        %v1644 = vld [vmem:[#allocation10 + $0x140] sm:$0xff]
        %v1645 = vld [vmem:[#allocation10 + $0x148] sm:$0xff]
        %v1646 = vld [vmem:[#allocation10 + $0x150] sm:$0xff]
        %v1647 = vld [vmem:[#allocation10 + $0x158] sm:$0xff]
        %v1648 = vld [vmem:[#allocation10 + $0x160] sm:$0xff]
        %v1649 = vld [vmem:[#allocation10 + $0x168] sm:$0xff]
        %v1650 = vld [vmem:[#allocation10 + $0x170] sm:$0xff]
        %v1651 = vld [vmem:[#allocation10 + $0x178] sm:$0xff]
        %v1652 = vld [vmem:[#allocation10 + $0x180] sm:$0xff]
        %v1653 = vld [vmem:[#allocation10 + $0x188] sm:$0xff]
        %v1654 = vld [vmem:[#allocation10 + $0x190] sm:$0xff]
        %v1655 = vld [vmem:[#allocation10 + $0x198] sm:$0xff]
        %v1656 = vld [vmem:[#allocation10 + $0x1a0] sm:$0xff]
        %v1657 = vld [vmem:[#allocation10 + $0x1a8] sm:$0xff]
        %v1658 = vld [vmem:[#allocation10 + $0x1b0] sm:$0xff]
        %v1659 = vld [vmem:[#allocation10 + $0x1b8] sm:$0xff]
        %v1660 = vld [vmem:[#allocation10 + $0x1c0] sm:$0xff]
        %v1661 = vld [vmem:[#allocation10 + $0x1c8] sm:$0xff]
        %v1662 = vld [vmem:[#allocation10 + $0x1d0] sm:$0xff]
        %v1663 = vld [vmem:[#allocation10 + $0x1d8] sm:$0xff]
        %v1664 = vld [vmem:[#allocation10 + $0x1e0] sm:$0xff]
        %v1665 = vld [vmem:[#allocation10 + $0x1e8] sm:$0xff]
        %v1666 = vld [vmem:[#allocation10 + $0x1f0] sm:$0xff]
        %v1667 = vld [vmem:[#allocation10 + $0x1f8] sm:$0xff]
        %v1668 = vld [vmem:[#allocation10 + $0x200] sm:$0xff]
        %v1669 = vld [vmem:[#allocation10 + $0x208] sm:$0xff]
        %v1670 = vld [vmem:[#allocation10 + $0x210] sm:$0xff]
        %v1671 = vld [vmem:[#allocation10 + $0x218] sm:$0xff]
        %v1672 = vld [vmem:[#allocation10 + $0x220] sm:$0xff]
        %v1673 = vld [vmem:[#allocation10 + $0x228] sm:$0xff]
        %v1674 = vld [vmem:[#allocation10 + $0x230] sm:$0xff]
        %v1675 = vld [vmem:[#allocation10 + $0x238] sm:$0xff]
        %v1676 = vld [vmem:[#allocation10 + $0x240] sm:$0xff]
        %v1677 = vld [vmem:[#allocation10 + $0x248] sm:$0xff]
        %v1678 = vld [vmem:[#allocation10 + $0x250] sm:$0xff]
        %v1679 = vld [vmem:[#allocation10 + $0x258] sm:$0xff]
        %v1680 = vld [vmem:[#allocation10 + $0x260] sm:$0xff]
        %v1681 = vld [vmem:[#allocation10 + $0x268] sm:$0xff]
        %v1682 = vld [vmem:[#allocation10 + $0x270] sm:$0xff]
        %v1683 = vld [vmem:[#allocation10 + $0x278] sm:$0xff]
        %v1684 = vld [vmem:[#allocation10 + $0x280] sm:$0xff]
        %v1685 = vld [vmem:[#allocation10 + $0x288] sm:$0xff]
        %v1686 = vld [vmem:[#allocation10 + $0x290] sm:$0xff]
        %v1687 = vld [vmem:[#allocation10 + $0x298] sm:$0xff]
        %v1688 = vld [vmem:[#allocation10 + $0x2a0] sm:$0xff]
        %v1689 = vld [vmem:[#allocation10 + $0x2a8] sm:$0xff]
        %v1690 = vld [vmem:[#allocation10 + $0x2b0] sm:$0xff]
        %v1691 = vld [vmem:[#allocation10 + $0x2b8] sm:$0xff]
        %v1692 = vld [vmem:[#allocation10 + $0x2c0] sm:$0xff]
        %v1693 = vld [vmem:[#allocation10 + $0x2c8] sm:$0xff]
        %v1694 = vld [vmem:[#allocation10 + $0x2d0] sm:$0xff]
        %v1695 = vld [vmem:[#allocation10 + $0x2d8] sm:$0xff]
        %v1696 = vld [vmem:[#allocation10 + $0x2e0] sm:$0xff]
        %v1697 = vld [vmem:[#allocation10 + $0x2e8] sm:$0xff]
        %v1698 = vld [vmem:[#allocation10 + $0x2f0] sm:$0xff]
        %v1699 = vld [vmem:[#allocation10 + $0x2f8] sm:$0xff]
        %v1700 = vld [vmem:[#allocation11] sm:$0x3f]
        %v1702 = vperm.slane %v1700, 0
        %v1703 = vperm.slane %v1700, 1
        %v1704 = vperm.slane %v1700, 2
        %v1705 = vperm.slane %v1700, 3
        %v1706 = vperm.slane %v1700, 4
        %v1707 = vperm.slane %v1700, 5
        %v1810 = vunpack.c.l.b16 %v1604
        %v1811 = vunpack.c.h.b16 %v1604
        %v1812 = vunpack.c.l.b16 %v1605
        %v1813 = vunpack.c.h.b16 %v1605
        %v1814 = vunpack.c.l.b16 %v1606
        %v1815 = vunpack.c.h.b16 %v1606
        %v1816 = vunpack.c.l.b16 %v1607
        %v1817 = vunpack.c.h.b16 %v1607
        %v1818 = vunpack.c.l.b16 %v1608
        %v1819 = vunpack.c.h.b16 %v1608
        %v1820 = vunpack.c.l.b16 %v1609
        %v1821 = vunpack.c.h.b16 %v1609
        %v1822 = vunpack.c.l.b16 %v1610
        %v1823 = vunpack.c.h.b16 %v1610
        %v1824 = vunpack.c.l.b16 %v1611
        %v1825 = vunpack.c.h.b16 %v1611
        %v1826 = vunpack.c.l.b16 %v1612
        %v1827 = vunpack.c.h.b16 %v1612
        %v1828 = vunpack.c.l.b16 %v1613
        %v1829 = vunpack.c.h.b16 %v1613
        %v1830 = vunpack.c.l.b16 %v1614
        %v1831 = vunpack.c.h.b16 %v1614
        %v1832 = vunpack.c.l.b16 %v1615
        %v1833 = vunpack.c.h.b16 %v1615
        %v1834 = vunpack.c.l.b16 %v1616
        %v1835 = vunpack.c.h.b16 %v1616
        %v1836 = vunpack.c.l.b16 %v1617
        %v1837 = vunpack.c.h.b16 %v1617
        %v1838 = vunpack.c.l.b16 %v1618
        %v1839 = vunpack.c.h.b16 %v1618
        %v1840 = vunpack.c.l.b16 %v1619
        %v1841 = vunpack.c.h.b16 %v1619
        %v1842 = vunpack.c.l.b16 %v1620
        %v1843 = vunpack.c.h.b16 %v1620
        %v1844 = vunpack.c.l.b16 %v1621
        %v1845 = vunpack.c.h.b16 %v1621
        %v1846 = vunpack.c.l.b16 %v1622
        %v1847 = vunpack.c.h.b16 %v1622
        %v1848 = vunpack.c.l.b16 %v1623
        %v1849 = vunpack.c.h.b16 %v1623
        %v1850 = vunpack.c.l.b16 %v1624
        %v1851 = vunpack.c.h.b16 %v1624
        %v1852 = vunpack.c.l.b16 %v1625
        %v1853 = vunpack.c.h.b16 %v1625
        %v1854 = vunpack.c.l.b16 %v1626
        %v1855 = vunpack.c.h.b16 %v1626
        %v1856 = vunpack.c.l.b16 %v1627
        %v1857 = vunpack.c.h.b16 %v1627
        %v1858 = vunpack.c.l.b16 %v1628
        %v1859 = vunpack.c.h.b16 %v1628
        %v1860 = vunpack.c.l.b16 %v1629
        %v1861 = vunpack.c.h.b16 %v1629
        %v1862 = vunpack.c.l.b16 %v1630
        %v1863 = vunpack.c.h.b16 %v1630
        %v1864 = vunpack.c.l.b16 %v1631
        %v1865 = vunpack.c.h.b16 %v1631
        %v1866 = vunpack.c.l.b16 %v1632
        %v1867 = vunpack.c.h.b16 %v1632
        %v1868 = vunpack.c.l.b16 %v1633
        %v1869 = vunpack.c.h.b16 %v1633
        %v1870 = vunpack.c.l.b16 %v1634
        %v1871 = vunpack.c.h.b16 %v1634
        %v1872 = vunpack.c.l.b16 %v1635
        %v1873 = vunpack.c.h.b16 %v1635
        %v1874 = vunpack.c.l.b16 %v1636
        %v1875 = vunpack.c.h.b16 %v1636
        %v1876 = vunpack.c.l.b16 %v1637
        %v1877 = vunpack.c.h.b16 %v1637
        %v1878 = vunpack.c.l.b16 %v1638
        %v1879 = vunpack.c.h.b16 %v1638
        %v1880 = vunpack.c.l.b16 %v1639
        %v1881 = vunpack.c.h.b16 %v1639
        %v1882 = vunpack.c.l.b16 %v1640
        %v1883 = vunpack.c.h.b16 %v1640
        %v1884 = vunpack.c.l.b16 %v1641
        %v1885 = vunpack.c.h.b16 %v1641
        %v1886 = vunpack.c.l.b16 %v1642
        %v1887 = vunpack.c.h.b16 %v1642
        %v1888 = vunpack.c.l.b16 %v1643
        %v1889 = vunpack.c.h.b16 %v1643
        %v1890 = vunpack.c.l.b16 %v1644
        %v1891 = vunpack.c.h.b16 %v1644
        %v1892 = vunpack.c.l.b16 %v1645
        %v1893 = vunpack.c.h.b16 %v1645
        %v1894 = vunpack.c.l.b16 %v1646
        %v1895 = vunpack.c.h.b16 %v1646
        %v1896 = vunpack.c.l.b16 %v1647
        %v1897 = vunpack.c.h.b16 %v1647
        %v1898 = vunpack.c.l.b16 %v1648
        %v1899 = vunpack.c.h.b16 %v1648
        %v1900 = vunpack.c.l.b16 %v1649
        %v1901 = vunpack.c.h.b16 %v1649
        %v1902 = vunpack.c.l.b16 %v1650
        %v1903 = vunpack.c.h.b16 %v1650
        %v1904 = vunpack.c.l.b16 %v1651
        %v1905 = vunpack.c.h.b16 %v1651
        %v1906 = vunpack.c.l.b16 %v1652
        %v1907 = vunpack.c.h.b16 %v1652
        %v1908 = vunpack.c.l.b16 %v1653
        %v1909 = vunpack.c.h.b16 %v1653
        %v1910 = vunpack.c.l.b16 %v1654
        %v1911 = vunpack.c.h.b16 %v1654
        %v1912 = vunpack.c.l.b16 %v1655
        %v1913 = vunpack.c.h.b16 %v1655
        %v1914 = vunpack.c.l.b16 %v1656
        %v1915 = vunpack.c.h.b16 %v1656
        %v1916 = vunpack.c.l.b16 %v1657
        %v1917 = vunpack.c.h.b16 %v1657
        %v1918 = vunpack.c.l.b16 %v1658
        %v1919 = vunpack.c.h.b16 %v1658
        %v1920 = vunpack.c.l.b16 %v1659
        %v1921 = vunpack.c.h.b16 %v1659
        %v1922 = vunpack.c.l.b16 %v1660
        %v1923 = vunpack.c.h.b16 %v1660
        %v1924 = vunpack.c.l.b16 %v1661
        %v1925 = vunpack.c.h.b16 %v1661
        %v1926 = vunpack.c.l.b16 %v1662
        %v1927 = vunpack.c.h.b16 %v1662
        %v1928 = vunpack.c.l.b16 %v1663
        %v1929 = vunpack.c.h.b16 %v1663
        %v1930 = vunpack.c.l.b16 %v1664
        %v1931 = vunpack.c.h.b16 %v1664
        %v1932 = vunpack.c.l.b16 %v1665
        %v1933 = vunpack.c.h.b16 %v1665
        %v1934 = vunpack.c.l.b16 %v1666
        %v1935 = vunpack.c.h.b16 %v1666
        %v1936 = vunpack.c.l.b16 %v1667
        %v1937 = vunpack.c.h.b16 %v1667
        %v1938 = vunpack.c.l.b16 %v1668
        %v1939 = vunpack.c.h.b16 %v1668
        %v1940 = vunpack.c.l.b16 %v1669
        %v1941 = vunpack.c.h.b16 %v1669
        %v1942 = vunpack.c.l.b16 %v1670
        %v1943 = vunpack.c.h.b16 %v1670
        %v1944 = vunpack.c.l.b16 %v1671
        %v1945 = vunpack.c.h.b16 %v1671
        %v1946 = vunpack.c.l.b16 %v1672
        %v1947 = vunpack.c.h.b16 %v1672
        %v1948 = vunpack.c.l.b16 %v1673
        %v1949 = vunpack.c.h.b16 %v1673
        %v1950 = vunpack.c.l.b16 %v1674
        %v1951 = vunpack.c.h.b16 %v1674
        %v1952 = vunpack.c.l.b16 %v1675
        %v1953 = vunpack.c.h.b16 %v1675
        %v1954 = vunpack.c.l.b16 %v1676
        %v1955 = vunpack.c.h.b16 %v1676
        %v1956 = vunpack.c.l.b16 %v1677
        %v1957 = vunpack.c.h.b16 %v1677
        %v1958 = vunpack.c.l.b16 %v1678
        %v1959 = vunpack.c.h.b16 %v1678
        %v1960 = vunpack.c.l.b16 %v1679
        %v1961 = vunpack.c.h.b16 %v1679
        %v1962 = vunpack.c.l.b16 %v1680
        %v1963 = vunpack.c.h.b16 %v1680
        %v1964 = vunpack.c.l.b16 %v1681
        %v1965 = vunpack.c.h.b16 %v1681
        %v1966 = vunpack.c.l.b16 %v1682
        %v1967 = vunpack.c.h.b16 %v1682
        %v1968 = vunpack.c.l.b16 %v1683
        %v1969 = vunpack.c.h.b16 %v1683
        %v1970 = vunpack.c.l.b16 %v1684
        %v1971 = vunpack.c.h.b16 %v1684
        %v1972 = vunpack.c.l.b16 %v1685
        %v1973 = vunpack.c.h.b16 %v1685
        %v1974 = vunpack.c.l.b16 %v1686
        %v1975 = vunpack.c.h.b16 %v1686
        %v1976 = vunpack.c.l.b16 %v1687
        %v1977 = vunpack.c.h.b16 %v1687
        %v1978 = vunpack.c.l.b16 %v1688
        %v1979 = vunpack.c.h.b16 %v1688
        %v1980 = vunpack.c.l.b16 %v1689
        %v1981 = vunpack.c.h.b16 %v1689
        %v1982 = vunpack.c.l.b16 %v1690
        %v1983 = vunpack.c.h.b16 %v1690
        %v1984 = vunpack.c.l.b16 %v1691
        %v1985 = vunpack.c.h.b16 %v1691
        %v1986 = vunpack.c.l.b16 %v1692
        %v1987 = vunpack.c.h.b16 %v1692
        %v1988 = vunpack.c.l.b16 %v1693
        %v1989 = vunpack.c.h.b16 %v1693
        %v1990 = vunpack.c.l.b16 %v1694
        %v1991 = vunpack.c.h.b16 %v1694
        %v1992 = vunpack.c.l.b16 %v1695
        %v1993 = vunpack.c.h.b16 %v1695
        %v1994 = vunpack.c.l.b16 %v1696
        %v1995 = vunpack.c.h.b16 %v1696
        %v1996 = vunpack.c.l.b16 %v1697
        %v1997 = vunpack.c.h.b16 %v1697
        %v1998 = vunpack.c.l.b16 %v1698
        %v1999 = vunpack.c.h.b16 %v1698
        %v2000 = vunpack.c.l.b16 %v1699
        %v2001 = vunpack.c.h.b16 %v1699
        %v2002 = vpack.c.b16 %v1816, %v1810
        %v2003 = vpack.c.b16 %v1817, %v1811
        %v2004 = vpack.c.b16 %v1818, %v1812
        %v2005 = vpack.c.b16 %v1819, %v1813
        %v2006 = vpack.c.b16 %v1820, %v1814
        %v2007 = vpack.c.b16 %v1821, %v1815
        %v2008 = vpack.c.b16 %v1828, %v1822
        %v2009 = vpack.c.b16 %v1829, %v1823
        %v2010 = vpack.c.b16 %v1830, %v1824
        %v2011 = vpack.c.b16 %v1831, %v1825
        %v2012 = vpack.c.b16 %v1832, %v1826
        %v2013 = vpack.c.b16 %v1833, %v1827
        %v2014 = vpack.c.b16 %v1840, %v1834
        %v2015 = vpack.c.b16 %v1841, %v1835
        %v2016 = vpack.c.b16 %v1842, %v1836
        %v2017 = vpack.c.b16 %v1843, %v1837
        %v2018 = vpack.c.b16 %v1844, %v1838
        %v2019 = vpack.c.b16 %v1845, %v1839
        %v2020 = vpack.c.b16 %v1852, %v1846
        %v2021 = vpack.c.b16 %v1853, %v1847
        %v2022 = vpack.c.b16 %v1854, %v1848
        %v2023 = vpack.c.b16 %v1855, %v1849
        %v2024 = vpack.c.b16 %v1856, %v1850
        %v2025 = vpack.c.b16 %v1857, %v1851
        %v2026 = vpack.c.b16 %v1864, %v1858
        %v2027 = vpack.c.b16 %v1865, %v1859
        %v2028 = vpack.c.b16 %v1866, %v1860
        %v2029 = vpack.c.b16 %v1867, %v1861
        %v2030 = vpack.c.b16 %v1868, %v1862
        %v2031 = vpack.c.b16 %v1869, %v1863
        %v2032 = vpack.c.b16 %v1876, %v1870
        %v2033 = vpack.c.b16 %v1877, %v1871
        %v2034 = vpack.c.b16 %v1878, %v1872
        %v2035 = vpack.c.b16 %v1879, %v1873
        %v2036 = vpack.c.b16 %v1880, %v1874
        %v2037 = vpack.c.b16 %v1881, %v1875
        %v2038 = vpack.c.b16 %v1888, %v1882
        %v2039 = vpack.c.b16 %v1889, %v1883
        %v2040 = vpack.c.b16 %v1890, %v1884
        %v2041 = vpack.c.b16 %v1891, %v1885
        %v2042 = vpack.c.b16 %v1892, %v1886
        %v2043 = vpack.c.b16 %v1893, %v1887
        %v2044 = vpack.c.b16 %v1900, %v1894
        %v2045 = vpack.c.b16 %v1901, %v1895
        %v2046 = vpack.c.b16 %v1902, %v1896
        %v2047 = vpack.c.b16 %v1903, %v1897
        %v2048 = vpack.c.b16 %v1904, %v1898
        %v2049 = vpack.c.b16 %v1905, %v1899
        %v2050 = vpack.c.b16 %v1912, %v1906
        %v2051 = vpack.c.b16 %v1913, %v1907
        %v2052 = vpack.c.b16 %v1914, %v1908
        %v2053 = vpack.c.b16 %v1915, %v1909
        %v2054 = vpack.c.b16 %v1916, %v1910
        %v2055 = vpack.c.b16 %v1917, %v1911
        %v2056 = vpack.c.b16 %v1924, %v1918
        %v2057 = vpack.c.b16 %v1925, %v1919
        %v2058 = vpack.c.b16 %v1926, %v1920
        %v2059 = vpack.c.b16 %v1927, %v1921
        %v2060 = vpack.c.b16 %v1928, %v1922
        %v2061 = vpack.c.b16 %v1929, %v1923
        %v2062 = vpack.c.b16 %v1936, %v1930
        %v2063 = vpack.c.b16 %v1937, %v1931
        %v2064 = vpack.c.b16 %v1938, %v1932
        %v2065 = vpack.c.b16 %v1939, %v1933
        %v2066 = vpack.c.b16 %v1940, %v1934
        %v2067 = vpack.c.b16 %v1941, %v1935
        %v2068 = vpack.c.b16 %v1948, %v1942
        %v2069 = vpack.c.b16 %v1949, %v1943
        %v2070 = vpack.c.b16 %v1950, %v1944
        %v2071 = vpack.c.b16 %v1951, %v1945
        %v2072 = vpack.c.b16 %v1952, %v1946
        %v2073 = vpack.c.b16 %v1953, %v1947
        %v2074 = vpack.c.b16 %v1960, %v1954
        %v2075 = vpack.c.b16 %v1961, %v1955
        %v2076 = vpack.c.b16 %v1962, %v1956
        %v2077 = vpack.c.b16 %v1963, %v1957
        %v2078 = vpack.c.b16 %v1964, %v1958
        %v2079 = vpack.c.b16 %v1965, %v1959
        %v2080 = vpack.c.b16 %v1972, %v1966
        %v2081 = vpack.c.b16 %v1973, %v1967
        %v2082 = vpack.c.b16 %v1974, %v1968
        %v2083 = vpack.c.b16 %v1975, %v1969
        %v2084 = vpack.c.b16 %v1976, %v1970
        %v2085 = vpack.c.b16 %v1977, %v1971
        %v2086 = vpack.c.b16 %v1984, %v1978
        %v2087 = vpack.c.b16 %v1985, %v1979
        %v2088 = vpack.c.b16 %v1986, %v1980
        %v2089 = vpack.c.b16 %v1987, %v1981
        %v2090 = vpack.c.b16 %v1988, %v1982
        %v2091 = vpack.c.b16 %v1989, %v1983
        %v2092 = vpack.c.b16 %v1996, %v1990
        %v2093 = vpack.c.b16 %v1997, %v1991
        %v2094 = vpack.c.b16 %v1998, %v1992
        %v2095 = vpack.c.b16 %v1999, %v1993
        %v2096 = vpack.c.b16 %v2000, %v1994
        %v2097 = vpack.c.b16 %v2001, %v1995
        %2194 = vmatpush.bf16.msra.mxu0 %v2044
        %2195 = vmatpush.bf16.msra.mxu0 %v2038
        %2196 = vmatpush.bf16.msra.mxu0 %v2032
        %2197 = vmatpush.bf16.msra.mxu0 %v2026
        %2198 = vmatpush.bf16.msra.mxu0 %v2020
        %2199 = vmatpush.bf16.msra.mxu0 %v2014
        %2200 = vmatpush.bf16.msra.mxu0 %v2008
        %2201 = vmatpush.bf16.msra.mxu0 %v2002
        %2202 = vmatmul.bf16.gmra.mxu0 %v1572
        %v2203 = vpop.f32.mrf.mxu0
        %v2204 = vadd.f32 %v1702, %v2203
        %v2205 = vpop.f32.mrf.mxu0
        %v2206 = vadd.f32 %v1702, %v2205
        %2207 = vmatmul.bf16.gmra.mxu0 %v1574
        %v2208 = vpop.f32.mrf.mxu0
        %v2209 = vadd.f32 %v1702, %v2208
        %v2210 = vpop.f32.mrf.mxu0
        %v2211 = vadd.f32 %v1702, %v2210
        %2212 = vmatmul.bf16.gmra.mxu0 %v1576
        %v2213 = vpop.f32.mrf.mxu0
        %v2214 = vadd.f32 %v1702, %v2213
        %v2215 = vpop.f32.mrf.mxu0
        %v2216 = vadd.f32 %v1702, %v2215
        %2217 = vmatmul.bf16.gmra.mxu0 %v1578
        %v2218 = vpop.f32.mrf.mxu0
        %v2219 = vadd.f32 %v1702, %v2218
        %v2220 = vpop.f32.mrf.mxu0
        %v2221 = vadd.f32 %v1702, %v2220
        %2222 = vmatmul.bf16.gmra.mxu0 %v1580
        %v2223 = vpop.f32.mrf.mxu0
        %v2224 = vadd.f32 %v1702, %v2223
        %v2225 = vpop.f32.mrf.mxu0
        %v2226 = vadd.f32 %v1702, %v2225
        %2227 = vmatmul.bf16.gmra.mxu0 %v1582
        %v2228 = vpop.f32.mrf.mxu0
        %v2229 = vadd.f32 %v1702, %v2228
        %v2230 = vpop.f32.mrf.mxu0
        %v2231 = vadd.f32 %v1702, %v2230
        %2232 = vmatmul.bf16.gmra.mxu0 %v1584
        %v2233 = vpop.f32.mrf.mxu0
        %v2234 = vadd.f32 %v1702, %v2233
        %v2235 = vpop.f32.mrf.mxu0
        %v2236 = vadd.f32 %v1702, %v2235
        %2237 = vmatmul.bf16.gmra.mxu0 %v1586
        %v2238 = vpop.f32.mrf.mxu0
        %v2239 = vadd.f32 %v1702, %v2238
        %v2240 = vpop.f32.mrf.mxu0
        %v2241 = vadd.f32 %v1702, %v2240
        %2242 = vmatmul.bf16.gmra.mxu0 %v1588
        %v2243 = vpop.f32.mrf.mxu0
        %v2244 = vadd.f32 %v1702, %v2243
        %v2245 = vpop.f32.mrf.mxu0
        %v2246 = vadd.f32 %v1702, %v2245
        %2247 = vmatmul.bf16.gmra.mxu0 %v1590
        %v2248 = vpop.f32.mrf.mxu0
        %v2249 = vadd.f32 %v1702, %v2248
        %v2250 = vpop.f32.mrf.mxu0
        %v2251 = vadd.f32 %v1702, %v2250
        %2252 = vmatmul.bf16.gmra.mxu0 %v1592
        %v2253 = vpop.f32.mrf.mxu0
        %v2254 = vadd.f32 %v1702, %v2253
        %v2255 = vpop.f32.mrf.mxu0
        %v2256 = vadd.f32 %v1702, %v2255
        %2257 = vmatmul.bf16.gmra.mxu0 %v1594
        %v2258 = vpop.f32.mrf.mxu0
        %v2259 = vadd.f32 %v1702, %v2258
        %v2260 = vpop.f32.mrf.mxu0
        %v2261 = vadd.f32 %v1702, %v2260
        %2262 = vmatmul.bf16.gmra.mxu0 %v1596
        %v2263 = vpop.f32.mrf.mxu0
        %v2264 = vadd.f32 %v1702, %v2263
        %v2265 = vpop.f32.mrf.mxu0
        %v2266 = vadd.f32 %v1702, %v2265
        %2267 = vmatmul.bf16.gmra.mxu0 %v1598
        %v2268 = vpop.f32.mrf.mxu0
        %v2269 = vadd.f32 %v1702, %v2268
        %v2270 = vpop.f32.mrf.mxu0
        %v2271 = vadd.f32 %v1702, %v2270
        %2272 = vmatmul.bf16.gmra.mxu0 %v1600
        %v2273 = vpop.f32.mrf.mxu0
        %v2274 = vadd.f32 %v1702, %v2273
        %v2275 = vpop.f32.mrf.mxu0
        %v2276 = vadd.f32 %v1702, %v2275
        %2277 = vmatmul.bf16.gmra.mxu0 %v1602
        %v2278 = vpop.f32.mrf.mxu0
        %v2279 = vadd.f32 %v1702, %v2278
        %v2280 = vpop.f32.mrf.mxu0
        %v2281 = vadd.f32 %v1702, %v2280
        %2282 = vdwg.mxu0
        %2283 = vmatpush.bf16.msra.mxu0 %v2092
        %2284 = vmatpush.bf16.msra.mxu0 %v2086
        %2285 = vmatpush.bf16.msra.mxu0 %v2080
        %2286 = vmatpush.bf16.msra.mxu0 %v2074
        %2287 = vmatpush.bf16.msra.mxu0 %v2068
        %2288 = vmatpush.bf16.msra.mxu0 %v2062
        %2289 = vmatpush.bf16.msra.mxu0 %v2056
        %2290 = vmatpush.bf16.msra.mxu0 %v2050
        %2291 = vmatmul.bf16.gmra.mxu0 %v1573
        %v2292 = vpop.f32.mrf.mxu0
        %v2293 = vadd.f32 %v2204, %v2292
        %v2294 = vpop.f32.mrf.mxu0
        %v2295 = vadd.f32 %v2206, %v2294
        %2296 = vmatmul.bf16.gmra.mxu0 %v1575
        %v2297 = vpop.f32.mrf.mxu0
        %v2298 = vadd.f32 %v2209, %v2297
        %v2299 = vpop.f32.mrf.mxu0
        %v2300 = vadd.f32 %v2211, %v2299
        %2301 = vmatmul.bf16.gmra.mxu0 %v1577
        %v2302 = vpop.f32.mrf.mxu0
        %v2303 = vadd.f32 %v2214, %v2302
        %v2304 = vpop.f32.mrf.mxu0
        %v2305 = vadd.f32 %v2216, %v2304
        %2306 = vmatmul.bf16.gmra.mxu0 %v1579
        %v2307 = vpop.f32.mrf.mxu0
        %v2308 = vadd.f32 %v2219, %v2307
        %v2309 = vpop.f32.mrf.mxu0
        %v2310 = vadd.f32 %v2221, %v2309
        %2311 = vmatmul.bf16.gmra.mxu0 %v1581
        %v2312 = vpop.f32.mrf.mxu0
        %v2313 = vadd.f32 %v2224, %v2312
        %v2314 = vpop.f32.mrf.mxu0
        %v2315 = vadd.f32 %v2226, %v2314
        %2316 = vmatmul.bf16.gmra.mxu0 %v1583
        %v2317 = vpop.f32.mrf.mxu0
        %v2318 = vadd.f32 %v2229, %v2317
        %v2319 = vpop.f32.mrf.mxu0
        %v2320 = vadd.f32 %v2231, %v2319
        %2321 = vmatmul.bf16.gmra.mxu0 %v1585
        %v2322 = vpop.f32.mrf.mxu0
        %v2323 = vadd.f32 %v2234, %v2322
        %v2324 = vpop.f32.mrf.mxu0
        %v2325 = vadd.f32 %v2236, %v2324
        %2326 = vmatmul.bf16.gmra.mxu0 %v1587
        %v2327 = vpop.f32.mrf.mxu0
        %v2328 = vadd.f32 %v2239, %v2327
        %v2329 = vpop.f32.mrf.mxu0
        %v2330 = vadd.f32 %v2241, %v2329
        %2331 = vmatmul.bf16.gmra.mxu0 %v1589
        %v2332 = vpop.f32.mrf.mxu0
        %v2333 = vadd.f32 %v2244, %v2332
        %v2334 = vpop.f32.mrf.mxu0
        %v2335 = vadd.f32 %v2246, %v2334
        %2336 = vmatmul.bf16.gmra.mxu0 %v1591
        %v2337 = vpop.f32.mrf.mxu0
        %v2338 = vadd.f32 %v2249, %v2337
        %v2339 = vpop.f32.mrf.mxu0
        %v2340 = vadd.f32 %v2251, %v2339
        %2341 = vmatmul.bf16.gmra.mxu0 %v1593
        %v2342 = vpop.f32.mrf.mxu0
        %v2343 = vadd.f32 %v2254, %v2342
        %v2344 = vpop.f32.mrf.mxu0
        %v2345 = vadd.f32 %v2256, %v2344
        %2346 = vmatmul.bf16.gmra.mxu0 %v1595
        %v2347 = vpop.f32.mrf.mxu0
        %v2348 = vadd.f32 %v2259, %v2347
        %v2349 = vpop.f32.mrf.mxu0
        %v2350 = vadd.f32 %v2261, %v2349
        %2351 = vmatmul.bf16.gmra.mxu0 %v1597
        %v2352 = vpop.f32.mrf.mxu0
        %v2353 = vadd.f32 %v2264, %v2352
        %v2354 = vpop.f32.mrf.mxu0
        %v2355 = vadd.f32 %v2266, %v2354
        %2356 = vmatmul.bf16.gmra.mxu0 %v1599
        %v2357 = vpop.f32.mrf.mxu0
        %v2358 = vadd.f32 %v2269, %v2357
        %v2359 = vpop.f32.mrf.mxu0
        %v2360 = vadd.f32 %v2271, %v2359
        %2361 = vmatmul.bf16.gmra.mxu0 %v1601
        %v2362 = vpop.f32.mrf.mxu0
        %v2363 = vadd.f32 %v2274, %v2362
        %v2364 = vpop.f32.mrf.mxu0
        %v2365 = vadd.f32 %v2276, %v2364
        %2366 = vmatmul.bf16.gmra.mxu0 %v1603
        %v2367 = vpop.f32.mrf.mxu0
        %v2368 = vadd.f32 %v2279, %v2367
        %v2369 = vpop.f32.mrf.mxu0
        %v2370 = vadd.f32 %v2281, %v2369
        %2371 = vdwg.mxu0
        %2372 = vmatpush.bf16.msra.mxu0 %v2045
        %2373 = vmatpush.bf16.msra.mxu0 %v2039
        %2374 = vmatpush.bf16.msra.mxu0 %v2033
        %2375 = vmatpush.bf16.msra.mxu0 %v2027
        %2376 = vmatpush.bf16.msra.mxu0 %v2021
        %2377 = vmatpush.bf16.msra.mxu0 %v2015
        %2378 = vmatpush.bf16.msra.mxu0 %v2009
        %2379 = vmatpush.bf16.msra.mxu0 %v2003
        %2380 = vmatmul.bf16.gmra.mxu0 %v1572
        %v2381 = vpop.f32.mrf.mxu0
        %v2382 = vadd.f32 %v1703, %v2381
        %v2383 = vpop.f32.mrf.mxu0
        %v2384 = vadd.f32 %v1703, %v2383
        %2385 = vmatmul.bf16.gmra.mxu0 %v1574
        %v2386 = vpop.f32.mrf.mxu0
        %v2387 = vadd.f32 %v1703, %v2386
        %v2388 = vpop.f32.mrf.mxu0
        %v2389 = vadd.f32 %v1703, %v2388
        %2390 = vmatmul.bf16.gmra.mxu0 %v1576
        %v2391 = vpop.f32.mrf.mxu0
        %v2392 = vadd.f32 %v1703, %v2391
        %v2393 = vpop.f32.mrf.mxu0
        %v2394 = vadd.f32 %v1703, %v2393
        %2395 = vmatmul.bf16.gmra.mxu0 %v1578
        %v2396 = vpop.f32.mrf.mxu0
        %v2397 = vadd.f32 %v1703, %v2396
        %v2398 = vpop.f32.mrf.mxu0
        %v2399 = vadd.f32 %v1703, %v2398
        %2400 = vmatmul.bf16.gmra.mxu0 %v1580
        %v2401 = vpop.f32.mrf.mxu0
        %v2402 = vadd.f32 %v1703, %v2401
        %v2403 = vpop.f32.mrf.mxu0
        %v2404 = vadd.f32 %v1703, %v2403
        %2405 = vmatmul.bf16.gmra.mxu0 %v1582
        %v2406 = vpop.f32.mrf.mxu0
        %v2407 = vadd.f32 %v1703, %v2406
        %v2408 = vpop.f32.mrf.mxu0
        %v2409 = vadd.f32 %v1703, %v2408
        %2410 = vmatmul.bf16.gmra.mxu0 %v1584
        %v2411 = vpop.f32.mrf.mxu0
        %v2412 = vadd.f32 %v1703, %v2411
        %v2413 = vpop.f32.mrf.mxu0
        %v2414 = vadd.f32 %v1703, %v2413
        %2415 = vmatmul.bf16.gmra.mxu0 %v1586
        %v2416 = vpop.f32.mrf.mxu0
        %v2417 = vadd.f32 %v1703, %v2416
        %v2418 = vpop.f32.mrf.mxu0
        %v2419 = vadd.f32 %v1703, %v2418
        %2420 = vmatmul.bf16.gmra.mxu0 %v1588
        %v2421 = vpop.f32.mrf.mxu0
        %v2422 = vadd.f32 %v1703, %v2421
        %v2423 = vpop.f32.mrf.mxu0
        %v2424 = vadd.f32 %v1703, %v2423
        %2425 = vmatmul.bf16.gmra.mxu0 %v1590
        %v2426 = vpop.f32.mrf.mxu0
        %v2427 = vadd.f32 %v1703, %v2426
        %v2428 = vpop.f32.mrf.mxu0
        %v2429 = vadd.f32 %v1703, %v2428
        %2430 = vmatmul.bf16.gmra.mxu0 %v1592
        %v2431 = vpop.f32.mrf.mxu0
        %v2432 = vadd.f32 %v1703, %v2431
        %v2433 = vpop.f32.mrf.mxu0
        %v2434 = vadd.f32 %v1703, %v2433
        %2435 = vmatmul.bf16.gmra.mxu0 %v1594
        %v2436 = vpop.f32.mrf.mxu0
        %v2437 = vadd.f32 %v1703, %v2436
        %v2438 = vpop.f32.mrf.mxu0
        %v2439 = vadd.f32 %v1703, %v2438
        %2440 = vmatmul.bf16.gmra.mxu0 %v1596
        %v2441 = vpop.f32.mrf.mxu0
        %v2442 = vadd.f32 %v1703, %v2441
        %v2443 = vpop.f32.mrf.mxu0
        %v2444 = vadd.f32 %v1703, %v2443
        %2445 = vmatmul.bf16.gmra.mxu0 %v1598
        %v2446 = vpop.f32.mrf.mxu0
        %v2447 = vadd.f32 %v1703, %v2446
        %v2448 = vpop.f32.mrf.mxu0
        %v2449 = vadd.f32 %v1703, %v2448
        %2450 = vmatmul.bf16.gmra.mxu0 %v1600
        %v2451 = vpop.f32.mrf.mxu0
        %v2452 = vadd.f32 %v1703, %v2451
        %v2453 = vpop.f32.mrf.mxu0
        %v2454 = vadd.f32 %v1703, %v2453
        %2455 = vmatmul.bf16.gmra.mxu0 %v1602
        %v2456 = vpop.f32.mrf.mxu0
        %v2457 = vadd.f32 %v1703, %v2456
        %v2458 = vpop.f32.mrf.mxu0
        %v2459 = vadd.f32 %v1703, %v2458
        %2460 = vdwg.mxu0
        %2461 = vmatpush.bf16.msra.mxu0 %v2093
        %2462 = vmatpush.bf16.msra.mxu0 %v2087
        %2463 = vmatpush.bf16.msra.mxu0 %v2081
        %2464 = vmatpush.bf16.msra.mxu0 %v2075
        %2465 = vmatpush.bf16.msra.mxu0 %v2069
        %2466 = vmatpush.bf16.msra.mxu0 %v2063
        %2467 = vmatpush.bf16.msra.mxu0 %v2057
        %2468 = vmatpush.bf16.msra.mxu0 %v2051
        %2469 = vmatmul.bf16.gmra.mxu0 %v1573
        %v2470 = vpop.f32.mrf.mxu0
        %v2471 = vadd.f32 %v2382, %v2470
        %v2472 = vpop.f32.mrf.mxu0
        %v2473 = vadd.f32 %v2384, %v2472
        %2474 = vmatmul.bf16.gmra.mxu0 %v1575
        %v2475 = vpop.f32.mrf.mxu0
        %v2476 = vadd.f32 %v2387, %v2475
        %v2477 = vpop.f32.mrf.mxu0
        %v2478 = vadd.f32 %v2389, %v2477
        %2479 = vmatmul.bf16.gmra.mxu0 %v1577
        %v2480 = vpop.f32.mrf.mxu0
        %v2481 = vadd.f32 %v2392, %v2480
        %v2482 = vpop.f32.mrf.mxu0
        %v2483 = vadd.f32 %v2394, %v2482
        %2484 = vmatmul.bf16.gmra.mxu0 %v1579
        %v2485 = vpop.f32.mrf.mxu0
        %v2486 = vadd.f32 %v2397, %v2485
        %v2487 = vpop.f32.mrf.mxu0
        %v2488 = vadd.f32 %v2399, %v2487
        %2489 = vmatmul.bf16.gmra.mxu0 %v1581
        %v2490 = vpop.f32.mrf.mxu0
        %v2491 = vadd.f32 %v2402, %v2490
        %v2492 = vpop.f32.mrf.mxu0
        %v2493 = vadd.f32 %v2404, %v2492
        %2494 = vmatmul.bf16.gmra.mxu0 %v1583
        %v2495 = vpop.f32.mrf.mxu0
        %v2496 = vadd.f32 %v2407, %v2495
        %v2497 = vpop.f32.mrf.mxu0
        %v2498 = vadd.f32 %v2409, %v2497
        %2499 = vmatmul.bf16.gmra.mxu0 %v1585
        %v2500 = vpop.f32.mrf.mxu0
        %v2501 = vadd.f32 %v2412, %v2500
        %v2502 = vpop.f32.mrf.mxu0
        %v2503 = vadd.f32 %v2414, %v2502
        %2504 = vmatmul.bf16.gmra.mxu0 %v1587
        %v2505 = vpop.f32.mrf.mxu0
        %v2506 = vadd.f32 %v2417, %v2505
        %v2507 = vpop.f32.mrf.mxu0
        %v2508 = vadd.f32 %v2419, %v2507
        %2509 = vmatmul.bf16.gmra.mxu0 %v1589
        %v2510 = vpop.f32.mrf.mxu0
        %v2511 = vadd.f32 %v2422, %v2510
        %v2512 = vpop.f32.mrf.mxu0
        %v2513 = vadd.f32 %v2424, %v2512
        %2514 = vmatmul.bf16.gmra.mxu0 %v1591
        %v2515 = vpop.f32.mrf.mxu0
        %v2516 = vadd.f32 %v2427, %v2515
        %v2517 = vpop.f32.mrf.mxu0
        %v2518 = vadd.f32 %v2429, %v2517
        %2519 = vmatmul.bf16.gmra.mxu0 %v1593
        %v2520 = vpop.f32.mrf.mxu0
        %v2521 = vadd.f32 %v2432, %v2520
        %v2522 = vpop.f32.mrf.mxu0
        %v2523 = vadd.f32 %v2434, %v2522
        %2524 = vmatmul.bf16.gmra.mxu0 %v1595
        %v2525 = vpop.f32.mrf.mxu0
        %v2526 = vadd.f32 %v2437, %v2525
        %v2527 = vpop.f32.mrf.mxu0
        %v2528 = vadd.f32 %v2439, %v2527
        %2529 = vmatmul.bf16.gmra.mxu0 %v1597
        %v2530 = vpop.f32.mrf.mxu0
        %v2531 = vadd.f32 %v2442, %v2530
        %v2532 = vpop.f32.mrf.mxu0
        %v2533 = vadd.f32 %v2444, %v2532
        %2534 = vmatmul.bf16.gmra.mxu0 %v1599
        %v2535 = vpop.f32.mrf.mxu0
        %v2536 = vadd.f32 %v2447, %v2535
        %v2537 = vpop.f32.mrf.mxu0
        %v2538 = vadd.f32 %v2449, %v2537
        %2539 = vmatmul.bf16.gmra.mxu0 %v1601
        %v2540 = vpop.f32.mrf.mxu0
        %v2541 = vadd.f32 %v2452, %v2540
        %v2542 = vpop.f32.mrf.mxu0
        %v2543 = vadd.f32 %v2454, %v2542
        %2544 = vmatmul.bf16.gmra.mxu0 %v1603
        %v2545 = vpop.f32.mrf.mxu0
        %v2546 = vadd.f32 %v2457, %v2545
        %v2547 = vpop.f32.mrf.mxu0
        %v2548 = vadd.f32 %v2459, %v2547
        %2549 = vdwg.mxu0
        %2550 = vmatpush.bf16.msra.mxu0 %v2046
        %2551 = vmatpush.bf16.msra.mxu0 %v2040
        %2552 = vmatpush.bf16.msra.mxu0 %v2034
        %2553 = vmatpush.bf16.msra.mxu0 %v2028
        %2554 = vmatpush.bf16.msra.mxu0 %v2022
        %2555 = vmatpush.bf16.msra.mxu0 %v2016
        %2556 = vmatpush.bf16.msra.mxu0 %v2010
        %2557 = vmatpush.bf16.msra.mxu0 %v2004
        %2558 = vmatmul.bf16.gmra.mxu0 %v1572
        %v2559 = vpop.f32.mrf.mxu0
        %v2560 = vadd.f32 %v1704, %v2559
        %v2561 = vpop.f32.mrf.mxu0
        %v2562 = vadd.f32 %v1704, %v2561
        %2563 = vmatmul.bf16.gmra.mxu0 %v1574
        %v2564 = vpop.f32.mrf.mxu0
        %v2565 = vadd.f32 %v1704, %v2564
        %v2566 = vpop.f32.mrf.mxu0
        %v2567 = vadd.f32 %v1704, %v2566
        %2568 = vmatmul.bf16.gmra.mxu0 %v1576
        %v2569 = vpop.f32.mrf.mxu0
        %v2570 = vadd.f32 %v1704, %v2569
        %v2571 = vpop.f32.mrf.mxu0
        %v2572 = vadd.f32 %v1704, %v2571
        %2573 = vmatmul.bf16.gmra.mxu0 %v1578
        %v2574 = vpop.f32.mrf.mxu0
        %v2575 = vadd.f32 %v1704, %v2574
        %v2576 = vpop.f32.mrf.mxu0
        %v2577 = vadd.f32 %v1704, %v2576
        %2578 = vmatmul.bf16.gmra.mxu0 %v1580
        %v2579 = vpop.f32.mrf.mxu0
        %v2580 = vadd.f32 %v1704, %v2579
        %v2581 = vpop.f32.mrf.mxu0
        %v2582 = vadd.f32 %v1704, %v2581
        %2583 = vmatmul.bf16.gmra.mxu0 %v1582
        %v2584 = vpop.f32.mrf.mxu0
        %v2585 = vadd.f32 %v1704, %v2584
        %v2586 = vpop.f32.mrf.mxu0
        %v2587 = vadd.f32 %v1704, %v2586
        %2588 = vmatmul.bf16.gmra.mxu0 %v1584
        %v2589 = vpop.f32.mrf.mxu0
        %v2590 = vadd.f32 %v1704, %v2589
        %v2591 = vpop.f32.mrf.mxu0
        %v2592 = vadd.f32 %v1704, %v2591
        %2593 = vmatmul.bf16.gmra.mxu0 %v1586
        %v2594 = vpop.f32.mrf.mxu0
        %v2595 = vadd.f32 %v1704, %v2594
        %v2596 = vpop.f32.mrf.mxu0
        %v2597 = vadd.f32 %v1704, %v2596
        %2598 = vmatmul.bf16.gmra.mxu0 %v1588
        %v2599 = vpop.f32.mrf.mxu0
        %v2600 = vadd.f32 %v1704, %v2599
        %v2601 = vpop.f32.mrf.mxu0
        %v2602 = vadd.f32 %v1704, %v2601
        %2603 = vmatmul.bf16.gmra.mxu0 %v1590
        %v2604 = vpop.f32.mrf.mxu0
        %v2605 = vadd.f32 %v1704, %v2604
        %v2606 = vpop.f32.mrf.mxu0
        %v2607 = vadd.f32 %v1704, %v2606
        %2608 = vmatmul.bf16.gmra.mxu0 %v1592
        %v2609 = vpop.f32.mrf.mxu0
        %v2610 = vadd.f32 %v1704, %v2609
        %v2611 = vpop.f32.mrf.mxu0
        %v2612 = vadd.f32 %v1704, %v2611
        %2613 = vmatmul.bf16.gmra.mxu0 %v1594
        %v2614 = vpop.f32.mrf.mxu0
        %v2615 = vadd.f32 %v1704, %v2614
        %v2616 = vpop.f32.mrf.mxu0
        %v2617 = vadd.f32 %v1704, %v2616
        %2618 = vmatmul.bf16.gmra.mxu0 %v1596
        %v2619 = vpop.f32.mrf.mxu0
        %v2620 = vadd.f32 %v1704, %v2619
        %v2621 = vpop.f32.mrf.mxu0
        %v2622 = vadd.f32 %v1704, %v2621
        %2623 = vmatmul.bf16.gmra.mxu0 %v1598
        %v2624 = vpop.f32.mrf.mxu0
        %v2625 = vadd.f32 %v1704, %v2624
        %v2626 = vpop.f32.mrf.mxu0
        %v2627 = vadd.f32 %v1704, %v2626
        %2628 = vmatmul.bf16.gmra.mxu0 %v1600
        %v2629 = vpop.f32.mrf.mxu0
        %v2630 = vadd.f32 %v1704, %v2629
        %v2631 = vpop.f32.mrf.mxu0
        %v2632 = vadd.f32 %v1704, %v2631
        %2633 = vmatmul.bf16.gmra.mxu0 %v1602
        %v2634 = vpop.f32.mrf.mxu0
        %v2635 = vadd.f32 %v1704, %v2634
        %v2636 = vpop.f32.mrf.mxu0
        %v2637 = vadd.f32 %v1704, %v2636
        %2638 = vdwg.mxu0
        %2639 = vmatpush.bf16.msra.mxu0 %v2094
        %2640 = vmatpush.bf16.msra.mxu0 %v2088
        %2641 = vmatpush.bf16.msra.mxu0 %v2082
        %2642 = vmatpush.bf16.msra.mxu0 %v2076
        %2643 = vmatpush.bf16.msra.mxu0 %v2070
        %2644 = vmatpush.bf16.msra.mxu0 %v2064
        %2645 = vmatpush.bf16.msra.mxu0 %v2058
        %2646 = vmatpush.bf16.msra.mxu0 %v2052
        %2647 = vmatmul.bf16.gmra.mxu0 %v1573
        %v2648 = vpop.f32.mrf.mxu0
        %v2649 = vadd.f32 %v2560, %v2648
        %v2650 = vpop.f32.mrf.mxu0
        %v2651 = vadd.f32 %v2562, %v2650
        %2652 = vmatmul.bf16.gmra.mxu0 %v1575
        %v2653 = vpop.f32.mrf.mxu0
        %v2654 = vadd.f32 %v2565, %v2653
        %v2655 = vpop.f32.mrf.mxu0
        %v2656 = vadd.f32 %v2567, %v2655
        %2657 = vmatmul.bf16.gmra.mxu0 %v1577
        %v2658 = vpop.f32.mrf.mxu0
        %v2659 = vadd.f32 %v2570, %v2658
        %v2660 = vpop.f32.mrf.mxu0
        %v2661 = vadd.f32 %v2572, %v2660
        %2662 = vmatmul.bf16.gmra.mxu0 %v1579
        %v2663 = vpop.f32.mrf.mxu0
        %v2664 = vadd.f32 %v2575, %v2663
        %v2665 = vpop.f32.mrf.mxu0
        %v2666 = vadd.f32 %v2577, %v2665
        %2667 = vmatmul.bf16.gmra.mxu0 %v1581
        %v2668 = vpop.f32.mrf.mxu0
        %v2669 = vadd.f32 %v2580, %v2668
        %v2670 = vpop.f32.mrf.mxu0
        %v2671 = vadd.f32 %v2582, %v2670
        %2672 = vmatmul.bf16.gmra.mxu0 %v1583
        %v2673 = vpop.f32.mrf.mxu0
        %v2674 = vadd.f32 %v2585, %v2673
        %v2675 = vpop.f32.mrf.mxu0
        %v2676 = vadd.f32 %v2587, %v2675
        %2677 = vmatmul.bf16.gmra.mxu0 %v1585
        %v2678 = vpop.f32.mrf.mxu0
        %v2679 = vadd.f32 %v2590, %v2678
        %v2680 = vpop.f32.mrf.mxu0
        %v2681 = vadd.f32 %v2592, %v2680
        %2682 = vmatmul.bf16.gmra.mxu0 %v1587
        %v2683 = vpop.f32.mrf.mxu0
        %v2684 = vadd.f32 %v2595, %v2683
        %v2685 = vpop.f32.mrf.mxu0
        %v2686 = vadd.f32 %v2597, %v2685
        %2687 = vmatmul.bf16.gmra.mxu0 %v1589
        %v2688 = vpop.f32.mrf.mxu0
        %v2689 = vadd.f32 %v2600, %v2688
        %v2690 = vpop.f32.mrf.mxu0
        %v2691 = vadd.f32 %v2602, %v2690
        %2692 = vmatmul.bf16.gmra.mxu0 %v1591
        %v2693 = vpop.f32.mrf.mxu0
        %v2694 = vadd.f32 %v2605, %v2693
        %v2695 = vpop.f32.mrf.mxu0
        %v2696 = vadd.f32 %v2607, %v2695
        %2697 = vmatmul.bf16.gmra.mxu0 %v1593
        %v2698 = vpop.f32.mrf.mxu0
        %v2699 = vadd.f32 %v2610, %v2698
        %v2700 = vpop.f32.mrf.mxu0
        %v2701 = vadd.f32 %v2612, %v2700
        %2702 = vmatmul.bf16.gmra.mxu0 %v1595
        %v2703 = vpop.f32.mrf.mxu0
        %v2704 = vadd.f32 %v2615, %v2703
        %v2705 = vpop.f32.mrf.mxu0
        %v2706 = vadd.f32 %v2617, %v2705
        %2707 = vmatmul.bf16.gmra.mxu0 %v1597
        %v2708 = vpop.f32.mrf.mxu0
        %v2709 = vadd.f32 %v2620, %v2708
        %v2710 = vpop.f32.mrf.mxu0
        %v2711 = vadd.f32 %v2622, %v2710
        %2712 = vmatmul.bf16.gmra.mxu0 %v1599
        %v2713 = vpop.f32.mrf.mxu0
        %v2714 = vadd.f32 %v2625, %v2713
        %v2715 = vpop.f32.mrf.mxu0
        %v2716 = vadd.f32 %v2627, %v2715
        %2717 = vmatmul.bf16.gmra.mxu0 %v1601
        %v2718 = vpop.f32.mrf.mxu0
        %v2719 = vadd.f32 %v2630, %v2718
        %v2720 = vpop.f32.mrf.mxu0
        %v2721 = vadd.f32 %v2632, %v2720
        %2722 = vmatmul.bf16.gmra.mxu0 %v1603
        %v2723 = vpop.f32.mrf.mxu0
        %v2724 = vadd.f32 %v2635, %v2723
        %v2725 = vpop.f32.mrf.mxu0
        %v2726 = vadd.f32 %v2637, %v2725
        %2727 = vdwg.mxu0
        %2728 = vmatpush.bf16.msra.mxu0 %v2047
        %2729 = vmatpush.bf16.msra.mxu0 %v2041
        %2730 = vmatpush.bf16.msra.mxu0 %v2035
        %2731 = vmatpush.bf16.msra.mxu0 %v2029
        %2732 = vmatpush.bf16.msra.mxu0 %v2023
        %2733 = vmatpush.bf16.msra.mxu0 %v2017
        %2734 = vmatpush.bf16.msra.mxu0 %v2011
        %2735 = vmatpush.bf16.msra.mxu0 %v2005
        %2736 = vmatmul.bf16.gmra.mxu0 %v1572
        %v2737 = vpop.f32.mrf.mxu0
        %v2738 = vadd.f32 %v1705, %v2737
        %v2739 = vpop.f32.mrf.mxu0
        %v2740 = vadd.f32 %v1705, %v2739
        %2741 = vmatmul.bf16.gmra.mxu0 %v1574
        %v2742 = vpop.f32.mrf.mxu0
        %v2743 = vadd.f32 %v1705, %v2742
        %v2744 = vpop.f32.mrf.mxu0
        %v2745 = vadd.f32 %v1705, %v2744
        %2746 = vmatmul.bf16.gmra.mxu0 %v1576
        %v2747 = vpop.f32.mrf.mxu0
        %v2748 = vadd.f32 %v1705, %v2747
        %v2749 = vpop.f32.mrf.mxu0
        %v2750 = vadd.f32 %v1705, %v2749
        %2751 = vmatmul.bf16.gmra.mxu0 %v1578
        %v2752 = vpop.f32.mrf.mxu0
        %v2753 = vadd.f32 %v1705, %v2752
        %v2754 = vpop.f32.mrf.mxu0
        %v2755 = vadd.f32 %v1705, %v2754
        %2756 = vmatmul.bf16.gmra.mxu0 %v1580
        %v2757 = vpop.f32.mrf.mxu0
        %v2758 = vadd.f32 %v1705, %v2757
        %v2759 = vpop.f32.mrf.mxu0
        %v2760 = vadd.f32 %v1705, %v2759
        %2761 = vmatmul.bf16.gmra.mxu0 %v1582
        %v2762 = vpop.f32.mrf.mxu0
        %v2763 = vadd.f32 %v1705, %v2762
        %v2764 = vpop.f32.mrf.mxu0
        %v2765 = vadd.f32 %v1705, %v2764
        %2766 = vmatmul.bf16.gmra.mxu0 %v1584
        %v2767 = vpop.f32.mrf.mxu0
        %v2768 = vadd.f32 %v1705, %v2767
        %v2769 = vpop.f32.mrf.mxu0
        %v2770 = vadd.f32 %v1705, %v2769
        %2771 = vmatmul.bf16.gmra.mxu0 %v1586
        %v2772 = vpop.f32.mrf.mxu0
        %v2773 = vadd.f32 %v1705, %v2772
        %v2774 = vpop.f32.mrf.mxu0
        %v2775 = vadd.f32 %v1705, %v2774
        %2776 = vmatmul.bf16.gmra.mxu0 %v1588
        %v2777 = vpop.f32.mrf.mxu0
        %v2778 = vadd.f32 %v1705, %v2777
        %v2779 = vpop.f32.mrf.mxu0
        %v2780 = vadd.f32 %v1705, %v2779
        %2781 = vmatmul.bf16.gmra.mxu0 %v1590
        %v2782 = vpop.f32.mrf.mxu0
        %v2783 = vadd.f32 %v1705, %v2782
        %v2784 = vpop.f32.mrf.mxu0
        %v2785 = vadd.f32 %v1705, %v2784
        %2786 = vmatmul.bf16.gmra.mxu0 %v1592
        %v2787 = vpop.f32.mrf.mxu0
        %v2788 = vadd.f32 %v1705, %v2787
        %v2789 = vpop.f32.mrf.mxu0
        %v2790 = vadd.f32 %v1705, %v2789
        %2791 = vmatmul.bf16.gmra.mxu0 %v1594
        %v2792 = vpop.f32.mrf.mxu0
        %v2793 = vadd.f32 %v1705, %v2792
        %v2794 = vpop.f32.mrf.mxu0
        %v2795 = vadd.f32 %v1705, %v2794
        %2796 = vmatmul.bf16.gmra.mxu0 %v1596
        %v2797 = vpop.f32.mrf.mxu0
        %v2798 = vadd.f32 %v1705, %v2797
        %v2799 = vpop.f32.mrf.mxu0
        %v2800 = vadd.f32 %v1705, %v2799
        %2801 = vmatmul.bf16.gmra.mxu0 %v1598
        %v2802 = vpop.f32.mrf.mxu0
        %v2803 = vadd.f32 %v1705, %v2802
        %v2804 = vpop.f32.mrf.mxu0
        %v2805 = vadd.f32 %v1705, %v2804
        %2806 = vmatmul.bf16.gmra.mxu0 %v1600
        %v2807 = vpop.f32.mrf.mxu0
        %v2808 = vadd.f32 %v1705, %v2807
        %v2809 = vpop.f32.mrf.mxu0
        %v2810 = vadd.f32 %v1705, %v2809
        %2811 = vmatmul.bf16.gmra.mxu0 %v1602
        %v2812 = vpop.f32.mrf.mxu0
        %v2813 = vadd.f32 %v1705, %v2812
        %v2814 = vpop.f32.mrf.mxu0
        %v2815 = vadd.f32 %v1705, %v2814
        %2816 = vdwg.mxu0
        %2817 = vmatpush.bf16.msra.mxu0 %v2095
        %2818 = vmatpush.bf16.msra.mxu0 %v2089
        %2819 = vmatpush.bf16.msra.mxu0 %v2083
        %2820 = vmatpush.bf16.msra.mxu0 %v2077
        %2821 = vmatpush.bf16.msra.mxu0 %v2071
        %2822 = vmatpush.bf16.msra.mxu0 %v2065
        %2823 = vmatpush.bf16.msra.mxu0 %v2059
        %2824 = vmatpush.bf16.msra.mxu0 %v2053
        %2825 = vmatmul.bf16.gmra.mxu0 %v1573
        %v2826 = vpop.f32.mrf.mxu0
        %v2827 = vadd.f32 %v2738, %v2826
        %v2828 = vpop.f32.mrf.mxu0
        %v2829 = vadd.f32 %v2740, %v2828
        %2830 = vmatmul.bf16.gmra.mxu0 %v1575
        %v2831 = vpop.f32.mrf.mxu0
        %v2832 = vadd.f32 %v2743, %v2831
        %v2833 = vpop.f32.mrf.mxu0
        %v2834 = vadd.f32 %v2745, %v2833
        %2835 = vmatmul.bf16.gmra.mxu0 %v1577
        %v2836 = vpop.f32.mrf.mxu0
        %v2837 = vadd.f32 %v2748, %v2836
        %v2838 = vpop.f32.mrf.mxu0
        %v2839 = vadd.f32 %v2750, %v2838
        %2840 = vmatmul.bf16.gmra.mxu0 %v1579
        %v2841 = vpop.f32.mrf.mxu0
        %v2842 = vadd.f32 %v2753, %v2841
        %v2843 = vpop.f32.mrf.mxu0
        %v2844 = vadd.f32 %v2755, %v2843
        %2845 = vmatmul.bf16.gmra.mxu0 %v1581
        %v2846 = vpop.f32.mrf.mxu0
        %v2847 = vadd.f32 %v2758, %v2846
        %v2848 = vpop.f32.mrf.mxu0
        %v2849 = vadd.f32 %v2760, %v2848
        %2850 = vmatmul.bf16.gmra.mxu0 %v1583
        %v2851 = vpop.f32.mrf.mxu0
        %v2852 = vadd.f32 %v2763, %v2851
        %v2853 = vpop.f32.mrf.mxu0
        %v2854 = vadd.f32 %v2765, %v2853
        %2855 = vmatmul.bf16.gmra.mxu0 %v1585
        %v2856 = vpop.f32.mrf.mxu0
        %v2857 = vadd.f32 %v2768, %v2856
        %v2858 = vpop.f32.mrf.mxu0
        %v2859 = vadd.f32 %v2770, %v2858
        %2860 = vmatmul.bf16.gmra.mxu0 %v1587
        %v2861 = vpop.f32.mrf.mxu0
        %v2862 = vadd.f32 %v2773, %v2861
        %v2863 = vpop.f32.mrf.mxu0
        %v2864 = vadd.f32 %v2775, %v2863
        %2865 = vmatmul.bf16.gmra.mxu0 %v1589
        %v2866 = vpop.f32.mrf.mxu0
        %v2867 = vadd.f32 %v2778, %v2866
        %v2868 = vpop.f32.mrf.mxu0
        %v2869 = vadd.f32 %v2780, %v2868
        %2870 = vmatmul.bf16.gmra.mxu0 %v1591
        %v2871 = vpop.f32.mrf.mxu0
        %v2872 = vadd.f32 %v2783, %v2871
        %v2873 = vpop.f32.mrf.mxu0
        %v2874 = vadd.f32 %v2785, %v2873
        %2875 = vmatmul.bf16.gmra.mxu0 %v1593
        %v2876 = vpop.f32.mrf.mxu0
        %v2877 = vadd.f32 %v2788, %v2876
        %v2878 = vpop.f32.mrf.mxu0
        %v2879 = vadd.f32 %v2790, %v2878
        %2880 = vmatmul.bf16.gmra.mxu0 %v1595
        %v2881 = vpop.f32.mrf.mxu0
        %v2882 = vadd.f32 %v2793, %v2881
        %v2883 = vpop.f32.mrf.mxu0
        %v2884 = vadd.f32 %v2795, %v2883
        %2885 = vmatmul.bf16.gmra.mxu0 %v1597
        %v2886 = vpop.f32.mrf.mxu0
        %v2887 = vadd.f32 %v2798, %v2886
        %v2888 = vpop.f32.mrf.mxu0
        %v2889 = vadd.f32 %v2800, %v2888
        %2890 = vmatmul.bf16.gmra.mxu0 %v1599
        %v2891 = vpop.f32.mrf.mxu0
        %v2892 = vadd.f32 %v2803, %v2891
        %v2893 = vpop.f32.mrf.mxu0
        %v2894 = vadd.f32 %v2805, %v2893
        %2895 = vmatmul.bf16.gmra.mxu0 %v1601
        %v2896 = vpop.f32.mrf.mxu0
        %v2897 = vadd.f32 %v2808, %v2896
        %v2898 = vpop.f32.mrf.mxu0
        %v2899 = vadd.f32 %v2810, %v2898
        %2900 = vmatmul.bf16.gmra.mxu0 %v1603
        %v2901 = vpop.f32.mrf.mxu0
        %v2902 = vadd.f32 %v2813, %v2901
        %v2903 = vpop.f32.mrf.mxu0
        %v2904 = vadd.f32 %v2815, %v2903
        %2905 = vdwg.mxu0
        %2906 = vmatpush.bf16.msra.mxu0 %v2048
        %2907 = vmatpush.bf16.msra.mxu0 %v2042
        %2908 = vmatpush.bf16.msra.mxu0 %v2036
        %2909 = vmatpush.bf16.msra.mxu0 %v2030
        %2910 = vmatpush.bf16.msra.mxu0 %v2024
        %2911 = vmatpush.bf16.msra.mxu0 %v2018
        %2912 = vmatpush.bf16.msra.mxu0 %v2012
        %2913 = vmatpush.bf16.msra.mxu0 %v2006
        %2914 = vmatmul.bf16.gmra.mxu0 %v1572
        %v2915 = vpop.f32.mrf.mxu0
        %v2916 = vadd.f32 %v1706, %v2915
        %v2917 = vpop.f32.mrf.mxu0
        %v2918 = vadd.f32 %v1706, %v2917
        %2919 = vmatmul.bf16.gmra.mxu0 %v1574
        %v2920 = vpop.f32.mrf.mxu0
        %v2921 = vadd.f32 %v1706, %v2920
        %v2922 = vpop.f32.mrf.mxu0
        %v2923 = vadd.f32 %v1706, %v2922
        %2924 = vmatmul.bf16.gmra.mxu0 %v1576
        %v2925 = vpop.f32.mrf.mxu0
        %v2926 = vadd.f32 %v1706, %v2925
        %v2927 = vpop.f32.mrf.mxu0
        %v2928 = vadd.f32 %v1706, %v2927
        %2929 = vmatmul.bf16.gmra.mxu0 %v1578
        %v2930 = vpop.f32.mrf.mxu0
        %v2931 = vadd.f32 %v1706, %v2930
        %v2932 = vpop.f32.mrf.mxu0
        %v2933 = vadd.f32 %v1706, %v2932
        %2934 = vmatmul.bf16.gmra.mxu0 %v1580
        %v2935 = vpop.f32.mrf.mxu0
        %v2936 = vadd.f32 %v1706, %v2935
        %v2937 = vpop.f32.mrf.mxu0
        %v2938 = vadd.f32 %v1706, %v2937
        %2939 = vmatmul.bf16.gmra.mxu0 %v1582
        %v2940 = vpop.f32.mrf.mxu0
        %v2941 = vadd.f32 %v1706, %v2940
        %v2942 = vpop.f32.mrf.mxu0
        %v2943 = vadd.f32 %v1706, %v2942
        %2944 = vmatmul.bf16.gmra.mxu0 %v1584
        %v2945 = vpop.f32.mrf.mxu0
        %v2946 = vadd.f32 %v1706, %v2945
        %v2947 = vpop.f32.mrf.mxu0
        %v2948 = vadd.f32 %v1706, %v2947
        %2949 = vmatmul.bf16.gmra.mxu0 %v1586
        %v2950 = vpop.f32.mrf.mxu0
        %v2951 = vadd.f32 %v1706, %v2950
        %v2952 = vpop.f32.mrf.mxu0
        %v2953 = vadd.f32 %v1706, %v2952
        %2954 = vmatmul.bf16.gmra.mxu0 %v1588
        %v2955 = vpop.f32.mrf.mxu0
        %v2956 = vadd.f32 %v1706, %v2955
        %v2957 = vpop.f32.mrf.mxu0
        %v2958 = vadd.f32 %v1706, %v2957
        %2959 = vmatmul.bf16.gmra.mxu0 %v1590
        %v2960 = vpop.f32.mrf.mxu0
        %v2961 = vadd.f32 %v1706, %v2960
        %v2962 = vpop.f32.mrf.mxu0
        %v2963 = vadd.f32 %v1706, %v2962
        %2964 = vmatmul.bf16.gmra.mxu0 %v1592
        %v2965 = vpop.f32.mrf.mxu0
        %v2966 = vadd.f32 %v1706, %v2965
        %v2967 = vpop.f32.mrf.mxu0
        %v2968 = vadd.f32 %v1706, %v2967
        %2969 = vmatmul.bf16.gmra.mxu0 %v1594
        %v2970 = vpop.f32.mrf.mxu0
        %v2971 = vadd.f32 %v1706, %v2970
        %v2972 = vpop.f32.mrf.mxu0
        %v2973 = vadd.f32 %v1706, %v2972
        %2974 = vmatmul.bf16.gmra.mxu0 %v1596
        %v2975 = vpop.f32.mrf.mxu0
        %v2976 = vadd.f32 %v1706, %v2975
        %v2977 = vpop.f32.mrf.mxu0
        %v2978 = vadd.f32 %v1706, %v2977
        %2979 = vmatmul.bf16.gmra.mxu0 %v1598
        %v2980 = vpop.f32.mrf.mxu0
        %v2981 = vadd.f32 %v1706, %v2980
        %v2982 = vpop.f32.mrf.mxu0
        %v2983 = vadd.f32 %v1706, %v2982
        %2984 = vmatmul.bf16.gmra.mxu0 %v1600
        %v2985 = vpop.f32.mrf.mxu0
        %v2986 = vadd.f32 %v1706, %v2985
        %v2987 = vpop.f32.mrf.mxu0
        %v2988 = vadd.f32 %v1706, %v2987
        %2989 = vmatmul.bf16.gmra.mxu0 %v1602
        %v2990 = vpop.f32.mrf.mxu0
        %v2991 = vadd.f32 %v1706, %v2990
        %v2992 = vpop.f32.mrf.mxu0
        %v2993 = vadd.f32 %v1706, %v2992
        %2994 = vdwg.mxu0
        %2995 = vmatpush.bf16.msra.mxu0 %v2096
        %2996 = vmatpush.bf16.msra.mxu0 %v2090
        %2997 = vmatpush.bf16.msra.mxu0 %v2084
        %2998 = vmatpush.bf16.msra.mxu0 %v2078
        %2999 = vmatpush.bf16.msra.mxu0 %v2072
        %3000 = vmatpush.bf16.msra.mxu0 %v2066
        %3001 = vmatpush.bf16.msra.mxu0 %v2060
        %3002 = vmatpush.bf16.msra.mxu0 %v2054
        %3003 = vmatmul.bf16.gmra.mxu0 %v1573
        %v3004 = vpop.f32.mrf.mxu0
        %v3005 = vadd.f32 %v2916, %v3004
        %v3006 = vpop.f32.mrf.mxu0
        %v3007 = vadd.f32 %v2918, %v3006
        %3008 = vmatmul.bf16.gmra.mxu0 %v1575
        %v3009 = vpop.f32.mrf.mxu0
        %v3010 = vadd.f32 %v2921, %v3009
        %v3011 = vpop.f32.mrf.mxu0
        %v3012 = vadd.f32 %v2923, %v3011
        %3013 = vmatmul.bf16.gmra.mxu0 %v1577
        %v3014 = vpop.f32.mrf.mxu0
        %v3015 = vadd.f32 %v2926, %v3014
        %v3016 = vpop.f32.mrf.mxu0
        %v3017 = vadd.f32 %v2928, %v3016
        %3018 = vmatmul.bf16.gmra.mxu0 %v1579
        %v3019 = vpop.f32.mrf.mxu0
        %v3020 = vadd.f32 %v2931, %v3019
        %v3021 = vpop.f32.mrf.mxu0
        %v3022 = vadd.f32 %v2933, %v3021
        %3023 = vmatmul.bf16.gmra.mxu0 %v1581
        %v3024 = vpop.f32.mrf.mxu0
        %v3025 = vadd.f32 %v2936, %v3024
        %v3026 = vpop.f32.mrf.mxu0
        %v3027 = vadd.f32 %v2938, %v3026
        %3028 = vmatmul.bf16.gmra.mxu0 %v1583
        %v3029 = vpop.f32.mrf.mxu0
        %v3030 = vadd.f32 %v2941, %v3029
        %v3031 = vpop.f32.mrf.mxu0
        %v3032 = vadd.f32 %v2943, %v3031
        %3033 = vmatmul.bf16.gmra.mxu0 %v1585
        %v3034 = vpop.f32.mrf.mxu0
        %v3035 = vadd.f32 %v2946, %v3034
        %v3036 = vpop.f32.mrf.mxu0
        %v3037 = vadd.f32 %v2948, %v3036
        %3038 = vmatmul.bf16.gmra.mxu0 %v1587
        %v3039 = vpop.f32.mrf.mxu0
        %v3040 = vadd.f32 %v2951, %v3039
        %v3041 = vpop.f32.mrf.mxu0
        %v3042 = vadd.f32 %v2953, %v3041
        %3043 = vmatmul.bf16.gmra.mxu0 %v1589
        %v3044 = vpop.f32.mrf.mxu0
        %v3045 = vadd.f32 %v2956, %v3044
        %v3046 = vpop.f32.mrf.mxu0
        %v3047 = vadd.f32 %v2958, %v3046
        %3048 = vmatmul.bf16.gmra.mxu0 %v1591
        %v3049 = vpop.f32.mrf.mxu0
        %v3050 = vadd.f32 %v2961, %v3049
        %v3051 = vpop.f32.mrf.mxu0
        %v3052 = vadd.f32 %v2963, %v3051
        %3053 = vmatmul.bf16.gmra.mxu0 %v1593
        %v3054 = vpop.f32.mrf.mxu0
        %v3055 = vadd.f32 %v2966, %v3054
        %v3056 = vpop.f32.mrf.mxu0
        %v3057 = vadd.f32 %v2968, %v3056
        %3058 = vmatmul.bf16.gmra.mxu0 %v1595
        %v3059 = vpop.f32.mrf.mxu0
        %v3060 = vadd.f32 %v2971, %v3059
        %v3061 = vpop.f32.mrf.mxu0
        %v3062 = vadd.f32 %v2973, %v3061
        %3063 = vmatmul.bf16.gmra.mxu0 %v1597
        %v3064 = vpop.f32.mrf.mxu0
        %v3065 = vadd.f32 %v2976, %v3064
        %v3066 = vpop.f32.mrf.mxu0
        %v3067 = vadd.f32 %v2978, %v3066
        %3068 = vmatmul.bf16.gmra.mxu0 %v1599
        %v3069 = vpop.f32.mrf.mxu0
        %v3070 = vadd.f32 %v2981, %v3069
        %v3071 = vpop.f32.mrf.mxu0
        %v3072 = vadd.f32 %v2983, %v3071
        %3073 = vmatmul.bf16.gmra.mxu0 %v1601
        %v3074 = vpop.f32.mrf.mxu0
        %v3075 = vadd.f32 %v2986, %v3074
        %v3076 = vpop.f32.mrf.mxu0
        %v3077 = vadd.f32 %v2988, %v3076
        %3078 = vmatmul.bf16.gmra.mxu0 %v1603
        %v3079 = vpop.f32.mrf.mxu0
        %v3080 = vadd.f32 %v2991, %v3079
        %v3081 = vpop.f32.mrf.mxu0
        %v3082 = vadd.f32 %v2993, %v3081
        %3083 = vdwg.mxu0
        %3084 = vmatpush.bf16.msra.mxu0 %v2049
        %3085 = vmatpush.bf16.msra.mxu0 %v2043
        %3086 = vmatpush.bf16.msra.mxu0 %v2037
        %3087 = vmatpush.bf16.msra.mxu0 %v2031
        %3088 = vmatpush.bf16.msra.mxu0 %v2025
        %3089 = vmatpush.bf16.msra.mxu0 %v2019
        %3090 = vmatpush.bf16.msra.mxu0 %v2013
        %3091 = vmatpush.bf16.msra.mxu0 %v2007
        %3092 = vmatmul.bf16.gmra.mxu0 %v1572
        %v3093 = vpop.f32.mrf.mxu0
        %v3094 = vadd.f32 %v1707, %v3093
        %v3095 = vpop.f32.mrf.mxu0
        %v3096 = vadd.f32 %v1707, %v3095
        %3097 = vmatmul.bf16.gmra.mxu0 %v1574
        %v3098 = vpop.f32.mrf.mxu0
        %v3099 = vadd.f32 %v1707, %v3098
        %v3100 = vpop.f32.mrf.mxu0
        %v3101 = vadd.f32 %v1707, %v3100
        %3102 = vmatmul.bf16.gmra.mxu0 %v1576
        %v3103 = vpop.f32.mrf.mxu0
        %v3104 = vadd.f32 %v1707, %v3103
        %v3105 = vpop.f32.mrf.mxu0
        %v3106 = vadd.f32 %v1707, %v3105
        %3107 = vmatmul.bf16.gmra.mxu0 %v1578
        %v3108 = vpop.f32.mrf.mxu0
        %v3109 = vadd.f32 %v1707, %v3108
        %v3110 = vpop.f32.mrf.mxu0
        %v3111 = vadd.f32 %v1707, %v3110
        %3112 = vmatmul.bf16.gmra.mxu0 %v1580
        %v3113 = vpop.f32.mrf.mxu0
        %v3114 = vadd.f32 %v1707, %v3113
        %v3115 = vpop.f32.mrf.mxu0
        %v3116 = vadd.f32 %v1707, %v3115
        %3117 = vmatmul.bf16.gmra.mxu0 %v1582
        %v3118 = vpop.f32.mrf.mxu0
        %v3119 = vadd.f32 %v1707, %v3118
        %v3120 = vpop.f32.mrf.mxu0
        %v3121 = vadd.f32 %v1707, %v3120
        %3122 = vmatmul.bf16.gmra.mxu0 %v1584
        %v3123 = vpop.f32.mrf.mxu0
        %v3124 = vadd.f32 %v1707, %v3123
        %v3125 = vpop.f32.mrf.mxu0
        %v3126 = vadd.f32 %v1707, %v3125
        %3127 = vmatmul.bf16.gmra.mxu0 %v1586
        %v3128 = vpop.f32.mrf.mxu0
        %v3129 = vadd.f32 %v1707, %v3128
        %v3130 = vpop.f32.mrf.mxu0
        %v3131 = vadd.f32 %v1707, %v3130
        %3132 = vmatmul.bf16.gmra.mxu0 %v1588
        %v3133 = vpop.f32.mrf.mxu0
        %v3134 = vadd.f32 %v1707, %v3133
        %v3135 = vpop.f32.mrf.mxu0
        %v3136 = vadd.f32 %v1707, %v3135
        %3137 = vmatmul.bf16.gmra.mxu0 %v1590
        %v3138 = vpop.f32.mrf.mxu0
        %v3139 = vadd.f32 %v1707, %v3138
        %v3140 = vpop.f32.mrf.mxu0
        %v3141 = vadd.f32 %v1707, %v3140
        %3142 = vmatmul.bf16.gmra.mxu0 %v1592
        %v3143 = vpop.f32.mrf.mxu0
        %v3144 = vadd.f32 %v1707, %v3143
        %v3145 = vpop.f32.mrf.mxu0
        %v3146 = vadd.f32 %v1707, %v3145
        %3147 = vmatmul.bf16.gmra.mxu0 %v1594
        %v3148 = vpop.f32.mrf.mxu0
        %v3149 = vadd.f32 %v1707, %v3148
        %v3150 = vpop.f32.mrf.mxu0
        %v3151 = vadd.f32 %v1707, %v3150
        %3152 = vmatmul.bf16.gmra.mxu0 %v1596
        %v3153 = vpop.f32.mrf.mxu0
        %v3154 = vadd.f32 %v1707, %v3153
        %v3155 = vpop.f32.mrf.mxu0
        %v3156 = vadd.f32 %v1707, %v3155
        %3157 = vmatmul.bf16.gmra.mxu0 %v1598
        %v3158 = vpop.f32.mrf.mxu0
        %v3159 = vadd.f32 %v1707, %v3158
        %v3160 = vpop.f32.mrf.mxu0
        %v3161 = vadd.f32 %v1707, %v3160
        %3162 = vmatmul.bf16.gmra.mxu0 %v1600
        %v3163 = vpop.f32.mrf.mxu0
        %v3164 = vadd.f32 %v1707, %v3163
        %v3165 = vpop.f32.mrf.mxu0
        %v3166 = vadd.f32 %v1707, %v3165
        %3167 = vmatmul.bf16.gmra.mxu0 %v1602
        %v3168 = vpop.f32.mrf.mxu0
        %v3169 = vadd.f32 %v1707, %v3168
        %v3170 = vpop.f32.mrf.mxu0
        %v3171 = vadd.f32 %v1707, %v3170
        %3172 = vdwg.mxu0
        %3173 = vmatpush.bf16.msra.mxu0 %v2097
        %3174 = vmatpush.bf16.msra.mxu0 %v2091
        %3175 = vmatpush.bf16.msra.mxu0 %v2085
        %3176 = vmatpush.bf16.msra.mxu0 %v2079
        %3177 = vmatpush.bf16.msra.mxu0 %v2073
        %3178 = vmatpush.bf16.msra.mxu0 %v2067
        %3179 = vmatpush.bf16.msra.mxu0 %v2061
        %3180 = vmatpush.bf16.msra.mxu0 %v2055
        %3181 = vmatmul.bf16.gmra.mxu0 %v1573
        %v3182 = vpop.f32.mrf.mxu0
        %v3183 = vadd.f32 %v3094, %v3182
        %v3184 = vpop.f32.mrf.mxu0
        %v3185 = vadd.f32 %v3096, %v3184
        %3186 = vmatmul.bf16.gmra.mxu0 %v1575
        %v3187 = vpop.f32.mrf.mxu0
        %v3188 = vadd.f32 %v3099, %v3187
        %v3189 = vpop.f32.mrf.mxu0
        %v3190 = vadd.f32 %v3101, %v3189
        %3191 = vmatmul.bf16.gmra.mxu0 %v1577
        %v3192 = vpop.f32.mrf.mxu0
        %v3193 = vadd.f32 %v3104, %v3192
        %v3194 = vpop.f32.mrf.mxu0
        %v3195 = vadd.f32 %v3106, %v3194
        %3196 = vmatmul.bf16.gmra.mxu0 %v1579
        %v3197 = vpop.f32.mrf.mxu0
        %v3198 = vadd.f32 %v3109, %v3197
        %v3199 = vpop.f32.mrf.mxu0
        %v3200 = vadd.f32 %v3111, %v3199
        %3201 = vmatmul.bf16.gmra.mxu0 %v1581
        %v3202 = vpop.f32.mrf.mxu0
        %v3203 = vadd.f32 %v3114, %v3202
        %v3204 = vpop.f32.mrf.mxu0
        %v3205 = vadd.f32 %v3116, %v3204
        %3206 = vmatmul.bf16.gmra.mxu0 %v1583
        %v3207 = vpop.f32.mrf.mxu0
        %v3208 = vadd.f32 %v3119, %v3207
        %v3209 = vpop.f32.mrf.mxu0
        %v3210 = vadd.f32 %v3121, %v3209
        %3211 = vmatmul.bf16.gmra.mxu0 %v1585
        %v3212 = vpop.f32.mrf.mxu0
        %v3213 = vadd.f32 %v3124, %v3212
        %v3214 = vpop.f32.mrf.mxu0
        %v3215 = vadd.f32 %v3126, %v3214
        %3216 = vmatmul.bf16.gmra.mxu0 %v1587
        %v3217 = vpop.f32.mrf.mxu0
        %v3218 = vadd.f32 %v3129, %v3217
        %v3219 = vpop.f32.mrf.mxu0
        %v3220 = vadd.f32 %v3131, %v3219
        %3221 = vmatmul.bf16.gmra.mxu0 %v1589
        %v3222 = vpop.f32.mrf.mxu0
        %v3223 = vadd.f32 %v3134, %v3222
        %v3224 = vpop.f32.mrf.mxu0
        %v3225 = vadd.f32 %v3136, %v3224
        %3226 = vmatmul.bf16.gmra.mxu0 %v1591
        %v3227 = vpop.f32.mrf.mxu0
        %v3228 = vadd.f32 %v3139, %v3227
        %v3229 = vpop.f32.mrf.mxu0
        %v3230 = vadd.f32 %v3141, %v3229
        %3231 = vmatmul.bf16.gmra.mxu0 %v1593
        %v3232 = vpop.f32.mrf.mxu0
        %v3233 = vadd.f32 %v3144, %v3232
        %v3234 = vpop.f32.mrf.mxu0
        %v3235 = vadd.f32 %v3146, %v3234
        %3236 = vmatmul.bf16.gmra.mxu0 %v1595
        %v3237 = vpop.f32.mrf.mxu0
        %v3238 = vadd.f32 %v3149, %v3237
        %v3239 = vpop.f32.mrf.mxu0
        %v3240 = vadd.f32 %v3151, %v3239
        %3241 = vmatmul.bf16.gmra.mxu0 %v1597
        %v3242 = vpop.f32.mrf.mxu0
        %v3243 = vadd.f32 %v3154, %v3242
        %v3244 = vpop.f32.mrf.mxu0
        %v3245 = vadd.f32 %v3156, %v3244
        %3246 = vmatmul.bf16.gmra.mxu0 %v1599
        %v3247 = vpop.f32.mrf.mxu0
        %v3248 = vadd.f32 %v3159, %v3247
        %v3249 = vpop.f32.mrf.mxu0
        %v3250 = vadd.f32 %v3161, %v3249
        %3251 = vmatmul.bf16.gmra.mxu0 %v1601
        %v3252 = vpop.f32.mrf.mxu0
        %v3253 = vadd.f32 %v3164, %v3252
        %v3254 = vpop.f32.mrf.mxu0
        %v3255 = vadd.f32 %v3166, %v3254
        %3256 = vmatmul.bf16.gmra.mxu0 %v1603
        %v3257 = vpop.f32.mrf.mxu0
        %v3258 = vadd.f32 %v3169, %v3257
        %v3259 = vpop.f32.mrf.mxu0
        %v3260 = vadd.f32 %v3171, %v3259
        %3261 = vdwg.mxu0
        %v3262 = vmul.f32 %v2293, 0.088388346
        %v3263 = vmul.f32 %v2471, 0.088388346
        %v3264 = vmul.f32 %v2295, 0.088388346
        %v3265 = vmul.f32 %v2473, 0.088388346
        %v3266 = vmul.f32 %v2298, 0.088388346
        %v3267 = vmul.f32 %v2476, 0.088388346
        %v3268 = vmul.f32 %v2300, 0.088388346
        %v3269 = vmul.f32 %v2478, 0.088388346
        %v3270 = vmul.f32 %v2303, 0.088388346
        %v3271 = vmul.f32 %v2481, 0.088388346
        %v3272 = vmul.f32 %v2305, 0.088388346
        %v3273 = vmul.f32 %v2483, 0.088388346
        %v3274 = vmul.f32 %v2308, 0.088388346
        %v3275 = vmul.f32 %v2486, 0.088388346
        %v3276 = vmul.f32 %v2310, 0.088388346
        %v3277 = vmul.f32 %v2488, 0.088388346
        %v3278 = vmul.f32 %v2313, 0.088388346
        %v3279 = vmul.f32 %v2491, 0.088388346
        %v3280 = vmul.f32 %v2315, 0.088388346
        %v3281 = vmul.f32 %v2493, 0.088388346
        %v3282 = vmul.f32 %v2318, 0.088388346
        %v3283 = vmul.f32 %v2496, 0.088388346
        %v3284 = vmul.f32 %v2320, 0.088388346
        %v3285 = vmul.f32 %v2498, 0.088388346
        %v3286 = vmul.f32 %v2323, 0.088388346
        %v3287 = vmul.f32 %v2501, 0.088388346
        %v3288 = vmul.f32 %v2325, 0.088388346
        %v3289 = vmul.f32 %v2503, 0.088388346
        %v3290 = vmul.f32 %v2328, 0.088388346
        %v3291 = vmul.f32 %v2506, 0.088388346
        %v3292 = vmul.f32 %v2330, 0.088388346
        %v3293 = vmul.f32 %v2508, 0.088388346
        %v3294 = vmul.f32 %v2333, 0.088388346
        %v3295 = vmul.f32 %v2511, 0.088388346
        %v3296 = vmul.f32 %v2335, 0.088388346
        %v3297 = vmul.f32 %v2513, 0.088388346
        %v3298 = vmul.f32 %v2338, 0.088388346
        %v3299 = vmul.f32 %v2516, 0.088388346
        %v3300 = vmul.f32 %v2340, 0.088388346
        %v3301 = vmul.f32 %v2518, 0.088388346
        %v3302 = vmul.f32 %v2343, 0.088388346
        %v3303 = vmul.f32 %v2521, 0.088388346
        %v3304 = vmul.f32 %v2345, 0.088388346
        %v3305 = vmul.f32 %v2523, 0.088388346
        %v3306 = vmul.f32 %v2348, 0.088388346
        %v3307 = vmul.f32 %v2526, 0.088388346
        %v3308 = vmul.f32 %v2350, 0.088388346
        %v3309 = vmul.f32 %v2528, 0.088388346
        %v3310 = vmul.f32 %v2353, 0.088388346
        %v3311 = vmul.f32 %v2531, 0.088388346
        %v3312 = vmul.f32 %v2355, 0.088388346
        %v3313 = vmul.f32 %v2533, 0.088388346
        %v3314 = vmul.f32 %v2358, 0.088388346
        %v3315 = vmul.f32 %v2536, 0.088388346
        %v3316 = vmul.f32 %v2360, 0.088388346
        %v3317 = vmul.f32 %v2538, 0.088388346
        %v3318 = vmul.f32 %v2363, 0.088388346
        %v3319 = vmul.f32 %v2541, 0.088388346
        %v3320 = vmul.f32 %v2365, 0.088388346
        %v3321 = vmul.f32 %v2543, 0.088388346
        %v3322 = vmul.f32 %v2368, 0.088388346
        %v3323 = vmul.f32 %v2546, 0.088388346
        %v3324 = vmul.f32 %v2370, 0.088388346
        %v3325 = vmul.f32 %v2548, 0.088388346
        %v3326 = vld [vmem:[%s442] sm:$0xff]
        %v3327 = vld [vmem:[%s442 + $0x8] sm:$0xff]
        %v3328 = vld [vmem:[%s442 + $0x10] sm:$0xff]
        %v3329 = vld [vmem:[%s442 + $0x18] sm:$0xff]
        %v3330 = vld [vmem:[%s442 + $0x20] sm:$0xff]
        %v3331 = vld [vmem:[%s442 + $0x28] sm:$0xff]
        %v3332 = vld [vmem:[%s442 + $0x30] sm:$0xff]
        %v3333 = vld [vmem:[%s442 + $0x38] sm:$0xff]
        %v3334 = vld [vmem:[%s442 + $0x40] sm:$0xff]
        %v3335 = vld [vmem:[%s442 + $0x48] sm:$0xff]
        %v3336 = vld [vmem:[%s442 + $0x50] sm:$0xff]
        %v3337 = vld [vmem:[%s442 + $0x58] sm:$0xff]
        %v3338 = vld [vmem:[%s442 + $0x60] sm:$0xff]
        %v3339 = vld [vmem:[%s442 + $0x68] sm:$0xff]
        %v3340 = vld [vmem:[%s442 + $0x70] sm:$0xff]
        %v3341 = vld [vmem:[%s442 + $0x78] sm:$0xff]
        %v3342 = vld [vmem:[%s442 + $0x80] sm:$0xff]
        %v3343 = vld [vmem:[%s442 + $0x88] sm:$0xff]
        %v3344 = vld [vmem:[%s442 + $0x90] sm:$0xff]
        %v3345 = vld [vmem:[%s442 + $0x98] sm:$0xff]
        %v3346 = vld [vmem:[%s442 + $0xa0] sm:$0xff]
        %v3347 = vld [vmem:[%s442 + $0xa8] sm:$0xff]
        %v3348 = vld [vmem:[%s442 + $0xb0] sm:$0xff]
        %v3349 = vld [vmem:[%s442 + $0xb8] sm:$0xff]
        %v3350 = vld [vmem:[%s442 + $0xc0] sm:$0xff]
        %v3351 = vld [vmem:[%s442 + $0xc8] sm:$0xff]
        %v3352 = vld [vmem:[%s442 + $0xd0] sm:$0xff]
        %v3353 = vld [vmem:[%s442 + $0xd8] sm:$0xff]
        %v3354 = vld [vmem:[%s442 + $0xe0] sm:$0xff]
        %v3355 = vld [vmem:[%s442 + $0xe8] sm:$0xff]
        %v3356 = vld [vmem:[%s442 + $0xf0] sm:$0xff]
        %v3357 = vld [vmem:[%s442 + $0xf8] sm:$0xff]
        %v3358 = vld [vmem:[%s442 + $0x100] sm:$0xff]
        %v3359 = vld [vmem:[%s442 + $0x108] sm:$0xff]
        %v3360 = vld [vmem:[%s442 + $0x110] sm:$0xff]
        %v3361 = vld [vmem:[%s442 + $0x118] sm:$0xff]
        %v3362 = vld [vmem:[%s442 + $0x120] sm:$0xff]
        %v3363 = vld [vmem:[%s442 + $0x128] sm:$0xff]
        %v3364 = vld [vmem:[%s442 + $0x130] sm:$0xff]
        %v3365 = vld [vmem:[%s442 + $0x138] sm:$0xff]
        %v3366 = vld [vmem:[%s442 + $0x140] sm:$0xff]
        %v3367 = vld [vmem:[%s442 + $0x148] sm:$0xff]
        %v3368 = vld [vmem:[%s442 + $0x150] sm:$0xff]
        %v3369 = vld [vmem:[%s442 + $0x158] sm:$0xff]
        %v3370 = vld [vmem:[%s442 + $0x160] sm:$0xff]
        %v3371 = vld [vmem:[%s442 + $0x168] sm:$0xff]
        %v3372 = vld [vmem:[%s442 + $0x170] sm:$0xff]
        %v3373 = vld [vmem:[%s442 + $0x178] sm:$0xff]
        %v3374 = vld [vmem:[%s442 + $0x180] sm:$0xff]
        %v3375 = vld [vmem:[%s442 + $0x188] sm:$0xff]
        %v3376 = vld [vmem:[%s442 + $0x190] sm:$0xff]
        %v3377 = vld [vmem:[%s442 + $0x198] sm:$0xff]
        %v3378 = vld [vmem:[%s442 + $0x1a0] sm:$0xff]
        %v3379 = vld [vmem:[%s442 + $0x1a8] sm:$0xff]
        %v3380 = vld [vmem:[%s442 + $0x1b0] sm:$0xff]
        %v3381 = vld [vmem:[%s442 + $0x1b8] sm:$0xff]
        %v3382 = vld [vmem:[%s442 + $0x1c0] sm:$0xff]
        %v3383 = vld [vmem:[%s442 + $0x1c8] sm:$0xff]
        %v3384 = vld [vmem:[%s442 + $0x1d0] sm:$0xff]
        %v3385 = vld [vmem:[%s442 + $0x1d8] sm:$0xff]
        %v3386 = vld [vmem:[%s442 + $0x1e0] sm:$0xff]
        %v3387 = vld [vmem:[%s442 + $0x1e8] sm:$0xff]
        %v3388 = vld [vmem:[%s442 + $0x1f0] sm:$0xff]
        %v3389 = vld [vmem:[%s442 + $0x1f8] sm:$0xff]
        %v3390 = vld [vmem:[%s452] sm:$0xff]
        %v3391 = vld [vmem:[%s452 + $0x8] sm:$0xff]
        %v3392 = vld [vmem:[%s452 + $0x10] sm:$0xff]
        %v3393 = vld [vmem:[%s452 + $0x18] sm:$0xff]
        %v3394 = vld [vmem:[%s452 + $0x20] sm:$0xff]
        %v3395 = vld [vmem:[%s452 + $0x28] sm:$0xff]
        %v3396 = vld [vmem:[%s452 + $0x30] sm:$0xff]
        %v3397 = vld [vmem:[%s452 + $0x38] sm:$0xff]
        %v3398 = vld [vmem:[%s452 + $0x40] sm:$0xff]
        %v3399 = vld [vmem:[%s452 + $0x48] sm:$0xff]
        %v3400 = vld [vmem:[%s452 + $0x50] sm:$0xff]
        %v3401 = vld [vmem:[%s452 + $0x58] sm:$0xff]
        %v3402 = vld [vmem:[%s452 + $0x60] sm:$0xff]
        %v3403 = vld [vmem:[%s452 + $0x68] sm:$0xff]
        %v3404 = vld [vmem:[%s452 + $0x70] sm:$0xff]
        %v3405 = vld [vmem:[%s452 + $0x78] sm:$0xff]
        %v3406 = vld [vmem:[%s452 + $0x80] sm:$0xff]
        %v3407 = vld [vmem:[%s452 + $0x88] sm:$0xff]
        %v3408 = vld [vmem:[%s452 + $0x90] sm:$0xff]
        %v3409 = vld [vmem:[%s452 + $0x98] sm:$0xff]
        %v3410 = vld [vmem:[%s452 + $0xa0] sm:$0xff]
        %v3411 = vld [vmem:[%s452 + $0xa8] sm:$0xff]
        %v3412 = vld [vmem:[%s452 + $0xb0] sm:$0xff]
        %v3413 = vld [vmem:[%s452 + $0xb8] sm:$0xff]
        %v3414 = vld [vmem:[%s452 + $0xc0] sm:$0xff]
        %v3415 = vld [vmem:[%s452 + $0xc8] sm:$0xff]
        %v3416 = vld [vmem:[%s452 + $0xd0] sm:$0xff]
        %v3417 = vld [vmem:[%s452 + $0xd8] sm:$0xff]
        %v3418 = vld [vmem:[%s452 + $0xe0] sm:$0xff]
        %v3419 = vld [vmem:[%s452 + $0xe8] sm:$0xff]
        %v3420 = vld [vmem:[%s452 + $0xf0] sm:$0xff]
        %v3421 = vld [vmem:[%s452 + $0xf8] sm:$0xff]
        %v3422 = vld [vmem:[%s452 + $0x100] sm:$0xff]
        %v3423 = vld [vmem:[%s452 + $0x108] sm:$0xff]
        %v3424 = vld [vmem:[%s452 + $0x110] sm:$0xff]
        %v3425 = vld [vmem:[%s452 + $0x118] sm:$0xff]
        %v3426 = vld [vmem:[%s452 + $0x120] sm:$0xff]
        %v3427 = vld [vmem:[%s452 + $0x128] sm:$0xff]
        %v3428 = vld [vmem:[%s452 + $0x130] sm:$0xff]
        %v3429 = vld [vmem:[%s452 + $0x138] sm:$0xff]
        %v3430 = vld [vmem:[%s452 + $0x140] sm:$0xff]
        %v3431 = vld [vmem:[%s452 + $0x148] sm:$0xff]
        %v3432 = vld [vmem:[%s452 + $0x150] sm:$0xff]
        %v3433 = vld [vmem:[%s452 + $0x158] sm:$0xff]
        %v3434 = vld [vmem:[%s452 + $0x160] sm:$0xff]
        %v3435 = vld [vmem:[%s452 + $0x168] sm:$0xff]
        %v3436 = vld [vmem:[%s452 + $0x170] sm:$0xff]
        %v3437 = vld [vmem:[%s452 + $0x178] sm:$0xff]
        %v3438 = vld [vmem:[%s452 + $0x180] sm:$0xff]
        %v3439 = vld [vmem:[%s452 + $0x188] sm:$0xff]
        %v3440 = vld [vmem:[%s452 + $0x190] sm:$0xff]
        %v3441 = vld [vmem:[%s452 + $0x198] sm:$0xff]
        %v3442 = vld [vmem:[%s452 + $0x1a0] sm:$0xff]
        %v3443 = vld [vmem:[%s452 + $0x1a8] sm:$0xff]
        %v3444 = vld [vmem:[%s452 + $0x1b0] sm:$0xff]
        %v3445 = vld [vmem:[%s452 + $0x1b8] sm:$0xff]
        %v3446 = vld [vmem:[%s452 + $0x1c0] sm:$0xff]
        %v3447 = vld [vmem:[%s452 + $0x1c8] sm:$0xff]
        %v3448 = vld [vmem:[%s452 + $0x1d0] sm:$0xff]
        %v3449 = vld [vmem:[%s452 + $0x1d8] sm:$0xff]
        %v3450 = vld [vmem:[%s452 + $0x1e0] sm:$0xff]
        %v3451 = vld [vmem:[%s452 + $0x1e8] sm:$0xff]
        %v3452 = vld [vmem:[%s452 + $0x1f0] sm:$0xff]
        %v3453 = vld [vmem:[%s452 + $0x1f8] sm:$0xff]
        %v3454 = vmul.f32 %v3262, %v3326
        %v3455 = vmul.f32 %v3263, %v3327
        %v3456 = vmul.f32 %v3264, %v3328
        %v3457 = vmul.f32 %v3265, %v3329
        %v3458 = vmul.f32 %v3266, %v3330
        %v3459 = vmul.f32 %v3267, %v3331
        %v3460 = vmul.f32 %v3268, %v3332
        %v3461 = vmul.f32 %v3269, %v3333
        %v3462 = vmul.f32 %v3270, %v3334
        %v3463 = vmul.f32 %v3271, %v3335
        %v3464 = vmul.f32 %v3272, %v3336
        %v3465 = vmul.f32 %v3273, %v3337
        %v3466 = vmul.f32 %v3274, %v3338
        %v3467 = vmul.f32 %v3275, %v3339
        %v3468 = vmul.f32 %v3276, %v3340
        %v3469 = vmul.f32 %v3277, %v3341
        %v3470 = vmul.f32 %v3278, %v3342
        %v3471 = vmul.f32 %v3279, %v3343
        %v3472 = vmul.f32 %v3280, %v3344
        %v3473 = vmul.f32 %v3281, %v3345
        %v3474 = vmul.f32 %v3282, %v3346
        %v3475 = vmul.f32 %v3283, %v3347
        %v3476 = vmul.f32 %v3284, %v3348
        %v3477 = vmul.f32 %v3285, %v3349
        %v3478 = vmul.f32 %v3286, %v3350
        %v3479 = vmul.f32 %v3287, %v3351
        %v3480 = vmul.f32 %v3288, %v3352
        %v3481 = vmul.f32 %v3289, %v3353
        %v3482 = vmul.f32 %v3290, %v3354
        %v3483 = vmul.f32 %v3291, %v3355
        %v3484 = vmul.f32 %v3292, %v3356
        %v3485 = vmul.f32 %v3293, %v3357
        %v3486 = vmul.f32 %v3294, %v3358
        %v3487 = vmul.f32 %v3295, %v3359
        %v3488 = vmul.f32 %v3296, %v3360
        %v3489 = vmul.f32 %v3297, %v3361
        %v3490 = vmul.f32 %v3298, %v3362
        %v3491 = vmul.f32 %v3299, %v3363
        %v3492 = vmul.f32 %v3300, %v3364
        %v3493 = vmul.f32 %v3301, %v3365
        %v3494 = vmul.f32 %v3302, %v3366
        %v3495 = vmul.f32 %v3303, %v3367
        %v3496 = vmul.f32 %v3304, %v3368
        %v3497 = vmul.f32 %v3305, %v3369
        %v3498 = vmul.f32 %v3306, %v3370
        %v3499 = vmul.f32 %v3307, %v3371
        %v3500 = vmul.f32 %v3308, %v3372
        %v3501 = vmul.f32 %v3309, %v3373
        %v3502 = vmul.f32 %v3310, %v3374
        %v3503 = vmul.f32 %v3311, %v3375
        %v3504 = vmul.f32 %v3312, %v3376
        %v3505 = vmul.f32 %v3313, %v3377
        %v3506 = vmul.f32 %v3314, %v3378
        %v3507 = vmul.f32 %v3315, %v3379
        %v3508 = vmul.f32 %v3316, %v3380
        %v3509 = vmul.f32 %v3317, %v3381
        %v3510 = vmul.f32 %v3318, %v3382
        %v3511 = vmul.f32 %v3319, %v3383
        %v3512 = vmul.f32 %v3320, %v3384
        %v3513 = vmul.f32 %v3321, %v3385
        %v3514 = vmul.f32 %v3322, %v3386
        %v3515 = vmul.f32 %v3323, %v3387
        %v3516 = vmul.f32 %v3324, %v3388
        %v3517 = vmul.f32 %v3325, %v3389
        %3518 = vrot.lane.b32.xlu0 %v3262, 64
        %v3519 = vpop.permute.xlu0 %3518
        %3520 = vrot.lane.b32.xlu0 %v3264, 64
        %v3521 = vpop.permute.xlu0 %3520
        %3522 = vrot.lane.b32.xlu0 %v3266, 64
        %v3523 = vpop.permute.xlu0 %3522
        %3524 = vrot.lane.b32.xlu0 %v3268, 64
        %v3525 = vpop.permute.xlu0 %3524
        %3526 = vrot.lane.b32.xlu0 %v3270, 64
        %v3527 = vpop.permute.xlu0 %3526
        %3528 = vrot.lane.b32.xlu0 %v3272, 64
        %v3529 = vpop.permute.xlu0 %3528
        %3530 = vrot.lane.b32.xlu0 %v3274, 64
        %v3531 = vpop.permute.xlu0 %3530
        %3532 = vrot.lane.b32.xlu0 %v3276, 64
        %v3533 = vpop.permute.xlu0 %3532
        %3534 = vrot.lane.b32.xlu0 %v3278, 64
        %v3535 = vpop.permute.xlu0 %3534
        %3536 = vrot.lane.b32.xlu0 %v3280, 64
        %v3537 = vpop.permute.xlu0 %3536
        %3538 = vrot.lane.b32.xlu0 %v3282, 64
        %v3539 = vpop.permute.xlu0 %3538
        %3540 = vrot.lane.b32.xlu0 %v3284, 64
        %v3541 = vpop.permute.xlu0 %3540
        %3542 = vrot.lane.b32.xlu0 %v3286, 64
        %v3543 = vpop.permute.xlu0 %3542
        %3544 = vrot.lane.b32.xlu0 %v3288, 64
        %v3545 = vpop.permute.xlu0 %3544
        %3546 = vrot.lane.b32.xlu0 %v3290, 64
        %v3547 = vpop.permute.xlu0 %3546
        %3548 = vrot.lane.b32.xlu0 %v3292, 64
        %v3549 = vpop.permute.xlu0 %3548
        %3550 = vrot.lane.b32.xlu0 %v3294, 64
        %v3551 = vpop.permute.xlu0 %3550
        %3552 = vrot.lane.b32.xlu0 %v3296, 64
        %v3553 = vpop.permute.xlu0 %3552
        %3554 = vrot.lane.b32.xlu0 %v3298, 64
        %v3555 = vpop.permute.xlu0 %3554
        %3556 = vrot.lane.b32.xlu0 %v3300, 64
        %v3557 = vpop.permute.xlu0 %3556
        %3558 = vrot.lane.b32.xlu0 %v3302, 64
        %v3559 = vpop.permute.xlu0 %3558
        %3560 = vrot.lane.b32.xlu0 %v3304, 64
        %v3561 = vpop.permute.xlu0 %3560
        %3562 = vrot.lane.b32.xlu0 %v3306, 64
        %v3563 = vpop.permute.xlu0 %3562
        %3564 = vrot.lane.b32.xlu0 %v3308, 64
        %v3565 = vpop.permute.xlu0 %3564
        %3566 = vrot.lane.b32.xlu0 %v3310, 64
        %v3567 = vpop.permute.xlu0 %3566
        %3568 = vrot.lane.b32.xlu0 %v3312, 64
        %v3569 = vpop.permute.xlu0 %3568
        %3570 = vrot.lane.b32.xlu0 %v3314, 64
        %v3571 = vpop.permute.xlu0 %3570
        %3572 = vrot.lane.b32.xlu0 %v3316, 64
        %v3573 = vpop.permute.xlu0 %3572
        %3574 = vrot.lane.b32.xlu0 %v3318, 64
        %v3575 = vpop.permute.xlu0 %3574
        %3576 = vrot.lane.b32.xlu0 %v3320, 64
        %v3577 = vpop.permute.xlu0 %3576
        %3578 = vrot.lane.b32.xlu0 %v3322, 64
        %v3579 = vpop.permute.xlu0 %3578
        %3580 = vrot.lane.b32.xlu0 %v3324, 64
        %v3581 = vpop.permute.xlu0 %3580
        %3582 = vrot.lane.b32.xlu0 %v3263, 64
        %v3583 = vpop.permute.xlu0 %3582
        %3584 = vrot.lane.b32.xlu0 %v3265, 64
        %v3585 = vpop.permute.xlu0 %3584
        %3586 = vrot.lane.b32.xlu0 %v3267, 64
        %v3587 = vpop.permute.xlu0 %3586
        %3588 = vrot.lane.b32.xlu0 %v3269, 64
        %v3589 = vpop.permute.xlu0 %3588
        %3590 = vrot.lane.b32.xlu0 %v3271, 64
        %v3591 = vpop.permute.xlu0 %3590
        %3592 = vrot.lane.b32.xlu0 %v3273, 64
        %v3593 = vpop.permute.xlu0 %3592
        %3594 = vrot.lane.b32.xlu0 %v3275, 64
        %v3595 = vpop.permute.xlu0 %3594
        %3596 = vrot.lane.b32.xlu0 %v3277, 64
        %v3597 = vpop.permute.xlu0 %3596
        %3598 = vrot.lane.b32.xlu0 %v3279, 64
        %v3599 = vpop.permute.xlu0 %3598
        %3600 = vrot.lane.b32.xlu0 %v3281, 64
        %v3601 = vpop.permute.xlu0 %3600
        %3602 = vrot.lane.b32.xlu0 %v3283, 64
        %v3603 = vpop.permute.xlu0 %3602
        %3604 = vrot.lane.b32.xlu0 %v3285, 64
        %v3605 = vpop.permute.xlu0 %3604
        %3606 = vrot.lane.b32.xlu0 %v3287, 64
        %v3607 = vpop.permute.xlu0 %3606
        %3608 = vrot.lane.b32.xlu0 %v3289, 64
        %v3609 = vpop.permute.xlu0 %3608
        %3610 = vrot.lane.b32.xlu0 %v3291, 64
        %v3611 = vpop.permute.xlu0 %3610
        %3612 = vrot.lane.b32.xlu0 %v3293, 64
        %v3613 = vpop.permute.xlu0 %3612
        %3614 = vrot.lane.b32.xlu0 %v3295, 64
        %v3615 = vpop.permute.xlu0 %3614
        %3616 = vrot.lane.b32.xlu0 %v3297, 64
        %v3617 = vpop.permute.xlu0 %3616
        %3618 = vrot.lane.b32.xlu0 %v3299, 64
        %v3619 = vpop.permute.xlu0 %3618
        %3620 = vrot.lane.b32.xlu0 %v3301, 64
        %v3621 = vpop.permute.xlu0 %3620
        %3622 = vrot.lane.b32.xlu0 %v3303, 64
        %v3623 = vpop.permute.xlu0 %3622
        %3624 = vrot.lane.b32.xlu0 %v3305, 64
        %v3625 = vpop.permute.xlu0 %3624
        %3626 = vrot.lane.b32.xlu0 %v3307, 64
        %v3627 = vpop.permute.xlu0 %3626
        %3628 = vrot.lane.b32.xlu0 %v3309, 64
        %v3629 = vpop.permute.xlu0 %3628
        %3630 = vrot.lane.b32.xlu0 %v3311, 64
        %v3631 = vpop.permute.xlu0 %3630
        %3632 = vrot.lane.b32.xlu0 %v3313, 64
        %v3633 = vpop.permute.xlu0 %3632
        %3634 = vrot.lane.b32.xlu0 %v3315, 64
        %v3635 = vpop.permute.xlu0 %3634
        %3636 = vrot.lane.b32.xlu0 %v3317, 64
        %v3637 = vpop.permute.xlu0 %3636
        %3638 = vrot.lane.b32.xlu0 %v3319, 64
        %v3639 = vpop.permute.xlu0 %3638
        %3640 = vrot.lane.b32.xlu0 %v3321, 64
        %v3641 = vpop.permute.xlu0 %3640
        %3642 = vrot.lane.b32.xlu0 %v3323, 64
        %v3643 = vpop.permute.xlu0 %3642
        %3644 = vrot.lane.b32.xlu0 %v3325, 64
        %v3645 = vpop.permute.xlu0 %3644
        %v3646 = vmul.f32 %v3519, %v3390
        %v3647 = vmul.f32 %v3583, %v3391
        %v3648 = vmul.f32 %v3521, %v3392
        %v3649 = vmul.f32 %v3585, %v3393
        %v3650 = vmul.f32 %v3523, %v3394
        %v3651 = vmul.f32 %v3587, %v3395
        %v3652 = vmul.f32 %v3525, %v3396
        %v3653 = vmul.f32 %v3589, %v3397
        %v3654 = vmul.f32 %v3527, %v3398
        %v3655 = vmul.f32 %v3591, %v3399
        %v3656 = vmul.f32 %v3529, %v3400
        %v3657 = vmul.f32 %v3593, %v3401
        %v3658 = vmul.f32 %v3531, %v3402
        %v3659 = vmul.f32 %v3595, %v3403
        %v3660 = vmul.f32 %v3533, %v3404
        %v3661 = vmul.f32 %v3597, %v3405
        %v3662 = vmul.f32 %v3535, %v3406
        %v3663 = vmul.f32 %v3599, %v3407
        %v3664 = vmul.f32 %v3537, %v3408
        %v3665 = vmul.f32 %v3601, %v3409
        %v3666 = vmul.f32 %v3539, %v3410
        %v3667 = vmul.f32 %v3603, %v3411
        %v3668 = vmul.f32 %v3541, %v3412
        %v3669 = vmul.f32 %v3605, %v3413
        %v3670 = vmul.f32 %v3543, %v3414
        %v3671 = vmul.f32 %v3607, %v3415
        %v3672 = vmul.f32 %v3545, %v3416
        %v3673 = vmul.f32 %v3609, %v3417
        %v3674 = vmul.f32 %v3547, %v3418
        %v3675 = vmul.f32 %v3611, %v3419
        %v3676 = vmul.f32 %v3549, %v3420
        %v3677 = vmul.f32 %v3613, %v3421
        %v3678 = vmul.f32 %v3551, %v3422
        %v3679 = vmul.f32 %v3615, %v3423
        %v3680 = vmul.f32 %v3553, %v3424
        %v3681 = vmul.f32 %v3617, %v3425
        %v3682 = vmul.f32 %v3555, %v3426
        %v3683 = vmul.f32 %v3619, %v3427
        %v3684 = vmul.f32 %v3557, %v3428
        %v3685 = vmul.f32 %v3621, %v3429
        %v3686 = vmul.f32 %v3559, %v3430
        %v3687 = vmul.f32 %v3623, %v3431
        %v3688 = vmul.f32 %v3561, %v3432
        %v3689 = vmul.f32 %v3625, %v3433
        %v3690 = vmul.f32 %v3563, %v3434
        %v3691 = vmul.f32 %v3627, %v3435
        %v3692 = vmul.f32 %v3565, %v3436
        %v3693 = vmul.f32 %v3629, %v3437
        %v3694 = vmul.f32 %v3567, %v3438
        %v3695 = vmul.f32 %v3631, %v3439
        %v3696 = vmul.f32 %v3569, %v3440
        %v3697 = vmul.f32 %v3633, %v3441
        %v3698 = vmul.f32 %v3571, %v3442
        %v3699 = vmul.f32 %v3635, %v3443
        %v3700 = vmul.f32 %v3573, %v3444
        %v3701 = vmul.f32 %v3637, %v3445
        %v3702 = vmul.f32 %v3575, %v3446
        %v3703 = vmul.f32 %v3639, %v3447
        %v3704 = vmul.f32 %v3577, %v3448
        %v3705 = vmul.f32 %v3641, %v3449
        %v3706 = vmul.f32 %v3579, %v3450
        %v3707 = vmul.f32 %v3643, %v3451
        %v3708 = vmul.f32 %v3581, %v3452
        %v3709 = vmul.f32 %v3645, %v3453
        %v3710 = vadd.f32 %v3454, %v3646
        %v3711 = vadd.f32 %v3455, %v3647
        %v3712 = vadd.f32 %v3456, %v3648
        %v3713 = vadd.f32 %v3457, %v3649
        %v3714 = vadd.f32 %v3458, %v3650
        %v3715 = vadd.f32 %v3459, %v3651
        %v3716 = vadd.f32 %v3460, %v3652
        %v3717 = vadd.f32 %v3461, %v3653
        %v3718 = vadd.f32 %v3462, %v3654
        %v3719 = vadd.f32 %v3463, %v3655
        %v3720 = vadd.f32 %v3464, %v3656
        %v3721 = vadd.f32 %v3465, %v3657
        %v3722 = vadd.f32 %v3466, %v3658
        %v3723 = vadd.f32 %v3467, %v3659
        %v3724 = vadd.f32 %v3468, %v3660
        %v3725 = vadd.f32 %v3469, %v3661
        %v3726 = vadd.f32 %v3470, %v3662
        %v3727 = vadd.f32 %v3471, %v3663
        %v3728 = vadd.f32 %v3472, %v3664
        %v3729 = vadd.f32 %v3473, %v3665
        %v3730 = vadd.f32 %v3474, %v3666
        %v3731 = vadd.f32 %v3475, %v3667
        %v3732 = vadd.f32 %v3476, %v3668
        %v3733 = vadd.f32 %v3477, %v3669
        %v3734 = vadd.f32 %v3478, %v3670
        %v3735 = vadd.f32 %v3479, %v3671
        %v3736 = vadd.f32 %v3480, %v3672
        %v3737 = vadd.f32 %v3481, %v3673
        %v3738 = vadd.f32 %v3482, %v3674
        %v3739 = vadd.f32 %v3483, %v3675
        %v3740 = vadd.f32 %v3484, %v3676
        %v3741 = vadd.f32 %v3485, %v3677
        %v3742 = vadd.f32 %v3486, %v3678
        %v3743 = vadd.f32 %v3487, %v3679
        %v3744 = vadd.f32 %v3488, %v3680
        %v3745 = vadd.f32 %v3489, %v3681
        %v3746 = vadd.f32 %v3490, %v3682
        %v3747 = vadd.f32 %v3491, %v3683
        %v3748 = vadd.f32 %v3492, %v3684
        %v3749 = vadd.f32 %v3493, %v3685
        %v3750 = vadd.f32 %v3494, %v3686
        %v3751 = vadd.f32 %v3495, %v3687
        %v3752 = vadd.f32 %v3496, %v3688
        %v3753 = vadd.f32 %v3497, %v3689
        %v3754 = vadd.f32 %v3498, %v3690
        %v3755 = vadd.f32 %v3499, %v3691
        %v3756 = vadd.f32 %v3500, %v3692
        %v3757 = vadd.f32 %v3501, %v3693
        %v3758 = vadd.f32 %v3502, %v3694
        %v3759 = vadd.f32 %v3503, %v3695
        %v3760 = vadd.f32 %v3504, %v3696
        %v3761 = vadd.f32 %v3505, %v3697
        %v3762 = vadd.f32 %v3506, %v3698
        %v3763 = vadd.f32 %v3507, %v3699
        %v3764 = vadd.f32 %v3508, %v3700
        %v3765 = vadd.f32 %v3509, %v3701
        %v3766 = vadd.f32 %v3510, %v3702
        %v3767 = vadd.f32 %v3511, %v3703
        %v3768 = vadd.f32 %v3512, %v3704
        %v3769 = vadd.f32 %v3513, %v3705
        %v3770 = vadd.f32 %v3514, %v3706
        %v3771 = vadd.f32 %v3515, %v3707
        %v3772 = vadd.f32 %v3516, %v3708
        %v3773 = vadd.f32 %v3517, %v3709
        %v3774 = vmul.f32 %v2649, %v3326
        %v3775 = vmul.f32 %v2827, %v3327
        %v3776 = vmul.f32 %v2651, %v3328
        %v3777 = vmul.f32 %v2829, %v3329
        %v3778 = vmul.f32 %v2654, %v3330
        %v3779 = vmul.f32 %v2832, %v3331
        %v3780 = vmul.f32 %v2656, %v3332
        %v3781 = vmul.f32 %v2834, %v3333
        %v3782 = vmul.f32 %v2659, %v3334
        %v3783 = vmul.f32 %v2837, %v3335
        %v3784 = vmul.f32 %v2661, %v3336
        %v3785 = vmul.f32 %v2839, %v3337
        %v3786 = vmul.f32 %v2664, %v3338
        %v3787 = vmul.f32 %v2842, %v3339
        %v3788 = vmul.f32 %v2666, %v3340
        %v3789 = vmul.f32 %v2844, %v3341
        %v3790 = vmul.f32 %v2669, %v3342
        %v3791 = vmul.f32 %v2847, %v3343
        %v3792 = vmul.f32 %v2671, %v3344
        %v3793 = vmul.f32 %v2849, %v3345
        %v3794 = vmul.f32 %v2674, %v3346
        %v3795 = vmul.f32 %v2852, %v3347
        %v3796 = vmul.f32 %v2676, %v3348
        %v3797 = vmul.f32 %v2854, %v3349
        %v3798 = vmul.f32 %v2679, %v3350
        %v3799 = vmul.f32 %v2857, %v3351
        %v3800 = vmul.f32 %v2681, %v3352
        %v3801 = vmul.f32 %v2859, %v3353
        %v3802 = vmul.f32 %v2684, %v3354
        %v3803 = vmul.f32 %v2862, %v3355
        %v3804 = vmul.f32 %v2686, %v3356
        %v3805 = vmul.f32 %v2864, %v3357
        %v3806 = vmul.f32 %v2689, %v3358
        %v3807 = vmul.f32 %v2867, %v3359
        %v3808 = vmul.f32 %v2691, %v3360
        %v3809 = vmul.f32 %v2869, %v3361
        %v3810 = vmul.f32 %v2694, %v3362
        %v3811 = vmul.f32 %v2872, %v3363
        %v3812 = vmul.f32 %v2696, %v3364
        %v3813 = vmul.f32 %v2874, %v3365
        %v3814 = vmul.f32 %v2699, %v3366
        %v3815 = vmul.f32 %v2877, %v3367
        %v3816 = vmul.f32 %v2701, %v3368
        %v3817 = vmul.f32 %v2879, %v3369
        %v3818 = vmul.f32 %v2704, %v3370
        %v3819 = vmul.f32 %v2882, %v3371
        %v3820 = vmul.f32 %v2706, %v3372
        %v3821 = vmul.f32 %v2884, %v3373
        %v3822 = vmul.f32 %v2709, %v3374
        %v3823 = vmul.f32 %v2887, %v3375
        %v3824 = vmul.f32 %v2711, %v3376
        %v3825 = vmul.f32 %v2889, %v3377
        %v3826 = vmul.f32 %v2714, %v3378
        %v3827 = vmul.f32 %v2892, %v3379
        %v3828 = vmul.f32 %v2716, %v3380
        %v3829 = vmul.f32 %v2894, %v3381
        %v3830 = vmul.f32 %v2719, %v3382
        %v3831 = vmul.f32 %v2897, %v3383
        %v3832 = vmul.f32 %v2721, %v3384
        %v3833 = vmul.f32 %v2899, %v3385
        %v3834 = vmul.f32 %v2724, %v3386
        %v3835 = vmul.f32 %v2902, %v3387
        %v3836 = vmul.f32 %v2726, %v3388
        %v3837 = vmul.f32 %v2904, %v3389
        %3838 = vrot.lane.b32.xlu0 %v2649, 64
        %v3839 = vpop.permute.xlu0 %3838
        %3840 = vrot.lane.b32.xlu0 %v2651, 64
        %v3841 = vpop.permute.xlu0 %3840
        %3842 = vrot.lane.b32.xlu0 %v2654, 64
        %v3843 = vpop.permute.xlu0 %3842
        %3844 = vrot.lane.b32.xlu0 %v2656, 64
        %v3845 = vpop.permute.xlu0 %3844
        %3846 = vrot.lane.b32.xlu0 %v2659, 64
        %v3847 = vpop.permute.xlu0 %3846
        %3848 = vrot.lane.b32.xlu0 %v2661, 64
        %v3849 = vpop.permute.xlu0 %3848
        %3850 = vrot.lane.b32.xlu0 %v2664, 64
        %v3851 = vpop.permute.xlu0 %3850
        %3852 = vrot.lane.b32.xlu0 %v2666, 64
        %v3853 = vpop.permute.xlu0 %3852
        %3854 = vrot.lane.b32.xlu0 %v2669, 64
        %v3855 = vpop.permute.xlu0 %3854
        %3856 = vrot.lane.b32.xlu0 %v2671, 64
        %v3857 = vpop.permute.xlu0 %3856
        %3858 = vrot.lane.b32.xlu0 %v2674, 64
        %v3859 = vpop.permute.xlu0 %3858
        %3860 = vrot.lane.b32.xlu0 %v2676, 64
        %v3861 = vpop.permute.xlu0 %3860
        %3862 = vrot.lane.b32.xlu0 %v2679, 64
        %v3863 = vpop.permute.xlu0 %3862
        %3864 = vrot.lane.b32.xlu0 %v2681, 64
        %v3865 = vpop.permute.xlu0 %3864
        %3866 = vrot.lane.b32.xlu0 %v2684, 64
        %v3867 = vpop.permute.xlu0 %3866
        %3868 = vrot.lane.b32.xlu0 %v2686, 64
        %v3869 = vpop.permute.xlu0 %3868
        %3870 = vrot.lane.b32.xlu0 %v2689, 64
        %v3871 = vpop.permute.xlu0 %3870
        %3872 = vrot.lane.b32.xlu0 %v2691, 64
        %v3873 = vpop.permute.xlu0 %3872
        %3874 = vrot.lane.b32.xlu0 %v2694, 64
        %v3875 = vpop.permute.xlu0 %3874
        %3876 = vrot.lane.b32.xlu0 %v2696, 64
        %v3877 = vpop.permute.xlu0 %3876
        %3878 = vrot.lane.b32.xlu0 %v2699, 64
        %v3879 = vpop.permute.xlu0 %3878
        %3880 = vrot.lane.b32.xlu0 %v2701, 64
        %v3881 = vpop.permute.xlu0 %3880
        %3882 = vrot.lane.b32.xlu0 %v2704, 64
        %v3883 = vpop.permute.xlu0 %3882
        %3884 = vrot.lane.b32.xlu0 %v2706, 64
        %v3885 = vpop.permute.xlu0 %3884
        %3886 = vrot.lane.b32.xlu0 %v2709, 64
        %v3887 = vpop.permute.xlu0 %3886
        %3888 = vrot.lane.b32.xlu0 %v2711, 64
        %v3889 = vpop.permute.xlu0 %3888
        %3890 = vrot.lane.b32.xlu0 %v2714, 64
        %v3891 = vpop.permute.xlu0 %3890
        %3892 = vrot.lane.b32.xlu0 %v2716, 64
        %v3893 = vpop.permute.xlu0 %3892
        %3894 = vrot.lane.b32.xlu0 %v2719, 64
        %v3895 = vpop.permute.xlu0 %3894
        %3896 = vrot.lane.b32.xlu0 %v2721, 64
        %v3897 = vpop.permute.xlu0 %3896
        %3898 = vrot.lane.b32.xlu0 %v2724, 64
        %v3899 = vpop.permute.xlu0 %3898
        %3900 = vrot.lane.b32.xlu0 %v2726, 64
        %v3901 = vpop.permute.xlu0 %3900
        %3902 = vrot.lane.b32.xlu0 %v2827, 64
        %v3903 = vpop.permute.xlu0 %3902
        %3904 = vrot.lane.b32.xlu0 %v2829, 64
        %v3905 = vpop.permute.xlu0 %3904
        %3906 = vrot.lane.b32.xlu0 %v2832, 64
        %v3907 = vpop.permute.xlu0 %3906
        %3908 = vrot.lane.b32.xlu0 %v2834, 64
        %v3909 = vpop.permute.xlu0 %3908
        %3910 = vrot.lane.b32.xlu0 %v2837, 64
        %v3911 = vpop.permute.xlu0 %3910
        %3912 = vrot.lane.b32.xlu0 %v2839, 64
        %v3913 = vpop.permute.xlu0 %3912
        %3914 = vrot.lane.b32.xlu0 %v2842, 64
        %v3915 = vpop.permute.xlu0 %3914
        %3916 = vrot.lane.b32.xlu0 %v2844, 64
        %v3917 = vpop.permute.xlu0 %3916
        %3918 = vrot.lane.b32.xlu0 %v2847, 64
        %v3919 = vpop.permute.xlu0 %3918
        %3920 = vrot.lane.b32.xlu0 %v2849, 64
        %v3921 = vpop.permute.xlu0 %3920
        %3922 = vrot.lane.b32.xlu0 %v2852, 64
        %v3923 = vpop.permute.xlu0 %3922
        %3924 = vrot.lane.b32.xlu0 %v2854, 64
        %v3925 = vpop.permute.xlu0 %3924
        %3926 = vrot.lane.b32.xlu0 %v2857, 64
        %v3927 = vpop.permute.xlu0 %3926
        %3928 = vrot.lane.b32.xlu0 %v2859, 64
        %v3929 = vpop.permute.xlu0 %3928
        %3930 = vrot.lane.b32.xlu0 %v2862, 64
        %v3931 = vpop.permute.xlu0 %3930
        %3932 = vrot.lane.b32.xlu0 %v2864, 64
        %v3933 = vpop.permute.xlu0 %3932
        %3934 = vrot.lane.b32.xlu0 %v2867, 64
        %v3935 = vpop.permute.xlu0 %3934
        %3936 = vrot.lane.b32.xlu0 %v2869, 64
        %v3937 = vpop.permute.xlu0 %3936
        %3938 = vrot.lane.b32.xlu0 %v2872, 64
        %v3939 = vpop.permute.xlu0 %3938
        %3940 = vrot.lane.b32.xlu0 %v2874, 64
        %v3941 = vpop.permute.xlu0 %3940
        %3942 = vrot.lane.b32.xlu0 %v2877, 64
        %v3943 = vpop.permute.xlu0 %3942
        %3944 = vrot.lane.b32.xlu0 %v2879, 64
        %v3945 = vpop.permute.xlu0 %3944
        %3946 = vrot.lane.b32.xlu0 %v2882, 64
        %v3947 = vpop.permute.xlu0 %3946
        %3948 = vrot.lane.b32.xlu0 %v2884, 64
        %v3949 = vpop.permute.xlu0 %3948
        %3950 = vrot.lane.b32.xlu0 %v2887, 64
        %v3951 = vpop.permute.xlu0 %3950
        %3952 = vrot.lane.b32.xlu0 %v2889, 64
        %v3953 = vpop.permute.xlu0 %3952
        %3954 = vrot.lane.b32.xlu0 %v2892, 64
        %v3955 = vpop.permute.xlu0 %3954
        %3956 = vrot.lane.b32.xlu0 %v2894, 64
        %v3957 = vpop.permute.xlu0 %3956
        %3958 = vrot.lane.b32.xlu0 %v2897, 64
        %v3959 = vpop.permute.xlu0 %3958
        %3960 = vrot.lane.b32.xlu0 %v2899, 64
        %v3961 = vpop.permute.xlu0 %3960
        %3962 = vrot.lane.b32.xlu0 %v2902, 64
        %v3963 = vpop.permute.xlu0 %3962
        %3964 = vrot.lane.b32.xlu0 %v2904, 64
        %v3965 = vpop.permute.xlu0 %3964
        %v3966 = vmul.f32 %v3839, %v3390
        %v3967 = vmul.f32 %v3903, %v3391
        %v3968 = vmul.f32 %v3841, %v3392
        %v3969 = vmul.f32 %v3905, %v3393
        %v3970 = vmul.f32 %v3843, %v3394
        %v3971 = vmul.f32 %v3907, %v3395
        %v3972 = vmul.f32 %v3845, %v3396
        %v3973 = vmul.f32 %v3909, %v3397
        %v3974 = vmul.f32 %v3847, %v3398
        %v3975 = vmul.f32 %v3911, %v3399
        %v3976 = vmul.f32 %v3849, %v3400
        %v3977 = vmul.f32 %v3913, %v3401
        %v3978 = vmul.f32 %v3851, %v3402
        %v3979 = vmul.f32 %v3915, %v3403
        %v3980 = vmul.f32 %v3853, %v3404
        %v3981 = vmul.f32 %v3917, %v3405
        %v3982 = vmul.f32 %v3855, %v3406
        %v3983 = vmul.f32 %v3919, %v3407
        %v3984 = vmul.f32 %v3857, %v3408
        %v3985 = vmul.f32 %v3921, %v3409
        %v3986 = vmul.f32 %v3859, %v3410
        %v3987 = vmul.f32 %v3923, %v3411
        %v3988 = vmul.f32 %v3861, %v3412
        %v3989 = vmul.f32 %v3925, %v3413
        %v3990 = vmul.f32 %v3863, %v3414
        %v3991 = vmul.f32 %v3927, %v3415
        %v3992 = vmul.f32 %v3865, %v3416
        %v3993 = vmul.f32 %v3929, %v3417
        %v3994 = vmul.f32 %v3867, %v3418
        %v3995 = vmul.f32 %v3931, %v3419
        %v3996 = vmul.f32 %v3869, %v3420
        %v3997 = vmul.f32 %v3933, %v3421
        %v3998 = vmul.f32 %v3871, %v3422
        %v3999 = vmul.f32 %v3935, %v3423
        %v4000 = vmul.f32 %v3873, %v3424
        %v4001 = vmul.f32 %v3937, %v3425
        %v4002 = vmul.f32 %v3875, %v3426
        %v4003 = vmul.f32 %v3939, %v3427
        %v4004 = vmul.f32 %v3877, %v3428
        %v4005 = vmul.f32 %v3941, %v3429
        %v4006 = vmul.f32 %v3879, %v3430
        %v4007 = vmul.f32 %v3943, %v3431
        %v4008 = vmul.f32 %v3881, %v3432
        %v4009 = vmul.f32 %v3945, %v3433
        %v4010 = vmul.f32 %v3883, %v3434
        %v4011 = vmul.f32 %v3947, %v3435
        %v4012 = vmul.f32 %v3885, %v3436
        %v4013 = vmul.f32 %v3949, %v3437
        %v4014 = vmul.f32 %v3887, %v3438
        %v4015 = vmul.f32 %v3951, %v3439
        %v4016 = vmul.f32 %v3889, %v3440
        %v4017 = vmul.f32 %v3953, %v3441
        %v4018 = vmul.f32 %v3891, %v3442
        %v4019 = vmul.f32 %v3955, %v3443
        %v4020 = vmul.f32 %v3893, %v3444
        %v4021 = vmul.f32 %v3957, %v3445
        %v4022 = vmul.f32 %v3895, %v3446
        %v4023 = vmul.f32 %v3959, %v3447
        %v4024 = vmul.f32 %v3897, %v3448
        %v4025 = vmul.f32 %v3961, %v3449
        %v4026 = vmul.f32 %v3899, %v3450
        %v4027 = vmul.f32 %v3963, %v3451
        %v4028 = vmul.f32 %v3901, %v3452
        %v4029 = vmul.f32 %v3965, %v3453
        %v4030 = vadd.f32 %v3774, %v3966
        %v4031 = vadd.f32 %v3775, %v3967
        %v4032 = vadd.f32 %v3776, %v3968
        %v4033 = vadd.f32 %v3777, %v3969
        %v4034 = vadd.f32 %v3778, %v3970
        %v4035 = vadd.f32 %v3779, %v3971
        %v4036 = vadd.f32 %v3780, %v3972
        %v4037 = vadd.f32 %v3781, %v3973
        %v4038 = vadd.f32 %v3782, %v3974
        %v4039 = vadd.f32 %v3783, %v3975
        %v4040 = vadd.f32 %v3784, %v3976
        %v4041 = vadd.f32 %v3785, %v3977
        %v4042 = vadd.f32 %v3786, %v3978
        %v4043 = vadd.f32 %v3787, %v3979
        %v4044 = vadd.f32 %v3788, %v3980
        %v4045 = vadd.f32 %v3789, %v3981
        %v4046 = vadd.f32 %v3790, %v3982
        %v4047 = vadd.f32 %v3791, %v3983
        %v4048 = vadd.f32 %v3792, %v3984
        %v4049 = vadd.f32 %v3793, %v3985
        %v4050 = vadd.f32 %v3794, %v3986
        %v4051 = vadd.f32 %v3795, %v3987
        %v4052 = vadd.f32 %v3796, %v3988
        %v4053 = vadd.f32 %v3797, %v3989
        %v4054 = vadd.f32 %v3798, %v3990
        %v4055 = vadd.f32 %v3799, %v3991
        %v4056 = vadd.f32 %v3800, %v3992
        %v4057 = vadd.f32 %v3801, %v3993
        %v4058 = vadd.f32 %v3802, %v3994
        %v4059 = vadd.f32 %v3803, %v3995
        %v4060 = vadd.f32 %v3804, %v3996
        %v4061 = vadd.f32 %v3805, %v3997
        %v4062 = vadd.f32 %v3806, %v3998
        %v4063 = vadd.f32 %v3807, %v3999
        %v4064 = vadd.f32 %v3808, %v4000
        %v4065 = vadd.f32 %v3809, %v4001
        %v4066 = vadd.f32 %v3810, %v4002
        %v4067 = vadd.f32 %v3811, %v4003
        %v4068 = vadd.f32 %v3812, %v4004
        %v4069 = vadd.f32 %v3813, %v4005
        %v4070 = vadd.f32 %v3814, %v4006
        %v4071 = vadd.f32 %v3815, %v4007
        %v4072 = vadd.f32 %v3816, %v4008
        %v4073 = vadd.f32 %v3817, %v4009
        %v4074 = vadd.f32 %v3818, %v4010
        %v4075 = vadd.f32 %v3819, %v4011
        %v4076 = vadd.f32 %v3820, %v4012
        %v4077 = vadd.f32 %v3821, %v4013
        %v4078 = vadd.f32 %v3822, %v4014
        %v4079 = vadd.f32 %v3823, %v4015
        %v4080 = vadd.f32 %v3824, %v4016
        %v4081 = vadd.f32 %v3825, %v4017
        %v4082 = vadd.f32 %v3826, %v4018
        %v4083 = vadd.f32 %v3827, %v4019
        %v4084 = vadd.f32 %v3828, %v4020
        %v4085 = vadd.f32 %v3829, %v4021
        %v4086 = vadd.f32 %v3830, %v4022
        %v4087 = vadd.f32 %v3831, %v4023
        %v4088 = vadd.f32 %v3832, %v4024
        %v4089 = vadd.f32 %v3833, %v4025
        %v4090 = vadd.f32 %v3834, %v4026
        %v4091 = vadd.f32 %v3835, %v4027
        %v4092 = vadd.f32 %v3836, %v4028
        %v4093 = vadd.f32 %v3837, %v4029
        %v4094 = vpack.c.bf16 %v3711, %v3710
        %v4095 = vpack.c.bf16 %v3713, %v3712
        %v4096 = vpack.c.bf16 %v3715, %v3714
        %v4097 = vpack.c.bf16 %v3717, %v3716
        %v4098 = vpack.c.bf16 %v3719, %v3718
        %v4099 = vpack.c.bf16 %v3721, %v3720
        %v4100 = vpack.c.bf16 %v3723, %v3722
        %v4101 = vpack.c.bf16 %v3725, %v3724
        %v4102 = vpack.c.bf16 %v3727, %v3726
        %v4103 = vpack.c.bf16 %v3729, %v3728
        %v4104 = vpack.c.bf16 %v3731, %v3730
        %v4105 = vpack.c.bf16 %v3733, %v3732
        %v4106 = vpack.c.bf16 %v3735, %v3734
        %v4107 = vpack.c.bf16 %v3737, %v3736
        %v4108 = vpack.c.bf16 %v3739, %v3738
        %v4109 = vpack.c.bf16 %v3741, %v3740
        %v4110 = vpack.c.bf16 %v3743, %v3742
        %v4111 = vpack.c.bf16 %v3745, %v3744
        %v4112 = vpack.c.bf16 %v3747, %v3746
        %v4113 = vpack.c.bf16 %v3749, %v3748
        %v4114 = vpack.c.bf16 %v3751, %v3750
        %v4115 = vpack.c.bf16 %v3753, %v3752
        %v4116 = vpack.c.bf16 %v3755, %v3754
        %v4117 = vpack.c.bf16 %v3757, %v3756
        %v4118 = vpack.c.bf16 %v3759, %v3758
        %v4119 = vpack.c.bf16 %v3761, %v3760
        %v4120 = vpack.c.bf16 %v3763, %v3762
        %v4121 = vpack.c.bf16 %v3765, %v3764
        %v4122 = vpack.c.bf16 %v3767, %v3766
        %v4123 = vpack.c.bf16 %v3769, %v3768
        %v4124 = vpack.c.bf16 %v3771, %v3770
        %v4125 = vpack.c.bf16 %v3773, %v3772
        %v4126 = vpack.c.bf16 %v4031, %v4030
        %v4127 = vpack.c.bf16 %v4033, %v4032
        %v4128 = vpack.c.bf16 %v4035, %v4034
        %v4129 = vpack.c.bf16 %v4037, %v4036
        %v4130 = vpack.c.bf16 %v4039, %v4038
        %v4131 = vpack.c.bf16 %v4041, %v4040
        %v4132 = vpack.c.bf16 %v4043, %v4042
        %v4133 = vpack.c.bf16 %v4045, %v4044
        %v4134 = vpack.c.bf16 %v4047, %v4046
        %v4135 = vpack.c.bf16 %v4049, %v4048
        %v4136 = vpack.c.bf16 %v4051, %v4050
        %v4137 = vpack.c.bf16 %v4053, %v4052
        %v4138 = vpack.c.bf16 %v4055, %v4054
        %v4139 = vpack.c.bf16 %v4057, %v4056
        %v4140 = vpack.c.bf16 %v4059, %v4058
        %v4141 = vpack.c.bf16 %v4061, %v4060
        %v4142 = vpack.c.bf16 %v4063, %v4062
        %v4143 = vpack.c.bf16 %v4065, %v4064
        %v4144 = vpack.c.bf16 %v4067, %v4066
        %v4145 = vpack.c.bf16 %v4069, %v4068
        %v4146 = vpack.c.bf16 %v4071, %v4070
        %v4147 = vpack.c.bf16 %v4073, %v4072
        %v4148 = vpack.c.bf16 %v4075, %v4074
        %v4149 = vpack.c.bf16 %v4077, %v4076
        %v4150 = vpack.c.bf16 %v4079, %v4078
        %v4151 = vpack.c.bf16 %v4081, %v4080
        %v4152 = vpack.c.bf16 %v4083, %v4082
        %v4153 = vpack.c.bf16 %v4085, %v4084
        %v4154 = vpack.c.bf16 %v4087, %v4086
        %v4155 = vpack.c.bf16 %v4089, %v4088
        %v4156 = vpack.c.bf16 %v4091, %v4090
        %v4157 = vpack.c.bf16 %v4093, %v4092
        %v4158 = vpack.c.bf16 %v3183, %v3005
        %v4159 = vpack.c.bf16 %v3185, %v3007
        %v4160 = vpack.c.bf16 %v3188, %v3010
        %v4161 = vpack.c.bf16 %v3190, %v3012
        %v4162 = vpack.c.bf16 %v3193, %v3015
        %v4163 = vpack.c.bf16 %v3195, %v3017
        %v4164 = vpack.c.bf16 %v3198, %v3020
        %v4165 = vpack.c.bf16 %v3200, %v3022
        %v4166 = vpack.c.bf16 %v3203, %v3025
        %v4167 = vpack.c.bf16 %v3205, %v3027
        %v4168 = vpack.c.bf16 %v3208, %v3030
        %v4169 = vpack.c.bf16 %v3210, %v3032
        %v4170 = vpack.c.bf16 %v3213, %v3035
        %v4171 = vpack.c.bf16 %v3215, %v3037
        %v4172 = vpack.c.bf16 %v3218, %v3040
        %v4173 = vpack.c.bf16 %v3220, %v3042
        %v4174 = vpack.c.bf16 %v3223, %v3045
        %v4175 = vpack.c.bf16 %v3225, %v3047
        %v4176 = vpack.c.bf16 %v3228, %v3050
        %v4177 = vpack.c.bf16 %v3230, %v3052
        %v4178 = vpack.c.bf16 %v3233, %v3055
        %v4179 = vpack.c.bf16 %v3235, %v3057
        %v4180 = vpack.c.bf16 %v3238, %v3060
        %v4181 = vpack.c.bf16 %v3240, %v3062
        %v4182 = vpack.c.bf16 %v3243, %v3065
        %v4183 = vpack.c.bf16 %v3245, %v3067
        %v4184 = vpack.c.bf16 %v3248, %v3070
        %v4185 = vpack.c.bf16 %v3250, %v3072
        %v4186 = vpack.c.bf16 %v3253, %v3075
        %v4187 = vpack.c.bf16 %v3255, %v3077
        %v4188 = vpack.c.bf16 %v3258, %v3080
        %v4189 = vpack.c.bf16 %v3260, %v3082
        %4190 = vst [vmem:[%s508] sm:$0xf] %v4094
        %4191 = vst [vmem:[%s508 + $0x4] sm:$0xf] %v4095
        %4192 = vst [vmem:[%s508 + $0x8] sm:$0xf] %v4096
        %4193 = vst [vmem:[%s508 + $0xc] sm:$0xf] %v4097
        %4194 = vst [vmem:[%s508 + $0x10] sm:$0xf] %v4098
        %4195 = vst [vmem:[%s508 + $0x14] sm:$0xf] %v4099
        %4196 = vst [vmem:[%s508 + $0x18] sm:$0xf] %v4100
        %4197 = vst [vmem:[%s508 + $0x1c] sm:$0xf] %v4101
        %4198 = vst [vmem:[%s508 + $0x20] sm:$0xf] %v4102
        %4199 = vst [vmem:[%s508 + $0x24] sm:$0xf] %v4103
        %4200 = vst [vmem:[%s508 + $0x28] sm:$0xf] %v4104
        %4201 = vst [vmem:[%s508 + $0x2c] sm:$0xf] %v4105
        %4202 = vst [vmem:[%s508 + $0x30] sm:$0xf] %v4106
        %4203 = vst [vmem:[%s508 + $0x34] sm:$0xf] %v4107
        %4204 = vst [vmem:[%s508 + $0x38] sm:$0xf] %v4108
        %4205 = vst [vmem:[%s508 + $0x3c] sm:$0xf] %v4109
        %4206 = vst [vmem:[%s508 + $0x40] sm:$0xf] %v4110
        %4207 = vst [vmem:[%s508 + $0x44] sm:$0xf] %v4111
        %4208 = vst [vmem:[%s508 + $0x48] sm:$0xf] %v4112
        %4209 = vst [vmem:[%s508 + $0x4c] sm:$0xf] %v4113
        %4210 = vst [vmem:[%s508 + $0x50] sm:$0xf] %v4114
        %4211 = vst [vmem:[%s508 + $0x54] sm:$0xf] %v4115
        %4212 = vst [vmem:[%s508 + $0x58] sm:$0xf] %v4116
        %4213 = vst [vmem:[%s508 + $0x5c] sm:$0xf] %v4117
        %4214 = vst [vmem:[%s508 + $0x60] sm:$0xf] %v4118
        %4215 = vst [vmem:[%s508 + $0x64] sm:$0xf] %v4119
        %4216 = vst [vmem:[%s508 + $0x68] sm:$0xf] %v4120
        %4217 = vst [vmem:[%s508 + $0x6c] sm:$0xf] %v4121
        %4218 = vst [vmem:[%s508 + $0x70] sm:$0xf] %v4122
        %4219 = vst [vmem:[%s508 + $0x74] sm:$0xf] %v4123
        %4220 = vst [vmem:[%s508 + $0x78] sm:$0xf] %v4124
        %4221 = vst [vmem:[%s508 + $0x7c] sm:$0xf] %v4125
        %4222 = vst [vmem:[%s515] sm:$0xf] %v4126
        %4223 = vst [vmem:[%s515 + $0x4] sm:$0xf] %v4127
        %4224 = vst [vmem:[%s515 + $0x8] sm:$0xf] %v4128
        %4225 = vst [vmem:[%s515 + $0xc] sm:$0xf] %v4129
        %4226 = vst [vmem:[%s515 + $0x10] sm:$0xf] %v4130
        %4227 = vst [vmem:[%s515 + $0x14] sm:$0xf] %v4131
        %4228 = vst [vmem:[%s515 + $0x18] sm:$0xf] %v4132
        %4229 = vst [vmem:[%s515 + $0x1c] sm:$0xf] %v4133
        %4230 = vst [vmem:[%s515 + $0x20] sm:$0xf] %v4134
        %4231 = vst [vmem:[%s515 + $0x24] sm:$0xf] %v4135
        %4232 = vst [vmem:[%s515 + $0x28] sm:$0xf] %v4136
        %4233 = vst [vmem:[%s515 + $0x2c] sm:$0xf] %v4137
        %4234 = vst [vmem:[%s515 + $0x30] sm:$0xf] %v4138
        %4235 = vst [vmem:[%s515 + $0x34] sm:$0xf] %v4139
        %4236 = vst [vmem:[%s515 + $0x38] sm:$0xf] %v4140
        %4237 = vst [vmem:[%s515 + $0x3c] sm:$0xf] %v4141
        %4238 = vst [vmem:[%s515 + $0x40] sm:$0xf] %v4142
        %4239 = vst [vmem:[%s515 + $0x44] sm:$0xf] %v4143
        %4240 = vst [vmem:[%s515 + $0x48] sm:$0xf] %v4144
        %4241 = vst [vmem:[%s515 + $0x4c] sm:$0xf] %v4145
        %4242 = vst [vmem:[%s515 + $0x50] sm:$0xf] %v4146
        %4243 = vst [vmem:[%s515 + $0x54] sm:$0xf] %v4147
        %4244 = vst [vmem:[%s515 + $0x58] sm:$0xf] %v4148
        %4245 = vst [vmem:[%s515 + $0x5c] sm:$0xf] %v4149
        %4246 = vst [vmem:[%s515 + $0x60] sm:$0xf] %v4150
        %4247 = vst [vmem:[%s515 + $0x64] sm:$0xf] %v4151
        %4248 = vst [vmem:[%s515 + $0x68] sm:$0xf] %v4152
        %4249 = vst [vmem:[%s515 + $0x6c] sm:$0xf] %v4153
        %4250 = vst [vmem:[%s515 + $0x70] sm:$0xf] %v4154
        %4251 = vst [vmem:[%s515 + $0x74] sm:$0xf] %v4155
        %4252 = vst [vmem:[%s515 + $0x78] sm:$0xf] %v4156
        %4253 = vst [vmem:[%s515 + $0x7c] sm:$0xf] %v4157
        %4254 = vst [vmem:[%s522] sm:$0xf] %v4158
        %4255 = vst [vmem:[%s522 + $0x4] sm:$0xf] %v4159
        %4256 = vst [vmem:[%s522 + $0x8] sm:$0xf] %v4160
        %4257 = vst [vmem:[%s522 + $0xc] sm:$0xf] %v4161
        %4258 = vst [vmem:[%s522 + $0x10] sm:$0xf] %v4162
        %4259 = vst [vmem:[%s522 + $0x14] sm:$0xf] %v4163
        %4260 = vst [vmem:[%s522 + $0x18] sm:$0xf] %v4164
        %4261 = vst [vmem:[%s522 + $0x1c] sm:$0xf] %v4165
        %4262 = vst [vmem:[%s522 + $0x20] sm:$0xf] %v4166
        %4263 = vst [vmem:[%s522 + $0x24] sm:$0xf] %v4167
        %4264 = vst [vmem:[%s522 + $0x28] sm:$0xf] %v4168
        %4265 = vst [vmem:[%s522 + $0x2c] sm:$0xf] %v4169
        %4266 = vst [vmem:[%s522 + $0x30] sm:$0xf] %v4170
        %4267 = vst [vmem:[%s522 + $0x34] sm:$0xf] %v4171
        %4268 = vst [vmem:[%s522 + $0x38] sm:$0xf] %v4172
        %4269 = vst [vmem:[%s522 + $0x3c] sm:$0xf] %v4173
        %4270 = vst [vmem:[%s522 + $0x40] sm:$0xf] %v4174
        %4271 = vst [vmem:[%s522 + $0x44] sm:$0xf] %v4175
        %4272 = vst [vmem:[%s522 + $0x48] sm:$0xf] %v4176
        %4273 = vst [vmem:[%s522 + $0x4c] sm:$0xf] %v4177
        %4274 = vst [vmem:[%s522 + $0x50] sm:$0xf] %v4178
        %4275 = vst [vmem:[%s522 + $0x54] sm:$0xf] %v4179
        %4276 = vst [vmem:[%s522 + $0x58] sm:$0xf] %v4180
        %4277 = vst [vmem:[%s522 + $0x5c] sm:$0xf] %v4181
        %4278 = vst [vmem:[%s522 + $0x60] sm:$0xf] %v4182
        %4279 = vst [vmem:[%s522 + $0x64] sm:$0xf] %v4183
        %4280 = vst [vmem:[%s522 + $0x68] sm:$0xf] %v4184
        %4281 = vst [vmem:[%s522 + $0x6c] sm:$0xf] %v4185
        %4282 = vst [vmem:[%s522 + $0x70] sm:$0xf] %v4186
        %4283 = vst [vmem:[%s522 + $0x74] sm:$0xf] %v4187
        %4284 = vst [vmem:[%s522 + $0x78] sm:$0xf] %v4188
        %4285 = vst [vmem:[%s522 + $0x7c] sm:$0xf] %v4189
        %v4318 = vrot.slane %v4094, 4
        %v4319 = vrot.slane %v4095, 4
        %v4320 = vrot.slane %v4096, 4
        %v4321 = vrot.slane %v4097, 4
        %v4322 = vrot.slane %v4098, 4
        %v4323 = vrot.slane %v4099, 4
        %v4324 = vrot.slane %v4100, 4
        %v4325 = vrot.slane %v4101, 4
        %v4326 = vrot.slane %v4102, 4
        %v4327 = vrot.slane %v4103, 4
        %v4328 = vrot.slane %v4104, 4
        %v4329 = vrot.slane %v4105, 4
        %v4330 = vrot.slane %v4106, 4
        %v4331 = vrot.slane %v4107, 4
        %v4332 = vrot.slane %v4108, 4
        %v4333 = vrot.slane %v4109, 4
        %v4334 = vrot.slane %v4110, 4
        %v4335 = vrot.slane %v4111, 4
        %v4336 = vrot.slane %v4112, 4
        %v4337 = vrot.slane %v4113, 4
        %v4338 = vrot.slane %v4114, 4
        %v4339 = vrot.slane %v4115, 4
        %v4340 = vrot.slane %v4116, 4
        %v4341 = vrot.slane %v4117, 4
        %v4342 = vrot.slane %v4118, 4
        %v4343 = vrot.slane %v4119, 4
        %v4344 = vrot.slane %v4120, 4
        %v4345 = vrot.slane %v4121, 4
        %v4346 = vrot.slane %v4122, 4
        %v4347 = vrot.slane %v4123, 4
        %v4348 = vrot.slane %v4124, 4
        %v4349 = vrot.slane %v4125, 4
        %s4382 = scalar_lea.vmem %s508, 128 [#allocation13]
        %4383 = vst [vmem:[%s4382] sm:$0xf] %v4318
        %4384 = vst [vmem:[%s4382 + $0x4] sm:$0xf] %v4319
        %4385 = vst [vmem:[%s4382 + $0x8] sm:$0xf] %v4320
        %4386 = vst [vmem:[%s4382 + $0xc] sm:$0xf] %v4321
        %4387 = vst [vmem:[%s4382 + $0x10] sm:$0xf] %v4322
        %4388 = vst [vmem:[%s4382 + $0x14] sm:$0xf] %v4323
        %4389 = vst [vmem:[%s4382 + $0x18] sm:$0xf] %v4324
        %4390 = vst [vmem:[%s4382 + $0x1c] sm:$0xf] %v4325
        %4391 = vst [vmem:[%s4382 + $0x20] sm:$0xf] %v4326
        %4392 = vst [vmem:[%s4382 + $0x24] sm:$0xf] %v4327
        %4393 = vst [vmem:[%s4382 + $0x28] sm:$0xf] %v4328
        %4394 = vst [vmem:[%s4382 + $0x2c] sm:$0xf] %v4329
        %4395 = vst [vmem:[%s4382 + $0x30] sm:$0xf] %v4330
        %4396 = vst [vmem:[%s4382 + $0x34] sm:$0xf] %v4331
        %4397 = vst [vmem:[%s4382 + $0x38] sm:$0xf] %v4332
        %4398 = vst [vmem:[%s4382 + $0x3c] sm:$0xf] %v4333
        %4399 = vst [vmem:[%s4382 + $0x40] sm:$0xf] %v4334
        %4400 = vst [vmem:[%s4382 + $0x44] sm:$0xf] %v4335
        %4401 = vst [vmem:[%s4382 + $0x48] sm:$0xf] %v4336
        %4402 = vst [vmem:[%s4382 + $0x4c] sm:$0xf] %v4337
        %4403 = vst [vmem:[%s4382 + $0x50] sm:$0xf] %v4338
        %4404 = vst [vmem:[%s4382 + $0x54] sm:$0xf] %v4339
        %4405 = vst [vmem:[%s4382 + $0x58] sm:$0xf] %v4340
        %4406 = vst [vmem:[%s4382 + $0x5c] sm:$0xf] %v4341
        %4407 = vst [vmem:[%s4382 + $0x60] sm:$0xf] %v4342
        %4408 = vst [vmem:[%s4382 + $0x64] sm:$0xf] %v4343
        %4409 = vst [vmem:[%s4382 + $0x68] sm:$0xf] %v4344
        %4410 = vst [vmem:[%s4382 + $0x6c] sm:$0xf] %v4345
        %4411 = vst [vmem:[%s4382 + $0x70] sm:$0xf] %v4346
        %4412 = vst [vmem:[%s4382 + $0x74] sm:$0xf] %v4347
        %4413 = vst [vmem:[%s4382 + $0x78] sm:$0xf] %v4348
        %4414 = vst [vmem:[%s4382 + $0x7c] sm:$0xf] %v4349
        %v4447 = vrot.slane %v4126, 4
        %v4448 = vrot.slane %v4127, 4
        %v4449 = vrot.slane %v4128, 4
        %v4450 = vrot.slane %v4129, 4
        %v4451 = vrot.slane %v4130, 4
        %v4452 = vrot.slane %v4131, 4
        %v4453 = vrot.slane %v4132, 4
        %v4454 = vrot.slane %v4133, 4
        %v4455 = vrot.slane %v4134, 4
        %v4456 = vrot.slane %v4135, 4
        %v4457 = vrot.slane %v4136, 4
        %v4458 = vrot.slane %v4137, 4
        %v4459 = vrot.slane %v4138, 4
        %v4460 = vrot.slane %v4139, 4
        %v4461 = vrot.slane %v4140, 4
        %v4462 = vrot.slane %v4141, 4
        %v4463 = vrot.slane %v4142, 4
        %v4464 = vrot.slane %v4143, 4
        %v4465 = vrot.slane %v4144, 4
        %v4466 = vrot.slane %v4145, 4
        %v4467 = vrot.slane %v4146, 4
        %v4468 = vrot.slane %v4147, 4
        %v4469 = vrot.slane %v4148, 4
        %v4470 = vrot.slane %v4149, 4
        %v4471 = vrot.slane %v4150, 4
        %v4472 = vrot.slane %v4151, 4
        %v4473 = vrot.slane %v4152, 4
        %v4474 = vrot.slane %v4153, 4
        %v4475 = vrot.slane %v4154, 4
        %v4476 = vrot.slane %v4155, 4
        %v4477 = vrot.slane %v4156, 4
        %v4478 = vrot.slane %v4157, 4
        %s4511 = scalar_lea.vmem %s515, 128 [#allocation14]
        %4512 = vst [vmem:[%s4511] sm:$0xf] %v4447
        %4513 = vst [vmem:[%s4511 + $0x4] sm:$0xf] %v4448
        %4514 = vst [vmem:[%s4511 + $0x8] sm:$0xf] %v4449
        %4515 = vst [vmem:[%s4511 + $0xc] sm:$0xf] %v4450
        %4516 = vst [vmem:[%s4511 + $0x10] sm:$0xf] %v4451
        %4517 = vst [vmem:[%s4511 + $0x14] sm:$0xf] %v4452
        %4518 = vst [vmem:[%s4511 + $0x18] sm:$0xf] %v4453
        %4519 = vst [vmem:[%s4511 + $0x1c] sm:$0xf] %v4454
        %4520 = vst [vmem:[%s4511 + $0x20] sm:$0xf] %v4455
        %4521 = vst [vmem:[%s4511 + $0x24] sm:$0xf] %v4456
        %4522 = vst [vmem:[%s4511 + $0x28] sm:$0xf] %v4457
        %4523 = vst [vmem:[%s4511 + $0x2c] sm:$0xf] %v4458
        %4524 = vst [vmem:[%s4511 + $0x30] sm:$0xf] %v4459
        %4525 = vst [vmem:[%s4511 + $0x34] sm:$0xf] %v4460
        %4526 = vst [vmem:[%s4511 + $0x38] sm:$0xf] %v4461
        %4527 = vst [vmem:[%s4511 + $0x3c] sm:$0xf] %v4462
        %4528 = vst [vmem:[%s4511 + $0x40] sm:$0xf] %v4463
        %4529 = vst [vmem:[%s4511 + $0x44] sm:$0xf] %v4464
        %4530 = vst [vmem:[%s4511 + $0x48] sm:$0xf] %v4465
        %4531 = vst [vmem:[%s4511 + $0x4c] sm:$0xf] %v4466
        %4532 = vst [vmem:[%s4511 + $0x50] sm:$0xf] %v4467
        %4533 = vst [vmem:[%s4511 + $0x54] sm:$0xf] %v4468
        %4534 = vst [vmem:[%s4511 + $0x58] sm:$0xf] %v4469
        %4535 = vst [vmem:[%s4511 + $0x5c] sm:$0xf] %v4470
        %4536 = vst [vmem:[%s4511 + $0x60] sm:$0xf] %v4471
        %4537 = vst [vmem:[%s4511 + $0x64] sm:$0xf] %v4472
        %4538 = vst [vmem:[%s4511 + $0x68] sm:$0xf] %v4473
        %4539 = vst [vmem:[%s4511 + $0x6c] sm:$0xf] %v4474
        %4540 = vst [vmem:[%s4511 + $0x70] sm:$0xf] %v4475
        %4541 = vst [vmem:[%s4511 + $0x74] sm:$0xf] %v4476
        %4542 = vst [vmem:[%s4511 + $0x78] sm:$0xf] %v4477
        %4543 = vst [vmem:[%s4511 + $0x7c] sm:$0xf] %v4478
        %v4576 = vrot.slane %v4158, 4
        %v4577 = vrot.slane %v4159, 4
        %v4578 = vrot.slane %v4160, 4
        %v4579 = vrot.slane %v4161, 4
        %v4580 = vrot.slane %v4162, 4
        %v4581 = vrot.slane %v4163, 4
        %v4582 = vrot.slane %v4164, 4
        %v4583 = vrot.slane %v4165, 4
        %v4584 = vrot.slane %v4166, 4
        %v4585 = vrot.slane %v4167, 4
        %v4586 = vrot.slane %v4168, 4
        %v4587 = vrot.slane %v4169, 4
        %v4588 = vrot.slane %v4170, 4
        %v4589 = vrot.slane %v4171, 4
        %v4590 = vrot.slane %v4172, 4
        %v4591 = vrot.slane %v4173, 4
        %v4592 = vrot.slane %v4174, 4
        %v4593 = vrot.slane %v4175, 4
        %v4594 = vrot.slane %v4176, 4
        %v4595 = vrot.slane %v4177, 4
        %v4596 = vrot.slane %v4178, 4
        %v4597 = vrot.slane %v4179, 4
        %v4598 = vrot.slane %v4180, 4
        %v4599 = vrot.slane %v4181, 4
        %v4600 = vrot.slane %v4182, 4
        %v4601 = vrot.slane %v4183, 4
        %v4602 = vrot.slane %v4184, 4
        %v4603 = vrot.slane %v4185, 4
        %v4604 = vrot.slane %v4186, 4
        %v4605 = vrot.slane %v4187, 4
        %v4606 = vrot.slane %v4188, 4
        %v4607 = vrot.slane %v4189, 4
        %s4640 = scalar_lea.vmem %s522, 128 [#allocation16]
        %4641 = vst [vmem:[%s4640] sm:$0xf] %v4576
        %4642 = vst [vmem:[%s4640 + $0x4] sm:$0xf] %v4577
        %4643 = vst [vmem:[%s4640 + $0x8] sm:$0xf] %v4578
        %4644 = vst [vmem:[%s4640 + $0xc] sm:$0xf] %v4579
        %4645 = vst [vmem:[%s4640 + $0x10] sm:$0xf] %v4580
        %4646 = vst [vmem:[%s4640 + $0x14] sm:$0xf] %v4581
        %4647 = vst [vmem:[%s4640 + $0x18] sm:$0xf] %v4582
        %4648 = vst [vmem:[%s4640 + $0x1c] sm:$0xf] %v4583
        %4649 = vst [vmem:[%s4640 + $0x20] sm:$0xf] %v4584
        %4650 = vst [vmem:[%s4640 + $0x24] sm:$0xf] %v4585
        %4651 = vst [vmem:[%s4640 + $0x28] sm:$0xf] %v4586
        %4652 = vst [vmem:[%s4640 + $0x2c] sm:$0xf] %v4587
        %4653 = vst [vmem:[%s4640 + $0x30] sm:$0xf] %v4588
        %4654 = vst [vmem:[%s4640 + $0x34] sm:$0xf] %v4589
        %4655 = vst [vmem:[%s4640 + $0x38] sm:$0xf] %v4590
        %4656 = vst [vmem:[%s4640 + $0x3c] sm:$0xf] %v4591
        %4657 = vst [vmem:[%s4640 + $0x40] sm:$0xf] %v4592
        %4658 = vst [vmem:[%s4640 + $0x44] sm:$0xf] %v4593
        %4659 = vst [vmem:[%s4640 + $0x48] sm:$0xf] %v4594
        %4660 = vst [vmem:[%s4640 + $0x4c] sm:$0xf] %v4595
        %4661 = vst [vmem:[%s4640 + $0x50] sm:$0xf] %v4596
        %4662 = vst [vmem:[%s4640 + $0x54] sm:$0xf] %v4597
        %4663 = vst [vmem:[%s4640 + $0x58] sm:$0xf] %v4598
        %4664 = vst [vmem:[%s4640 + $0x5c] sm:$0xf] %v4599
        %4665 = vst [vmem:[%s4640 + $0x60] sm:$0xf] %v4600
        %4666 = vst [vmem:[%s4640 + $0x64] sm:$0xf] %v4601
        %4667 = vst [vmem:[%s4640 + $0x68] sm:$0xf] %v4602
        %4668 = vst [vmem:[%s4640 + $0x6c] sm:$0xf] %v4603
        %4669 = vst [vmem:[%s4640 + $0x70] sm:$0xf] %v4604
        %4670 = vst [vmem:[%s4640 + $0x74] sm:$0xf] %v4605
        %4671 = vst [vmem:[%s4640 + $0x78] sm:$0xf] %v4606
        %4672 = vst [vmem:[%s4640 + $0x7c] sm:$0xf] %v4607
        %s4673 = sand.u32 %s221, 1
        %s4674 = scalar_lea.sflag [#allocation4], %s4673
        %s4675 = sand.u32 %s221, 1
        %s4676 = smul.addr %s4675, 256
        %s4677 = scalar_lea.vmem [#allocation13], %s4676
        %s4678 = sand.u32 %s35, 1
        %s4679 = scalar_lea.sflag [#allocation15], %s4678
        %s4680 = sand.u32 %s249, 1
        %s4681 = smul.addr %s4680, 256
        %s4682 = scalar_lea.vmem [#allocation14], %s4681
        %s4683 = sand.u32 %s35, 1
        %s4684 = scalar_lea.sflag [#allocation15], %s4683
        %s4685 = sand.u32 %s277, 1
        %s4686 = smul.addr %s4685, 256
        %s4687 = scalar_lea.vmem [#allocation16], %s4686
        // Predicated region
        $region73: #{tpu_custom_call.1} parent=47 // pred_check
          %p4688 = pneg %p231
        $region74: #{tpu_custom_call.1} parent=47 // pred_check_branch
          %4690 = sbr.rel (%p4688) target = $region76
        $region75: #{tpu_custom_call.1} parent=47 // pred_region
          #allocation18 [shape = 'u32[6]{0}', space=smem, size = 0x18, scoped, tag = 'DMA stride descriptor']
          %s4691 = smul.u32 32, %s40
          %4693 = vsyncadd %s4674, 0
          %s4694 = smul.addr %s39, 128
          %s4695 = sadd.s32 %s4691, %s4694
          %s4696 = smul.addr %s4695, 4
          %s4697 = scalar_lea.hbm %s7, %s4696
          %s4699 = sshll.u32 1, 14
          %s4700 = sxor.u32 4294967295, %s4699
          %s4703 = sshll.u32 7, 18
          %s4704 = sxor.u32 4294967295, %s4703
          %s4705 = sand.u32 0, %s4704
          %s4707 = sor.u32 %s4705, 0
          %s4708 = sshll.u32 %s4677, 4
          %s4709 = int_to_ptr.vmem [resolvable:$true] %s4708
          %s4710 = sshll.u32 %s4697, 4
          %s4711 = int_to_ptr.hbm [resolvable:$true] %s4710
          %4717 = sst [smem:[#allocation18]] 2048
          %s4718 = scalar_lea.smem [#allocation18], 1
          %4719 = sst [smem:[%s4718]] 4096
          %s4720 = scalar_lea.smem [#allocation18], 2
          %4721 = sst [smem:[%s4720]] 32
          %s4722 = scalar_lea.smem [#allocation18], 3
          %4723 = sst [smem:[%s4722]] 64
          %s4724 = scalar_lea.smem [#allocation18], 4
          %4725 = sst [smem:[%s4724]] 64
          %s4726 = scalar_lea.smem [#allocation18], 5
          %4727 = sst [smem:[%s4726]] 4
          %4729 = dma.general %s4709, 4096, %s4711, %s4674, [#allocation17], [#allocation18], %s4707, 0
        $region76: #{tpu_custom_call.1} parent=47 // pred_fallthru
          _
        // Predicated region
        $region77: #{tpu_custom_call.1} parent=47 // pred_check
          %p4730 = pneg %p259
        $region78: #{tpu_custom_call.1} parent=47 // pred_check_branch
          %4732 = sbr.rel (%p4730) target = $region80
        $region79: #{tpu_custom_call.1} parent=47 // pred_region
          #allocation20 [shape = 'u32[6]{0}', space=smem, size = 0x18, scoped, tag = 'DMA stride descriptor']
          %s4733 = smul.u32 32, %s40
          %4735 = vsyncadd %s4679, 0
          %s4736 = smul.addr %s39, 128
          %s4737 = sadd.s32 %s4733, %s4736
          %s4738 = smul.addr %s4737, 4
          %s4739 = scalar_lea.hbm %s8, %s4738
          %s4741 = sshll.u32 1, 14
          %s4742 = sxor.u32 4294967295, %s4741
          %s4745 = sshll.u32 7, 18
          %s4746 = sxor.u32 4294967295, %s4745
          %s4747 = sand.u32 0, %s4746
          %s4749 = sor.u32 %s4747, 0
          %s4750 = sshll.u32 %s4682, 4
          %s4751 = int_to_ptr.vmem [resolvable:$true] %s4750
          %s4752 = sshll.u32 %s4739, 4
          %s4753 = int_to_ptr.hbm [resolvable:$true] %s4752
          %4759 = sst [smem:[#allocation20]] 2048
          %s4760 = scalar_lea.smem [#allocation20], 1
          %4761 = sst [smem:[%s4760]] 4096
          %s4762 = scalar_lea.smem [#allocation20], 2
          %4763 = sst [smem:[%s4762]] 32
          %s4764 = scalar_lea.smem [#allocation20], 3
          %4765 = sst [smem:[%s4764]] 64
          %s4766 = scalar_lea.smem [#allocation20], 4
          %4767 = sst [smem:[%s4766]] 64
          %s4768 = scalar_lea.smem [#allocation20], 5
          %4769 = sst [smem:[%s4768]] 4
          %4771 = dma.general %s4751, 4096, %s4753, %s4679, [#allocation19], [#allocation20], %s4749, 0
        $region80: #{tpu_custom_call.1} parent=47 // pred_fallthru
          _
        // Predicated region
        $region81: #{tpu_custom_call.1} parent=47 // pred_check
          %p4772 = pneg %p287
        $region82: #{tpu_custom_call.1} parent=47 // pred_check_branch
          %4774 = sbr.rel (%p4772) target = $region84
        $region83: #{tpu_custom_call.1} parent=47 // pred_region
          #allocation22 [shape = 'u32[6]{0}', space=smem, size = 0x18, scoped, tag = 'DMA stride descriptor']
          %s4775 = smul.u32 32, %s40
          %4777 = vsyncadd %s4684, 0
          %s4778 = smul.addr %s39, 128
          %s4779 = sadd.s32 %s4775, %s4778
          %s4780 = smul.addr %s4779, 4
          %s4781 = scalar_lea.hbm %s9, %s4780
          %s4783 = sshll.u32 1, 14
          %s4784 = sxor.u32 4294967295, %s4783
          %s4787 = sshll.u32 7, 18
          %s4788 = sxor.u32 4294967295, %s4787
          %s4789 = sand.u32 0, %s4788
          %s4791 = sor.u32 %s4789, 0
          %s4792 = sshll.u32 %s4687, 4
          %s4793 = int_to_ptr.vmem [resolvable:$true] %s4792
          %s4794 = sshll.u32 %s4781, 4
          %s4795 = int_to_ptr.hbm [resolvable:$true] %s4794
          %4801 = sst [smem:[#allocation22]] 2048
          %s4802 = scalar_lea.smem [#allocation22], 1
          %4803 = sst [smem:[%s4802]] 4096
          %s4804 = scalar_lea.smem [#allocation22], 2
          %4805 = sst [smem:[%s4804]] 32
          %s4806 = scalar_lea.smem [#allocation22], 3
          %4807 = sst [smem:[%s4806]] 64
          %s4808 = scalar_lea.smem [#allocation22], 4
          %4809 = sst [smem:[%s4808]] 64
          %s4810 = scalar_lea.smem [#allocation22], 5
          %4811 = sst [smem:[%s4810]] 4
          %4813 = dma.general %s4793, 4096, %s4795, %s4684, [#allocation21], [#allocation22], %s4791, 0
        $region84: #{tpu_custom_call.1} parent=47 // pred_fallthru
          _
      $region48: #{tpu_custom_call.1} parent=5 // pred_fallthru
        _
      %p4814 = scmp.le.s32.totalorder 2, %s30
      // Predicated region
      $region85: #{tpu_custom_call.1} parent=5 // pred_check
        %p4815 = pneg %p4814
      $region86: #{tpu_custom_call.1} parent=5 // pred_check_branch
        %4817 = sbr.rel (%p4815) target = $region88
      $region87: #{tpu_custom_call.1} parent=5 // pred_region
        %s4818 = ssub.s32 %s30, 2
        // Predicated region
        $region89: #{tpu_custom_call.1} parent=87 // pred_check
          %p4819 = pneg %p237
        $region90: #{tpu_custom_call.1} parent=87 // pred_check_branch
          %4821 = sbr.rel (%p4819) target = $region92
        $region91: #{tpu_custom_call.1} parent=87 // pred_region
          %s4822 = sand.u32 %s222, 1
          %s4823 = scalar_lea.sflag [#allocation4], %s4822
          %s4824 = sand.u32 %s222, 1
          %s4825 = smul.addr %s4824, 256
          %s4826 = scalar_lea.vmem [#allocation13], %s4825
          %4828 = dma.done %s4823, 4096
        $region92: #{tpu_custom_call.1} parent=87 // pred_fallthru
          _
        // Predicated region
        $region93: #{tpu_custom_call.1} parent=87 // pred_check
          %p4829 = pneg %p265
        $region94: #{tpu_custom_call.1} parent=87 // pred_check_branch
          %4831 = sbr.rel (%p4829) target = $region96
        $region95: #{tpu_custom_call.1} parent=87 // pred_region
          %s4832 = sand.u32 %s36, 1
          %s4833 = scalar_lea.sflag [#allocation15], %s4832
          %s4834 = sand.u32 %s250, 1
          %s4835 = smul.addr %s4834, 256
          %s4836 = scalar_lea.vmem [#allocation14], %s4835
          %4838 = dma.done %s4833, 4096
        $region96: #{tpu_custom_call.1} parent=87 // pred_fallthru
          _
        // Predicated region
        $region97: #{tpu_custom_call.1} parent=87 // pred_check
          %p4839 = pneg %p293
        $region98: #{tpu_custom_call.1} parent=87 // pred_check_branch
          %4841 = sbr.rel (%p4839) target = $region100
        $region99: #{tpu_custom_call.1} parent=87 // pred_region
          %s4842 = sand.u32 %s36, 1
          %s4843 = scalar_lea.sflag [#allocation15], %s4842
          %s4844 = sand.u32 %s278, 1
          %s4845 = smul.addr %s4844, 256
          %s4846 = scalar_lea.vmem [#allocation16], %s4845
          %4848 = dma.done %s4843, 4096
        $region100: #{tpu_custom_call.1} parent=87 // pred_fallthru
          _
      $region88: #{tpu_custom_call.1} parent=5 // pred_fallthru
        _
    $region6: #{tpu_custom_call.1} parent=1 // loop_footer
      %s34 = sadd.s32 1, %s30
    $region7: #{tpu_custom_call.1} parent=1 // loop_footer_branch
      %29 = sbr.rel target = $region3
    $region8: #{tpu_custom_call.1} parent=1 // loop_exit
      _
    %4849 = vsyncpa [#allocation3], 1
    %s4850 = scalar_lea.sflag [#allocation3], 1
    %4851 = vsyncpa %s4850, 1
    %4852 = vsyncpa [#allocation6], 1
    %s4853 = scalar_lea.sflag [#allocation6], 1
    %4854 = vsyncpa %s4853, 1
    %4855 = vsyncpa [#allocation9], 1
    %4856 = vsyncpa [#allocation12], 1
    %4857 = vsyncpa [#allocation4], 1
    %s4858 = scalar_lea.sflag [#allocation4], 1
    %4859 = vsyncpa %s4858, 1
    %4860 = vsyncpa [#allocation15], 1
    %s4861 = scalar_lea.sflag [#allocation15], 1
    %4862 = vsyncpa %s4861, 1

</llo_original>
